<compile_context>
chip_gen: v7x
topology: tpu7x:2x2x1
jax: 0.10.0
libtpu: 0.0.40
codegen_flags: <defaults>
</compile_context>

<pallas_src>
import functools

import jax
import jax.numpy as jnp
from jax import lax
from jax.experimental import pallas as pl
from jax.experimental.pallas import tpu as pltpu

EMBED = 16          # embedding_size
GAT_HEADS = 4       # num_heads for GAT layers
NUM_LAYERS = 3      # min(3, max(1, int(log2(16)))) == 3
NEG_INF = -1e30


def _elu(x):
    return jnp.where(x > 0, x, jnp.exp(x) - 1.0)


# ---------------------------------------------------------------------------
# Block-structured attention-score matrices (built once at init, trace-time).
#   a_dst  = xw @ dmat            -> [N, H]   (column h = <xw_h, att_dst[h]>)
#   a_srcT = smatT (contract) xw  -> [H, N]   (row h    = <xw_h, att_src[h]>)
# ---------------------------------------------------------------------------
def _block_dst_mat(att):
    # [H, F] -> [H*F, H] with M[h*F + f, h] = att[h, f]
    h, f = att.shape
    eye = jnp.eye(h, dtype=att.dtype)
    return (att[:, :, None] * eye[:, None, :]).reshape(h * f, h)


def _block_src_matT(att):
    # [H, F] -> [H, H*F] with M[h, h*F + f] = att[h, f]
    h, f = att.shape
    eye = jnp.eye(h, dtype=att.dtype)
    return (eye[:, :, None] * att[:, None, :]).reshape(h, h * f)


# ---------------------------------------------------------------------------
# The single fused kernel.
# ---------------------------------------------------------------------------
def _fused_kernel(*refs, layer_cfgs, apply_mha, n, e_cnt):
    if apply_mha:
        (src_ref, dst_ref, x_ref, inw_ref, inb_ref,
         w0_ref, d0_ref, s0_ref, b0_ref,
         w1_ref, d1_ref, s1_ref, b1_ref,
         w2_ref, d2_ref, s2_ref, b2_ref,
         mask_ref, wvo_ref, bvo_ref, o_ref) = refs
    else:
        (src_ref, dst_ref, x_ref, inw_ref, inb_ref,
         w0_ref, d0_ref, s0_ref, b0_ref,
         w1_ref, d1_ref, s1_ref, b1_ref,
         w2_ref, d2_ref, s2_ref, b2_ref, o_ref) = refs
        mask_ref = wvo_ref = bvo_ref = None

    # --- adjacency built in-kernel (replaces host scatter + [N,N] DMA).
    # src ids come in as [E,1], dst ids as [1,E]; one-hots via iota compares, then one
    # MXU dot gives per-(dst,src) edge multiplicity.
    col_n = lax.broadcasted_iota(jnp.int32, (e_cnt, n), 1)            # [E, N]
    src_onehot = (src_ref[...] == col_n).astype(jnp.float32)          # [E, N]
    row_n = lax.broadcasted_iota(jnp.int32, (n, e_cnt), 0)            # [N, E]
    dst_onehotT = (dst_ref[...] == row_n).astype(jnp.float32)         # [N, E]
    counts = jnp.dot(dst_onehotT, src_onehot,
                     preferred_element_type=jnp.float32)              # [N, N]
    rr = lax.broadcasted_iota(jnp.int32, (n, n), 0)
    cc = lax.broadcasted_iota(jnp.int32, (n, n), 1)
    # GATConv does remove_self_loops + add_self_loops -> diagonal multiplicity is 1.
    mult = jnp.where(rr == cc, 1.0, counts)                           # [N, N]
    adj_bias = jnp.where(mult > 0.0, 0.0, NEG_INF)                    # [N, N]

    # --- input_proj: nn.Linear(1, E); contraction dim is 1 -> broadcast multiply (VPU).
    h = _elu(x_ref[...] * inw_ref[...] + inb_ref[...])                # [N, E]

    layer_refs = ((w0_ref, d0_ref, s0_ref, b0_ref),
                  (w1_ref, d1_ref, s1_ref, b1_ref),
                  (w2_ref, d2_ref, s2_ref, b2_ref))

    for (w_ref, d_ref, s_ref, b_ref), (heads, fdim, concat, apply_elu) in zip(
            layer_refs, layer_cfgs):
        xw = jnp.dot(h, w_ref[...], preferred_element_type=jnp.float32)      # [N, H*F]
        # Per-head src/dst scores via two small MXU dots (no XLU reductions/transposes).
        a_dst = jnp.dot(xw, d_ref[...], preferred_element_type=jnp.float32)  # [N, H]
        a_srcT = lax.dot_general(s_ref[...], xw,
                                 dimension_numbers=(((1,), (1,)), ((), ())),
                                 preferred_element_type=jnp.float32)         # [H, N]

        head_outs = []
        for hh in range(heads):                            # static, tiny head count
            # e[i, j] = leaky_relu(a_dst[i] + a_src[j], 0.2), -1e30 off-edges.
            e = a_dst[:, hh:hh + 1] + a_srcT[hh:hh + 1, :]             # [N, N]
            e = jnp.where(e > 0, e, 0.2 * e) + adj_bias
            e = e - jnp.max(e, axis=-1, keepdims=True)
            # Parallel edges share the same logit; weight exp(e) by edge multiplicity
            # to match PyG's per-edge softmax on multigraphs.
            p = jnp.exp(e) * mult
            ssum = jnp.sum(p, axis=-1, keepdims=True)                  # [N, 1]
            alpha = p * pl.reciprocal(ssum)            # exact recip on [N,1] + broadcast mul
            # Aggregate this head immediately; alpha's live range ends here.
            head_outs.append(
                jnp.dot(alpha, xw[:, hh * fdim:(hh + 1) * fdim],
                        preferred_element_type=jnp.float32))           # [N, F]

        if heads > 1:
            if concat:
                out = jnp.concatenate(head_outs, axis=-1)              # [N, H*F]
            else:                                          # not hit in this config
                acc = head_outs[0]
                for t in head_outs[1:]:
                    acc = acc + t
                out = acc * (1.0 / heads)
        else:
            out = head_outs[0]

        out = out + b_ref[...]                             # GATConv bias
        if apply_elu:
            out = _elu(out)                                # F.elu (dropout: eval no-op)
        h = out

    if apply_mha:
        # MultiheadAttention(E, 2) with key length 1: attn weight == 1 for valid keys,
        # NaN rows for fully-masked keys; value+out projections pre-folded into wvo/bvo.
        y = jnp.dot(h, wvo_ref[...], preferred_element_type=jnp.float32) + bvo_ref[...]
        h = jnp.where(mask_ref[...] > 0, y, jnp.full_like(y, jnp.nan))

    o_ref[...] = h


# ---------------------------------------------------------------------------
# Parameters (deterministic synthetic init; shapes follow the module's __init__)
# ---------------------------------------------------------------------------
def init_params(key):
    ks = jax.random.split(key, 24)

    def nrm(k, shape):
        return 0.1 * jax.random.normal(k, shape, jnp.float32)

    params = {
        "in_w": nrm(ks[0], (1, EMBED)),                    # Linear(1, 16) weight^T
        "in_b": nrm(ks[1], (1, EMBED)),
    }

    layers = []
    in_dim = EMBED
    idx = 2
    for i in range(NUM_LAYERS):
        out_dim = EMBED if i == NUM_LAYERS - 1 else EMBED // 2
        heads = GAT_HEADS if i < NUM_LAYERS - 1 else 1
        concat = i < NUM_LAYERS - 1
        bias_dim = heads * out_dim if concat else out_dim
        att_src = nrm(ks[idx + 1], (heads, out_dim))
        att_dst = nrm(ks[idx + 2], (heads, out_dim))
        layers.append(dict(
            w=nrm(ks[idx + 0], (in_dim, heads * out_dim)),
            dmat=_block_dst_mat(att_dst),                  # [H*F, H]
            smatT=_block_src_matT(att_src),                # [H, H*F]
            b=nrm(ks[idx + 3], (1, bias_dim)),
            heads=heads, fdim=out_dim, concat=concat,
        ))
        idx += 4
        in_dim = heads * out_dim if concat else out_dim
    params["gat"] = layers

    # MultiheadAttention(16, 2): with a length-1 key sequence the q/k projections are
    # mathematically dead (softmax over one key == 1), so only v/out_proj are kept.
    params["wv"] = nrm(ks[idx + 0], (EMBED, EMBED))
    params["bv"] = nrm(ks[idx + 1], (1, EMBED))
    params["wo"] = nrm(ks[idx + 2], (EMBED, EMBED))
    params["bo"] = nrm(ks[idx + 3], (1, EMBED))
    return params


# ---------------------------------------------------------------------------
# Forward: tiny trace-level glue + one fused pallas_call (no grid).
# ---------------------------------------------------------------------------
def gat_missing_embedder_forward(params, x, edge_index, context_mask=None):
    n = x.shape[0]
    e_cnt = edge_index.shape[1]
    src_col = edge_index[0].astype(jnp.int32).reshape(e_cnt, 1)      # [E, 1]
    dst_row = edge_index[1].astype(jnp.int32).reshape(1, e_cnt)      # [1, E]

    apply_mha = context_mask is not None

    layer_cfgs = tuple((l["heads"], l["fdim"], l["concat"], i < NUM_LAYERS - 1)
                       for i, l in enumerate(params["gat"]))

    args = [src_col, dst_row, x, params["in_w"], params["in_b"]]
    for l in params["gat"]:
        args += [l["w"], l["dmat"], l["smatT"], l["b"]]
    if apply_mha:
        # Fold the MHA value + output projections (one-time, trace-level preprocessing).
        w_vo = jnp.dot(params["wv"], params["wo"])                   # [E, E]
        b_vo = jnp.dot(params["bv"], params["wo"]) + params["bo"]    # [1, E]
        mask = context_mask.astype(jnp.float32).reshape(n, 1)
        args += [mask, w_vo, b_vo]

    kern = functools.partial(_fused_kernel, layer_cfgs=layer_cfgs,
                             apply_mha=apply_mha, n=n, e_cnt=e_cnt)

    vmem = pl.BlockSpec(memory_space=pltpu.MemorySpace.VMEM)
    return pl.pallas_call(
        kern,
        out_shape=jax.ShapeDtypeStruct((n, EMBED), jnp.float32),
        in_specs=[vmem] * len(args),
        out_specs=vmem,
    )(*args)


if __name__ == "__main__":
    key = jax.random.PRNGKey(0)
    kp, kx, ke = jax.random.split(key, 3)

    params = init_params(kp)

    N = 64                                             # nodes
    E = 128                                            # directed edges
    x = jax.random.normal(kx, (N, 1), jnp.float32)     # node features, in_dim = 1
    edge_index = jax.random.randint(ke, (2, E), 0, N, dtype=jnp.int32)
    context_mask = jnp.ones((N, 1), dtype=bool)        # (batch=N, key_seq=1), all valid

    out = gat_missing_embedder_forward(params, x, edge_index, context_mask)
    out = jax.block_until_ready(out)

    assert out.shape == (N, EMBED), out.shape
    assert bool(jnp.all(jnp.isfinite(out)))
    print("KERNEL_OK")
</pallas_src>

<mosaic_0001>
module attributes {stable_mosaic.version = 11 : i64} {
  func.func @_fused_kernel(%arg0: memref<128x1xi32, #tpu.memory_space<vmem>>, %arg1: memref<1x128xi32, #tpu.memory_space<vmem>>, %arg2: memref<64x1xf32, #tpu.memory_space<vmem>>, %arg3: memref<1x16xf32, #tpu.memory_space<vmem>>, %arg4: memref<1x16xf32, #tpu.memory_space<vmem>>, %arg5: memref<16x32xf32, #tpu.memory_space<vmem>>, %arg6: memref<32x4xf32, #tpu.memory_space<vmem>>, %arg7: memref<4x32xf32, #tpu.memory_space<vmem>>, %arg8: memref<1x32xf32, #tpu.memory_space<vmem>>, %arg9: memref<32x32xf32, #tpu.memory_space<vmem>>, %arg10: memref<32x4xf32, #tpu.memory_space<vmem>>, %arg11: memref<4x32xf32, #tpu.memory_space<vmem>>, %arg12: memref<1x32xf32, #tpu.memory_space<vmem>>, %arg13: memref<32x16xf32, #tpu.memory_space<vmem>>, %arg14: memref<16x1xf32, #tpu.memory_space<vmem>>, %arg15: memref<1x16xf32, #tpu.memory_space<vmem>>, %arg16: memref<1x16xf32, #tpu.memory_space<vmem>>, %arg17: memref<64x1xf32, #tpu.memory_space<vmem>>, %arg18: memref<16x16xf32, #tpu.memory_space<vmem>>, %arg19: memref<1x16xf32, #tpu.memory_space<vmem>>, %arg20: memref<64x16xf32, #tpu.memory_space<vmem>>) attributes {dimension_semantics = [], scalar_prefetch = 0 : i64, scratch_operands = 0 : i64, tpu.core_type = #tpu.core_type<tc>} {
    %0 = tpu.iota {dimensions = array<i32: 1>} : vector<128x64xi32>
    %c0 = arith.constant 0 : index
    %c0_0 = arith.constant 0 : index
    %1 = vector.load %arg0[%c0, %c0_0] : memref<128x1xi32, #tpu.memory_space<vmem>>, vector<128x1xi32>
    %2 = vector.broadcast %1 : vector<128x1xi32> to vector<128x64xi32>
    %3 = arith.cmpi eq, %2, %0 : vector<128x64xi32>
    %4 = arith.extui %3 : vector<128x64xi1> to vector<128x64xi32>
    %5 = arith.sitofp %4 : vector<128x64xi32> to vector<128x64xf32>
    %6 = tpu.iota {dimensions = array<i32: 0>} : vector<64x128xi32>
    %c0_1 = arith.constant 0 : index
    %c0_2 = arith.constant 0 : index
    %7 = vector.load %arg1[%c0_1, %c0_2] : memref<1x128xi32, #tpu.memory_space<vmem>>, vector<1x128xi32>
    %8 = vector.broadcast %7 : vector<1x128xi32> to vector<64x128xi32>
    %9 = arith.cmpi eq, %8, %6 : vector<64x128xi32>
    %10 = arith.extui %9 : vector<64x128xi1> to vector<64x128xi32>
    %11 = arith.sitofp %10 : vector<64x128xi32> to vector<64x128xf32>
    %cst = arith.constant dense<0.000000e+00> : vector<64x64xf32>
    %12 = tpu.matmul %11, %5, %cst {dimension_numbers = #tpu.dot_dimension_numbers<[1], [0], [0], [1], [0, 0, 1, 1], [], []>} : vector<64x128xf32>, vector<128x64xf32>, vector<64x64xf32> -> vector<64x64xf32>
    %13 = tpu.iota {dimensions = array<i32: 0>} : vector<64x64xi32>
    %14 = tpu.iota {dimensions = array<i32: 1>} : vector<64x64xi32>
    %15 = arith.cmpi eq, %13, %14 : vector<64x64xi32>
    %cst_3 = arith.constant 1.000000e+00 : f32
    %16 = vector.broadcast %cst_3 : f32 to vector<64x64xf32>
    %17 = arith.select %15, %16, %12 : vector<64x64xi1>, vector<64x64xf32>
    %cst_4 = arith.constant 0.000000e+00 : f32
    %18 = vector.broadcast %cst_4 : f32 to vector<64x64xf32>
    %19 = arith.cmpf ogt, %17, %18 : vector<64x64xf32>
    %cst_5 = arith.constant 0.000000e+00 : f32
    %cst_6 = arith.constant -1.000000e+30 : f32
    %20 = vector.broadcast %cst_5 : f32 to vector<64x64xf32>
    %21 = vector.broadcast %cst_6 : f32 to vector<64x64xf32>
    %22 = arith.select %19, %20, %21 : vector<64x64xi1>, vector<64x64xf32>
    %c0_7 = arith.constant 0 : index
    %c0_8 = arith.constant 0 : index
    %23 = vector.load %arg2[%c0_7, %c0_8] : memref<64x1xf32, #tpu.memory_space<vmem>>, vector<64x1xf32>
    %c0_9 = arith.constant 0 : index
    %c0_10 = arith.constant 0 : index
    %24 = vector.load %arg3[%c0_9, %c0_10] : memref<1x16xf32, #tpu.memory_space<vmem>>, vector<1x16xf32>
    %25 = vector.broadcast %23 : vector<64x1xf32> to vector<64x16xf32>
    %26 = vector.broadcast %24 : vector<1x16xf32> to vector<64x16xf32>
    %27 = arith.mulf %25, %26 : vector<64x16xf32>
    %c0_11 = arith.constant 0 : index
    %c0_12 = arith.constant 0 : index
    %28 = vector.load %arg4[%c0_11, %c0_12] : memref<1x16xf32, #tpu.memory_space<vmem>>, vector<1x16xf32>
    %29 = vector.broadcast %28 : vector<1x16xf32> to vector<64x16xf32>
    %30 = arith.addf %27, %29 : vector<64x16xf32>
    %cst_13 = arith.constant 0.000000e+00 : f32
    %31 = vector.broadcast %cst_13 : f32 to vector<64x16xf32>
    %32 = arith.cmpf ogt, %30, %31 : vector<64x16xf32>
    %33 = math.exp %30 : vector<64x16xf32>
    %cst_14 = arith.constant 1.000000e+00 : f32
    %34 = vector.broadcast %cst_14 : f32 to vector<64x16xf32>
    %35 = arith.subf %33, %34 : vector<64x16xf32>
    %36 = arith.select %32, %30, %35 : vector<64x16xi1>, vector<64x16xf32>
    %c0_15 = arith.constant 0 : index
    %c0_16 = arith.constant 0 : index
    %37 = vector.load %arg5[%c0_15, %c0_16] : memref<16x32xf32, #tpu.memory_space<vmem>>, vector<16x32xf32>
    %cst_17 = arith.constant dense<0.000000e+00> : vector<64x32xf32>
    %38 = tpu.matmul %36, %37, %cst_17 {dimension_numbers = #tpu.dot_dimension_numbers<[1], [0], [0], [1], [0, 0, 1, 1], [], []>} : vector<64x16xf32>, vector<16x32xf32>, vector<64x32xf32> -> vector<64x32xf32>
    %c0_18 = arith.constant 0 : index
    %c0_19 = arith.constant 0 : index
    %39 = vector.load %arg6[%c0_18, %c0_19] : memref<32x4xf32, #tpu.memory_space<vmem>>, vector<32x4xf32>
    %cst_20 = arith.constant dense<0.000000e+00> : vector<64x4xf32>
    %40 = tpu.matmul %38, %39, %cst_20 {dimension_numbers = #tpu.dot_dimension_numbers<[1], [0], [0], [1], [0, 0, 1, 1], [], []>} : vector<64x32xf32>, vector<32x4xf32>, vector<64x4xf32> -> vector<64x4xf32>
    %c0_21 = arith.constant 0 : index
    %c0_22 = arith.constant 0 : index
    %41 = vector.load %arg7[%c0_21, %c0_22] : memref<4x32xf32, #tpu.memory_space<vmem>>, vector<4x32xf32>
    %cst_23 = arith.constant dense<0.000000e+00> : vector<4x64xf32>
    %42 = tpu.matmul %41, %38, %cst_23 {dimension_numbers = #tpu.dot_dimension_numbers<[1], [1], [0], [0], [0, 0, 1, 0], [], []>} : vector<4x32xf32>, vector<64x32xf32>, vector<4x64xf32> -> vector<4x64xf32>
    %43 = vector.extract_strided_slice %40 {offsets = [0, 0], sizes = [64, 1], strides = [1, 1]} : vector<64x4xf32> to vector<64x1xf32>
    %44 = vector.extract_strided_slice %42 {offsets = [0, 0], sizes = [1, 64], strides = [1, 1]} : vector<4x64xf32> to vector<1x64xf32>
    %45 = vector.broadcast %43 : vector<64x1xf32> to vector<64x64xf32>
    %46 = vector.broadcast %44 : vector<1x64xf32> to vector<64x64xf32>
    %47 = arith.addf %45, %46 : vector<64x64xf32>
    %cst_24 = arith.constant 0.000000e+00 : f32
    %48 = vector.broadcast %cst_24 : f32 to vector<64x64xf32>
    %49 = arith.cmpf ogt, %47, %48 : vector<64x64xf32>
    %cst_25 = arith.constant 2.000000e-01 : f32
    %50 = vector.broadcast %cst_25 : f32 to vector<64x64xf32>
    %51 = arith.mulf %50, %47 : vector<64x64xf32>
    %52 = arith.select %49, %47, %51 : vector<64x64xi1>, vector<64x64xf32>
    %53 = arith.addf %52, %22 : vector<64x64xf32>
    %cst_26 = arith.constant dense<0xFF800000> : vector<64xf32>
    %54 = vector.multi_reduction <maximumf>, %53, %cst_26 [1] : vector<64x64xf32> to vector<64xf32>
    %55 = vector.shape_cast %54 : vector<64xf32> to vector<64x1xf32>
    %56 = vector.broadcast %55 : vector<64x1xf32> to vector<64x64xf32>
    %57 = arith.subf %53, %56 : vector<64x64xf32>
    %58 = math.exp %57 : vector<64x64xf32>
    %59 = arith.mulf %58, %17 : vector<64x64xf32>
    %cst_27 = arith.constant dense<0.000000e+00> : vector<64xf32>
    %60 = vector.multi_reduction <add>, %59, %cst_27 [1] : vector<64x64xf32> to vector<64xf32>
    %61 = vector.shape_cast %60 : vector<64xf32> to vector<64x1xf32>
    %62 = tpu.reciprocal %61 : vector<64x1xf32> -> vector<64x1xf32>
    %63 = vector.broadcast %62 : vector<64x1xf32> to vector<64x64xf32>
    %64 = arith.mulf %59, %63 : vector<64x64xf32>
    %65 = vector.extract_strided_slice %38 {offsets = [0, 0], sizes = [64, 8], strides = [1, 1]} : vector<64x32xf32> to vector<64x8xf32>
    %cst_28 = arith.constant dense<0.000000e+00> : vector<64x8xf32>
    %66 = tpu.matmul %64, %65, %cst_28 {dimension_numbers = #tpu.dot_dimension_numbers<[1], [0], [0], [1], [0, 0, 1, 1], [], []>} : vector<64x64xf32>, vector<64x8xf32>, vector<64x8xf32> -> vector<64x8xf32>
    %67 = vector.extract_strided_slice %40 {offsets = [0, 1], sizes = [64, 1], strides = [1, 1]} : vector<64x4xf32> to vector<64x1xf32>
    %68 = vector.extract_strided_slice %42 {offsets = [1, 0], sizes = [1, 64], strides = [1, 1]} : vector<4x64xf32> to vector<1x64xf32>
    %69 = vector.broadcast %67 : vector<64x1xf32> to vector<64x64xf32>
    %70 = vector.broadcast %68 : vector<1x64xf32> to vector<64x64xf32>
    %71 = arith.addf %69, %70 : vector<64x64xf32>
    %cst_29 = arith.constant 0.000000e+00 : f32
    %72 = vector.broadcast %cst_29 : f32 to vector<64x64xf32>
    %73 = arith.cmpf ogt, %71, %72 : vector<64x64xf32>
    %cst_30 = arith.constant 2.000000e-01 : f32
    %74 = vector.broadcast %cst_30 : f32 to vector<64x64xf32>
    %75 = arith.mulf %74, %71 : vector<64x64xf32>
    %76 = arith.select %73, %71, %75 : vector<64x64xi1>, vector<64x64xf32>
    %77 = arith.addf %76, %22 : vector<64x64xf32>
    %cst_31 = arith.constant dense<0xFF800000> : vector<64xf32>
    %78 = vector.multi_reduction <maximumf>, %77, %cst_31 [1] : vector<64x64xf32> to vector<64xf32>
    %79 = vector.shape_cast %78 : vector<64xf32> to vector<64x1xf32>
    %80 = vector.broadcast %79 : vector<64x1xf32> to vector<64x64xf32>
    %81 = arith.subf %77, %80 : vector<64x64xf32>
    %82 = math.exp %81 : vector<64x64xf32>
    %83 = arith.mulf %82, %17 : vector<64x64xf32>
    %cst_32 = arith.constant dense<0.000000e+00> : vector<64xf32>
    %84 = vector.multi_reduction <add>, %83, %cst_32 [1] : vector<64x64xf32> to vector<64xf32>
    %85 = vector.shape_cast %84 : vector<64xf32> to vector<64x1xf32>
    %86 = tpu.reciprocal %85 : vector<64x1xf32> -> vector<64x1xf32>
    %87 = vector.broadcast %86 : vector<64x1xf32> to vector<64x64xf32>
    %88 = arith.mulf %83, %87 : vector<64x64xf32>
    %89 = vector.extract_strided_slice %38 {offsets = [0, 8], sizes = [64, 8], strides = [1, 1]} : vector<64x32xf32> to vector<64x8xf32>
    %cst_33 = arith.constant dense<0.000000e+00> : vector<64x8xf32>
    %90 = tpu.matmul %88, %89, %cst_33 {dimension_numbers = #tpu.dot_dimension_numbers<[1], [0], [0], [1], [0, 0, 1, 1], [], []>} : vector<64x64xf32>, vector<64x8xf32>, vector<64x8xf32> -> vector<64x8xf32>
    %91 = vector.extract_strided_slice %40 {offsets = [0, 2], sizes = [64, 1], strides = [1, 1]} : vector<64x4xf32> to vector<64x1xf32>
    %92 = vector.extract_strided_slice %42 {offsets = [2, 0], sizes = [1, 64], strides = [1, 1]} : vector<4x64xf32> to vector<1x64xf32>
    %93 = vector.broadcast %91 : vector<64x1xf32> to vector<64x64xf32>
    %94 = vector.broadcast %92 : vector<1x64xf32> to vector<64x64xf32>
    %95 = arith.addf %93, %94 : vector<64x64xf32>
    %cst_34 = arith.constant 0.000000e+00 : f32
    %96 = vector.broadcast %cst_34 : f32 to vector<64x64xf32>
    %97 = arith.cmpf ogt, %95, %96 : vector<64x64xf32>
    %cst_35 = arith.constant 2.000000e-01 : f32
    %98 = vector.broadcast %cst_35 : f32 to vector<64x64xf32>
    %99 = arith.mulf %98, %95 : vector<64x64xf32>
    %100 = arith.select %97, %95, %99 : vector<64x64xi1>, vector<64x64xf32>
    %101 = arith.addf %100, %22 : vector<64x64xf32>
    %cst_36 = arith.constant dense<0xFF800000> : vector<64xf32>
    %102 = vector.multi_reduction <maximumf>, %101, %cst_36 [1] : vector<64x64xf32> to vector<64xf32>
    %103 = vector.shape_cast %102 : vector<64xf32> to vector<64x1xf32>
    %104 = vector.broadcast %103 : vector<64x1xf32> to vector<64x64xf32>
    %105 = arith.subf %101, %104 : vector<64x64xf32>
    %106 = math.exp %105 : vector<64x64xf32>
    %107 = arith.mulf %106, %17 : vector<64x64xf32>
    %cst_37 = arith.constant dense<0.000000e+00> : vector<64xf32>
    %108 = vector.multi_reduction <add>, %107, %cst_37 [1] : vector<64x64xf32> to vector<64xf32>
    %109 = vector.shape_cast %108 : vector<64xf32> to vector<64x1xf32>
    %110 = tpu.reciprocal %109 : vector<64x1xf32> -> vector<64x1xf32>
    %111 = vector.broadcast %110 : vector<64x1xf32> to vector<64x64xf32>
    %112 = arith.mulf %107, %111 : vector<64x64xf32>
    %113 = vector.extract_strided_slice %38 {offsets = [0, 16], sizes = [64, 8], strides = [1, 1]} : vector<64x32xf32> to vector<64x8xf32>
    %cst_38 = arith.constant dense<0.000000e+00> : vector<64x8xf32>
    %114 = tpu.matmul %112, %113, %cst_38 {dimension_numbers = #tpu.dot_dimension_numbers<[1], [0], [0], [1], [0, 0, 1, 1], [], []>} : vector<64x64xf32>, vector<64x8xf32>, vector<64x8xf32> -> vector<64x8xf32>
    %115 = vector.extract_strided_slice %40 {offsets = [0, 3], sizes = [64, 1], strides = [1, 1]} : vector<64x4xf32> to vector<64x1xf32>
    %116 = vector.extract_strided_slice %42 {offsets = [3, 0], sizes = [1, 64], strides = [1, 1]} : vector<4x64xf32> to vector<1x64xf32>
    %117 = vector.broadcast %115 : vector<64x1xf32> to vector<64x64xf32>
    %118 = vector.broadcast %116 : vector<1x64xf32> to vector<64x64xf32>
    %119 = arith.addf %117, %118 : vector<64x64xf32>
    %cst_39 = arith.constant 0.000000e+00 : f32
    %120 = vector.broadcast %cst_39 : f32 to vector<64x64xf32>
    %121 = arith.cmpf ogt, %119, %120 : vector<64x64xf32>
    %cst_40 = arith.constant 2.000000e-01 : f32
    %122 = vector.broadcast %cst_40 : f32 to vector<64x64xf32>
    %123 = arith.mulf %122, %119 : vector<64x64xf32>
    %124 = arith.select %121, %119, %123 : vector<64x64xi1>, vector<64x64xf32>
    %125 = arith.addf %124, %22 : vector<64x64xf32>
    %cst_41 = arith.constant dense<0xFF800000> : vector<64xf32>
    %126 = vector.multi_reduction <maximumf>, %125, %cst_41 [1] : vector<64x64xf32> to vector<64xf32>
    %127 = vector.shape_cast %126 : vector<64xf32> to vector<64x1xf32>
    %128 = vector.broadcast %127 : vector<64x1xf32> to vector<64x64xf32>
    %129 = arith.subf %125, %128 : vector<64x64xf32>
    %130 = math.exp %129 : vector<64x64xf32>
    %131 = arith.mulf %130, %17 : vector<64x64xf32>
    %cst_42 = arith.constant dense<0.000000e+00> : vector<64xf32>
    %132 = vector.multi_reduction <add>, %131, %cst_42 [1] : vector<64x64xf32> to vector<64xf32>
    %133 = vector.shape_cast %132 : vector<64xf32> to vector<64x1xf32>
    %134 = tpu.reciprocal %133 : vector<64x1xf32> -> vector<64x1xf32>
    %135 = vector.broadcast %134 : vector<64x1xf32> to vector<64x64xf32>
    %136 = arith.mulf %131, %135 : vector<64x64xf32>
    %137 = vector.extract_strided_slice %38 {offsets = [0, 24], sizes = [64, 8], strides = [1, 1]} : vector<64x32xf32> to vector<64x8xf32>
    %cst_43 = arith.constant dense<0.000000e+00> : vector<64x8xf32>
    %138 = tpu.matmul %136, %137, %cst_43 {dimension_numbers = #tpu.dot_dimension_numbers<[1], [0], [0], [1], [0, 0, 1, 1], [], []>} : vector<64x64xf32>, vector<64x8xf32>, vector<64x8xf32> -> vector<64x8xf32>
    %139 = tpu.concatenate %66, %90, %114, %138 in 1 : vector<64x8xf32>, vector<64x8xf32>, vector<64x8xf32>, vector<64x8xf32> -> vector<64x32xf32>
    %c0_44 = arith.constant 0 : index
    %c0_45 = arith.constant 0 : index
    %140 = vector.load %arg8[%c0_44, %c0_45] : memref<1x32xf32, #tpu.memory_space<vmem>>, vector<1x32xf32>
    %141 = vector.broadcast %140 : vector<1x32xf32> to vector<64x32xf32>
    %142 = arith.addf %139, %141 : vector<64x32xf32>
    %cst_46 = arith.constant 0.000000e+00 : f32
    %143 = vector.broadcast %cst_46 : f32 to vector<64x32xf32>
    %144 = arith.cmpf ogt, %142, %143 : vector<64x32xf32>
    %145 = math.exp %142 : vector<64x32xf32>
    %cst_47 = arith.constant 1.000000e+00 : f32
    %146 = vector.broadcast %cst_47 : f32 to vector<64x32xf32>
    %147 = arith.subf %145, %146 : vector<64x32xf32>
    %148 = arith.select %144, %142, %147 : vector<64x32xi1>, vector<64x32xf32>
    %c0_48 = arith.constant 0 : index
    %c0_49 = arith.constant 0 : index
    %149 = vector.load %arg9[%c0_48, %c0_49] : memref<32x32xf32, #tpu.memory_space<vmem>>, vector<32x32xf32>
    %cst_50 = arith.constant dense<0.000000e+00> : vector<64x32xf32>
    %150 = tpu.matmul %148, %149, %cst_50 {dimension_numbers = #tpu.dot_dimension_numbers<[1], [0], [0], [1], [0, 0, 1, 1], [], []>} : vector<64x32xf32>, vector<32x32xf32>, vector<64x32xf32> -> vector<64x32xf32>
    %c0_51 = arith.constant 0 : index
    %c0_52 = arith.constant 0 : index
    %151 = vector.load %arg10[%c0_51, %c0_52] : memref<32x4xf32, #tpu.memory_space<vmem>>, vector<32x4xf32>
    %cst_53 = arith.constant dense<0.000000e+00> : vector<64x4xf32>
    %152 = tpu.matmul %150, %151, %cst_53 {dimension_numbers = #tpu.dot_dimension_numbers<[1], [0], [0], [1], [0, 0, 1, 1], [], []>} : vector<64x32xf32>, vector<32x4xf32>, vector<64x4xf32> -> vector<64x4xf32>
    %c0_54 = arith.constant 0 : index
    %c0_55 = arith.constant 0 : index
    %153 = vector.load %arg11[%c0_54, %c0_55] : memref<4x32xf32, #tpu.memory_space<vmem>>, vector<4x32xf32>
    %cst_56 = arith.constant dense<0.000000e+00> : vector<4x64xf32>
    %154 = tpu.matmul %153, %150, %cst_56 {dimension_numbers = #tpu.dot_dimension_numbers<[1], [1], [0], [0], [0, 0, 1, 0], [], []>} : vector<4x32xf32>, vector<64x32xf32>, vector<4x64xf32> -> vector<4x64xf32>
    %155 = vector.extract_strided_slice %152 {offsets = [0, 0], sizes = [64, 1], strides = [1, 1]} : vector<64x4xf32> to vector<64x1xf32>
    %156 = vector.extract_strided_slice %154 {offsets = [0, 0], sizes = [1, 64], strides = [1, 1]} : vector<4x64xf32> to vector<1x64xf32>
    %157 = vector.broadcast %155 : vector<64x1xf32> to vector<64x64xf32>
    %158 = vector.broadcast %156 : vector<1x64xf32> to vector<64x64xf32>
    %159 = arith.addf %157, %158 : vector<64x64xf32>
    %cst_57 = arith.constant 0.000000e+00 : f32
    %160 = vector.broadcast %cst_57 : f32 to vector<64x64xf32>
    %161 = arith.cmpf ogt, %159, %160 : vector<64x64xf32>
    %cst_58 = arith.constant 2.000000e-01 : f32
    %162 = vector.broadcast %cst_58 : f32 to vector<64x64xf32>
    %163 = arith.mulf %162, %159 : vector<64x64xf32>
    %164 = arith.select %161, %159, %163 : vector<64x64xi1>, vector<64x64xf32>
    %165 = arith.addf %164, %22 : vector<64x64xf32>
    %cst_59 = arith.constant dense<0xFF800000> : vector<64xf32>
    %166 = vector.multi_reduction <maximumf>, %165, %cst_59 [1] : vector<64x64xf32> to vector<64xf32>
    %167 = vector.shape_cast %166 : vector<64xf32> to vector<64x1xf32>
    %168 = vector.broadcast %167 : vector<64x1xf32> to vector<64x64xf32>
    %169 = arith.subf %165, %168 : vector<64x64xf32>
    %170 = math.exp %169 : vector<64x64xf32>
    %171 = arith.mulf %170, %17 : vector<64x64xf32>
    %cst_60 = arith.constant dense<0.000000e+00> : vector<64xf32>
    %172 = vector.multi_reduction <add>, %171, %cst_60 [1] : vector<64x64xf32> to vector<64xf32>
    %173 = vector.shape_cast %172 : vector<64xf32> to vector<64x1xf32>
    %174 = tpu.reciprocal %173 : vector<64x1xf32> -> vector<64x1xf32>
    %175 = vector.broadcast %174 : vector<64x1xf32> to vector<64x64xf32>
    %176 = arith.mulf %171, %175 : vector<64x64xf32>
    %177 = vector.extract_strided_slice %150 {offsets = [0, 0], sizes = [64, 8], strides = [1, 1]} : vector<64x32xf32> to vector<64x8xf32>
    %cst_61 = arith.constant dense<0.000000e+00> : vector<64x8xf32>
    %178 = tpu.matmul %176, %177, %cst_61 {dimension_numbers = #tpu.dot_dimension_numbers<[1], [0], [0], [1], [0, 0, 1, 1], [], []>} : vector<64x64xf32>, vector<64x8xf32>, vector<64x8xf32> -> vector<64x8xf32>
    %179 = vector.extract_strided_slice %152 {offsets = [0, 1], sizes = [64, 1], strides = [1, 1]} : vector<64x4xf32> to vector<64x1xf32>
    %180 = vector.extract_strided_slice %154 {offsets = [1, 0], sizes = [1, 64], strides = [1, 1]} : vector<4x64xf32> to vector<1x64xf32>
    %181 = vector.broadcast %179 : vector<64x1xf32> to vector<64x64xf32>
    %182 = vector.broadcast %180 : vector<1x64xf32> to vector<64x64xf32>
    %183 = arith.addf %181, %182 : vector<64x64xf32>
    %cst_62 = arith.constant 0.000000e+00 : f32
    %184 = vector.broadcast %cst_62 : f32 to vector<64x64xf32>
    %185 = arith.cmpf ogt, %183, %184 : vector<64x64xf32>
    %cst_63 = arith.constant 2.000000e-01 : f32
    %186 = vector.broadcast %cst_63 : f32 to vector<64x64xf32>
    %187 = arith.mulf %186, %183 : vector<64x64xf32>
    %188 = arith.select %185, %183, %187 : vector<64x64xi1>, vector<64x64xf32>
    %189 = arith.addf %188, %22 : vector<64x64xf32>
    %cst_64 = arith.constant dense<0xFF800000> : vector<64xf32>
    %190 = vector.multi_reduction <maximumf>, %189, %cst_64 [1] : vector<64x64xf32> to vector<64xf32>
    %191 = vector.shape_cast %190 : vector<64xf32> to vector<64x1xf32>
    %192 = vector.broadcast %191 : vector<64x1xf32> to vector<64x64xf32>
    %193 = arith.subf %189, %192 : vector<64x64xf32>
    %194 = math.exp %193 : vector<64x64xf32>
    %195 = arith.mulf %194, %17 : vector<64x64xf32>
    %cst_65 = arith.constant dense<0.000000e+00> : vector<64xf32>
    %196 = vector.multi_reduction <add>, %195, %cst_65 [1] : vector<64x64xf32> to vector<64xf32>
    %197 = vector.shape_cast %196 : vector<64xf32> to vector<64x1xf32>
    %198 = tpu.reciprocal %197 : vector<64x1xf32> -> vector<64x1xf32>
    %199 = vector.broadcast %198 : vector<64x1xf32> to vector<64x64xf32>
    %200 = arith.mulf %195, %199 : vector<64x64xf32>
    %201 = vector.extract_strided_slice %150 {offsets = [0, 8], sizes = [64, 8], strides = [1, 1]} : vector<64x32xf32> to vector<64x8xf32>
    %cst_66 = arith.constant dense<0.000000e+00> : vector<64x8xf32>
    %202 = tpu.matmul %200, %201, %cst_66 {dimension_numbers = #tpu.dot_dimension_numbers<[1], [0], [0], [1], [0, 0, 1, 1], [], []>} : vector<64x64xf32>, vector<64x8xf32>, vector<64x8xf32> -> vector<64x8xf32>
    %203 = vector.extract_strided_slice %152 {offsets = [0, 2], sizes = [64, 1], strides = [1, 1]} : vector<64x4xf32> to vector<64x1xf32>
    %204 = vector.extract_strided_slice %154 {offsets = [2, 0], sizes = [1, 64], strides = [1, 1]} : vector<4x64xf32> to vector<1x64xf32>
    %205 = vector.broadcast %203 : vector<64x1xf32> to vector<64x64xf32>
    %206 = vector.broadcast %204 : vector<1x64xf32> to vector<64x64xf32>
    %207 = arith.addf %205, %206 : vector<64x64xf32>
    %cst_67 = arith.constant 0.000000e+00 : f32
    %208 = vector.broadcast %cst_67 : f32 to vector<64x64xf32>
    %209 = arith.cmpf ogt, %207, %208 : vector<64x64xf32>
    %cst_68 = arith.constant 2.000000e-01 : f32
    %210 = vector.broadcast %cst_68 : f32 to vector<64x64xf32>
    %211 = arith.mulf %210, %207 : vector<64x64xf32>
    %212 = arith.select %209, %207, %211 : vector<64x64xi1>, vector<64x64xf32>
    %213 = arith.addf %212, %22 : vector<64x64xf32>
    %cst_69 = arith.constant dense<0xFF800000> : vector<64xf32>
    %214 = vector.multi_reduction <maximumf>, %213, %cst_69 [1] : vector<64x64xf32> to vector<64xf32>
    %215 = vector.shape_cast %214 : vector<64xf32> to vector<64x1xf32>
    %216 = vector.broadcast %215 : vector<64x1xf32> to vector<64x64xf32>
    %217 = arith.subf %213, %216 : vector<64x64xf32>
    %218 = math.exp %217 : vector<64x64xf32>
    %219 = arith.mulf %218, %17 : vector<64x64xf32>
    %cst_70 = arith.constant dense<0.000000e+00> : vector<64xf32>
    %220 = vector.multi_reduction <add>, %219, %cst_70 [1] : vector<64x64xf32> to vector<64xf32>
    %221 = vector.shape_cast %220 : vector<64xf32> to vector<64x1xf32>
    %222 = tpu.reciprocal %221 : vector<64x1xf32> -> vector<64x1xf32>
    %223 = vector.broadcast %222 : vector<64x1xf32> to vector<64x64xf32>
    %224 = arith.mulf %219, %223 : vector<64x64xf32>
    %225 = vector.extract_strided_slice %150 {offsets = [0, 16], sizes = [64, 8], strides = [1, 1]} : vector<64x32xf32> to vector<64x8xf32>
    %cst_71 = arith.constant dense<0.000000e+00> : vector<64x8xf32>
    %226 = tpu.matmul %224, %225, %cst_71 {dimension_numbers = #tpu.dot_dimension_numbers<[1], [0], [0], [1], [0, 0, 1, 1], [], []>} : vector<64x64xf32>, vector<64x8xf32>, vector<64x8xf32> -> vector<64x8xf32>
    %227 = vector.extract_strided_slice %152 {offsets = [0, 3], sizes = [64, 1], strides = [1, 1]} : vector<64x4xf32> to vector<64x1xf32>
    %228 = vector.extract_strided_slice %154 {offsets = [3, 0], sizes = [1, 64], strides = [1, 1]} : vector<4x64xf32> to vector<1x64xf32>
    %229 = vector.broadcast %227 : vector<64x1xf32> to vector<64x64xf32>
    %230 = vector.broadcast %228 : vector<1x64xf32> to vector<64x64xf32>
    %231 = arith.addf %229, %230 : vector<64x64xf32>
    %cst_72 = arith.constant 0.000000e+00 : f32
    %232 = vector.broadcast %cst_72 : f32 to vector<64x64xf32>
    %233 = arith.cmpf ogt, %231, %232 : vector<64x64xf32>
    %cst_73 = arith.constant 2.000000e-01 : f32
    %234 = vector.broadcast %cst_73 : f32 to vector<64x64xf32>
    %235 = arith.mulf %234, %231 : vector<64x64xf32>
    %236 = arith.select %233, %231, %235 : vector<64x64xi1>, vector<64x64xf32>
    %237 = arith.addf %236, %22 : vector<64x64xf32>
    %cst_74 = arith.constant dense<0xFF800000> : vector<64xf32>
    %238 = vector.multi_reduction <maximumf>, %237, %cst_74 [1] : vector<64x64xf32> to vector<64xf32>
    %239 = vector.shape_cast %238 : vector<64xf32> to vector<64x1xf32>
    %240 = vector.broadcast %239 : vector<64x1xf32> to vector<64x64xf32>
    %241 = arith.subf %237, %240 : vector<64x64xf32>
    %242 = math.exp %241 : vector<64x64xf32>
    %243 = arith.mulf %242, %17 : vector<64x64xf32>
    %cst_75 = arith.constant dense<0.000000e+00> : vector<64xf32>
    %244 = vector.multi_reduction <add>, %243, %cst_75 [1] : vector<64x64xf32> to vector<64xf32>
    %245 = vector.shape_cast %244 : vector<64xf32> to vector<64x1xf32>
    %246 = tpu.reciprocal %245 : vector<64x1xf32> -> vector<64x1xf32>
    %247 = vector.broadcast %246 : vector<64x1xf32> to vector<64x64xf32>
    %248 = arith.mulf %243, %247 : vector<64x64xf32>
    %249 = vector.extract_strided_slice %150 {offsets = [0, 24], sizes = [64, 8], strides = [1, 1]} : vector<64x32xf32> to vector<64x8xf32>
    %cst_76 = arith.constant dense<0.000000e+00> : vector<64x8xf32>
    %250 = tpu.matmul %248, %249, %cst_76 {dimension_numbers = #tpu.dot_dimension_numbers<[1], [0], [0], [1], [0, 0, 1, 1], [], []>} : vector<64x64xf32>, vector<64x8xf32>, vector<64x8xf32> -> vector<64x8xf32>
    %251 = tpu.concatenate %178, %202, %226, %250 in 1 : vector<64x8xf32>, vector<64x8xf32>, vector<64x8xf32>, vector<64x8xf32> -> vector<64x32xf32>
    %c0_77 = arith.constant 0 : index
    %c0_78 = arith.constant 0 : index
    %252 = vector.load %arg12[%c0_77, %c0_78] : memref<1x32xf32, #tpu.memory_space<vmem>>, vector<1x32xf32>
    %253 = vector.broadcast %252 : vector<1x32xf32> to vector<64x32xf32>
    %254 = arith.addf %251, %253 : vector<64x32xf32>
    %cst_79 = arith.constant 0.000000e+00 : f32
    %255 = vector.broadcast %cst_79 : f32 to vector<64x32xf32>
    %256 = arith.cmpf ogt, %254, %255 : vector<64x32xf32>
    %257 = math.exp %254 : vector<64x32xf32>
    %cst_80 = arith.constant 1.000000e+00 : f32
    %258 = vector.broadcast %cst_80 : f32 to vector<64x32xf32>
    %259 = arith.subf %257, %258 : vector<64x32xf32>
    %260 = arith.select %256, %254, %259 : vector<64x32xi1>, vector<64x32xf32>
    %c0_81 = arith.constant 0 : index
    %c0_82 = arith.constant 0 : index
    %261 = vector.load %arg13[%c0_81, %c0_82] : memref<32x16xf32, #tpu.memory_space<vmem>>, vector<32x16xf32>
    %cst_83 = arith.constant dense<0.000000e+00> : vector<64x16xf32>
    %262 = tpu.matmul %260, %261, %cst_83 {dimension_numbers = #tpu.dot_dimension_numbers<[1], [0], [0], [1], [0, 0, 1, 1], [], []>} : vector<64x32xf32>, vector<32x16xf32>, vector<64x16xf32> -> vector<64x16xf32>
    %c0_84 = arith.constant 0 : index
    %c0_85 = arith.constant 0 : index
    %263 = vector.load %arg14[%c0_84, %c0_85] : memref<16x1xf32, #tpu.memory_space<vmem>>, vector<16x1xf32>
    %cst_86 = arith.constant dense<0.000000e+00> : vector<64x1xf32>
    %264 = tpu.matmul %262, %263, %cst_86 {dimension_numbers = #tpu.dot_dimension_numbers<[1], [0], [0], [1], [0, 0, 1, 1], [], []>} : vector<64x16xf32>, vector<16x1xf32>, vector<64x1xf32> -> vector<64x1xf32>
    %c0_87 = arith.constant 0 : index
    %c0_88 = arith.constant 0 : index
    %265 = vector.load %arg15[%c0_87, %c0_88] : memref<1x16xf32, #tpu.memory_space<vmem>>, vector<1x16xf32>
    %cst_89 = arith.constant dense<0.000000e+00> : vector<1x64xf32>
    %266 = tpu.matmul %265, %262, %cst_89 {dimension_numbers = #tpu.dot_dimension_numbers<[1], [1], [0], [0], [0, 0, 1, 0], [], []>} : vector<1x16xf32>, vector<64x16xf32>, vector<1x64xf32> -> vector<1x64xf32>
    %267 = vector.broadcast %264 : vector<64x1xf32> to vector<64x64xf32>
    %268 = vector.broadcast %266 : vector<1x64xf32> to vector<64x64xf32>
    %269 = arith.addf %267, %268 : vector<64x64xf32>
    %cst_90 = arith.constant 0.000000e+00 : f32
    %270 = vector.broadcast %cst_90 : f32 to vector<64x64xf32>
    %271 = arith.cmpf ogt, %269, %270 : vector<64x64xf32>
    %cst_91 = arith.constant 2.000000e-01 : f32
    %272 = vector.broadcast %cst_91 : f32 to vector<64x64xf32>
    %273 = arith.mulf %272, %269 : vector<64x64xf32>
    %274 = arith.select %271, %269, %273 : vector<64x64xi1>, vector<64x64xf32>
    %275 = arith.addf %274, %22 : vector<64x64xf32>
    %cst_92 = arith.constant dense<0xFF800000> : vector<64xf32>
    %276 = vector.multi_reduction <maximumf>, %275, %cst_92 [1] : vector<64x64xf32> to vector<64xf32>
    %277 = vector.shape_cast %276 : vector<64xf32> to vector<64x1xf32>
    %278 = vector.broadcast %277 : vector<64x1xf32> to vector<64x64xf32>
    %279 = arith.subf %275, %278 : vector<64x64xf32>
    %280 = math.exp %279 : vector<64x64xf32>
    %281 = arith.mulf %280, %17 : vector<64x64xf32>
    %cst_93 = arith.constant dense<0.000000e+00> : vector<64xf32>
    %282 = vector.multi_reduction <add>, %281, %cst_93 [1] : vector<64x64xf32> to vector<64xf32>
    %283 = vector.shape_cast %282 : vector<64xf32> to vector<64x1xf32>
    %284 = tpu.reciprocal %283 : vector<64x1xf32> -> vector<64x1xf32>
    %285 = vector.broadcast %284 : vector<64x1xf32> to vector<64x64xf32>
    %286 = arith.mulf %281, %285 : vector<64x64xf32>
    %cst_94 = arith.constant dense<0.000000e+00> : vector<64x16xf32>
    %287 = tpu.matmul %286, %262, %cst_94 {dimension_numbers = #tpu.dot_dimension_numbers<[1], [0], [0], [1], [0, 0, 1, 1], [], []>} : vector<64x64xf32>, vector<64x16xf32>, vector<64x16xf32> -> vector<64x16xf32>
    %c0_95 = arith.constant 0 : index
    %c0_96 = arith.constant 0 : index
    %288 = vector.load %arg16[%c0_95, %c0_96] : memref<1x16xf32, #tpu.memory_space<vmem>>, vector<1x16xf32>
    %289 = vector.broadcast %288 : vector<1x16xf32> to vector<64x16xf32>
    %290 = arith.addf %287, %289 : vector<64x16xf32>
    %c0_97 = arith.constant 0 : index
    %c0_98 = arith.constant 0 : index
    %291 = vector.load %arg18[%c0_97, %c0_98] : memref<16x16xf32, #tpu.memory_space<vmem>>, vector<16x16xf32>
    %cst_99 = arith.constant dense<0.000000e+00> : vector<64x16xf32>
    %292 = tpu.matmul %290, %291, %cst_99 {dimension_numbers = #tpu.dot_dimension_numbers<[1], [0], [0], [1], [0, 0, 1, 1], [], []>} : vector<64x16xf32>, vector<16x16xf32>, vector<64x16xf32> -> vector<64x16xf32>
    %c0_100 = arith.constant 0 : index
    %c0_101 = arith.constant 0 : index
    %293 = vector.load %arg19[%c0_100, %c0_101] : memref<1x16xf32, #tpu.memory_space<vmem>>, vector<1x16xf32>
    %294 = vector.broadcast %293 : vector<1x16xf32> to vector<64x16xf32>
    %295 = arith.addf %292, %294 : vector<64x16xf32>
    %c0_102 = arith.constant 0 : index
    %c0_103 = arith.constant 0 : index
    %296 = vector.load %arg17[%c0_102, %c0_103] : memref<64x1xf32, #tpu.memory_space<vmem>>, vector<64x1xf32>
    %cst_104 = arith.constant 0.000000e+00 : f32
    %297 = vector.broadcast %cst_104 : f32 to vector<64x1xf32>
    %298 = arith.cmpf ogt, %296, %297 : vector<64x1xf32>
    %cst_105 = arith.constant 0x7FC00000 : f32
    %299 = vector.broadcast %cst_105 : f32 to vector<64x16xf32>
    %300 = vector.shape_cast %298 : vector<64x1xi1> to vector<64x1xi1>
    %301 = vector.broadcast %300 : vector<64x1xi1> to vector<64x16xi1>
    %302 = arith.select %301, %295, %299 : vector<64x16xi1>, vector<64x16xf32>
    %c0_106 = arith.constant 0 : index
    %c0_107 = arith.constant 0 : index
    %303 = vector.load %arg20[%c0_106, %c0_107] : memref<64x16xf32, #tpu.memory_space<vmem>>, vector<64x16xf32>
    tpu.vector_store %arg20[%c0_106, %c0_107], %302 {strides = array<i32>} : memref<64x16xf32, #tpu.memory_space<vmem>>, vector<64x16xf32>,
    return
  }
}

</mosaic_0001>

<llo_original>
// kernel: tpu_custom_call.1
$region0: #{tpu_custom_call.1}
  #allocation0 [shape = 'u32[]', space=smem, size = 0x4, offset = 0x4, fixed_abs, tag = 'smem constant byte address 0x4 - core index']
  #allocation1 [shape = 'u32[144,128]{1,0:T(1,128)}', space=vmem, size = 0x12000, scoped, tag = 'internal scratch']
  %s0 = inlined_call_operand.vmem [shape: s32[128,1], index: 0, kind: input, shape index: {}]
  %s1 = inlined_call_operand.vmem [shape: s32[1,128], index: 1, kind: input, shape index: {}]
  %s2 = inlined_call_operand.vmem [shape: f32[64,1], index: 2, kind: input, shape index: {}]
  %s3 = inlined_call_operand.vmem [shape: f32[1,16], index: 3, kind: input, shape index: {}]
  %s4 = inlined_call_operand.vmem [shape: f32[1,16], index: 4, kind: input, shape index: {}]
  %s5 = inlined_call_operand.vmem [shape: f32[16,32], index: 5, kind: input, shape index: {}]
  %s6 = inlined_call_operand.vmem [shape: f32[32,4], index: 6, kind: input, shape index: {}]
  %s7 = inlined_call_operand.vmem [shape: f32[4,32], index: 7, kind: input, shape index: {}]
  %s8 = inlined_call_operand.vmem [shape: f32[1,32], index: 8, kind: input, shape index: {}]
  %s9 = inlined_call_operand.vmem [shape: f32[32,32], index: 9, kind: input, shape index: {}]
  %s10 = inlined_call_operand.vmem [shape: f32[32,4], index: 10, kind: input, shape index: {}]
  %s11 = inlined_call_operand.vmem [shape: f32[4,32], index: 11, kind: input, shape index: {}]
  %s12 = inlined_call_operand.vmem [shape: f32[1,32], index: 12, kind: input, shape index: {}]
  %s13 = inlined_call_operand.vmem [shape: f32[32,16], index: 13, kind: input, shape index: {}]
  %s14 = inlined_call_operand.vmem [shape: f32[16,1], index: 14, kind: input, shape index: {}]
  %s15 = inlined_call_operand.vmem [shape: f32[1,16], index: 15, kind: input, shape index: {}]
  %s16 = inlined_call_operand.vmem [shape: f32[1,16], index: 16, kind: input, shape index: {}]
  %s17 = inlined_call_operand.vmem [shape: f32[64,1], index: 17, kind: input, shape index: {}]
  %s18 = inlined_call_operand.vmem [shape: f32[16,16], index: 18, kind: input, shape index: {}]
  %s19 = inlined_call_operand.vmem [shape: f32[1,16], index: 19, kind: input, shape index: {}]
  %s20 = inlined_call_operand.vmem [shape: f32[64,16], index: 20, kind: output, shape index: {}]
  %s21 = sld [smem:[#allocation0]]
  $region90: #{tpu_custom_call.1} parent=0
    _
  %s23 = ssub.s32 1, %s21
  %s24 = scalar_select 0, %s23, %s21
  // Predicated region
  $region2: #{tpu_custom_call.1} parent=0 // pred_check
    _
  $region3: #{tpu_custom_call.1} parent=0 // pred_check_branch
    %26 = sbr.rel (0) target = $region5
  $region4: #{tpu_custom_call.1} parent=0 // pred_region
    _
  $region5: #{tpu_custom_call.1} parent=0 // pred_fallthru
    _
  // Predicated region
  $region6: #{tpu_custom_call.1} parent=0 // pred_check
    _
  $region7: #{tpu_custom_call.1} parent=0 // pred_check_branch
    %28 = sbr.rel (0) target = $region9
  $region8: #{tpu_custom_call.1} parent=0 // pred_region
    _
  $region9: #{tpu_custom_call.1} parent=0 // pred_fallthru
    _
  // Predicated region
  $region10: #{tpu_custom_call.1} parent=0 // pred_check
    _
  $region11: #{tpu_custom_call.1} parent=0 // pred_check_branch
    %30 = sbr.rel (0) target = $region13
  $region12: #{tpu_custom_call.1} parent=0 // pred_region
    _
  $region13: #{tpu_custom_call.1} parent=0 // pred_fallthru
    _
  // Predicated region
  $region14: #{tpu_custom_call.1} parent=0 // pred_check
    _
  $region15: #{tpu_custom_call.1} parent=0 // pred_check_branch
    %32 = sbr.rel (0) target = $region17
  $region16: #{tpu_custom_call.1} parent=0 // pred_region
    _
  $region17: #{tpu_custom_call.1} parent=0 // pred_fallthru
    _
  // Predicated region
  $region18: #{tpu_custom_call.1} parent=0 // pred_check
    _
  $region19: #{tpu_custom_call.1} parent=0 // pred_check_branch
    %34 = sbr.rel (0) target = $region21
  $region20: #{tpu_custom_call.1} parent=0 // pred_region
    _
  $region21: #{tpu_custom_call.1} parent=0 // pred_fallthru
    _
  // Predicated region
  $region22: #{tpu_custom_call.1} parent=0 // pred_check
    _
  $region23: #{tpu_custom_call.1} parent=0 // pred_check_branch
    %36 = sbr.rel (0) target = $region25
  $region24: #{tpu_custom_call.1} parent=0 // pred_region
    _
  $region25: #{tpu_custom_call.1} parent=0 // pred_fallthru
    _
  // Predicated region
  $region26: #{tpu_custom_call.1} parent=0 // pred_check
    _
  $region27: #{tpu_custom_call.1} parent=0 // pred_check_branch
    %38 = sbr.rel (0) target = $region29
  $region28: #{tpu_custom_call.1} parent=0 // pred_region
    _
  $region29: #{tpu_custom_call.1} parent=0 // pred_fallthru
    _
  // Predicated region
  $region30: #{tpu_custom_call.1} parent=0 // pred_check
    _
  $region31: #{tpu_custom_call.1} parent=0 // pred_check_branch
    %40 = sbr.rel (0) target = $region33
  $region32: #{tpu_custom_call.1} parent=0 // pred_region
    _
  $region33: #{tpu_custom_call.1} parent=0 // pred_fallthru
    _
  // Predicated region
  $region34: #{tpu_custom_call.1} parent=0 // pred_check
    _
  $region35: #{tpu_custom_call.1} parent=0 // pred_check_branch
    %42 = sbr.rel (0) target = $region37
  $region36: #{tpu_custom_call.1} parent=0 // pred_region
    _
  $region37: #{tpu_custom_call.1} parent=0 // pred_fallthru
    _
  // Predicated region
  $region38: #{tpu_custom_call.1} parent=0 // pred_check
    _
  $region39: #{tpu_custom_call.1} parent=0 // pred_check_branch
    %44 = sbr.rel (0) target = $region41
  $region40: #{tpu_custom_call.1} parent=0 // pred_region
    _
  $region41: #{tpu_custom_call.1} parent=0 // pred_fallthru
    _
  // Predicated region
  $region42: #{tpu_custom_call.1} parent=0 // pred_check
    _
  $region43: #{tpu_custom_call.1} parent=0 // pred_check_branch
    %46 = sbr.rel (0) target = $region45
  $region44: #{tpu_custom_call.1} parent=0 // pred_region
    _
  $region45: #{tpu_custom_call.1} parent=0 // pred_fallthru
    _
  // Predicated region
  $region46: #{tpu_custom_call.1} parent=0 // pred_check
    _
  $region47: #{tpu_custom_call.1} parent=0 // pred_check_branch
    %48 = sbr.rel (0) target = $region49
  $region48: #{tpu_custom_call.1} parent=0 // pred_region
    _
  $region49: #{tpu_custom_call.1} parent=0 // pred_fallthru
    _
  // Predicated region
  $region50: #{tpu_custom_call.1} parent=0 // pred_check
    _
  $region51: #{tpu_custom_call.1} parent=0 // pred_check_branch
    %50 = sbr.rel (0) target = $region53
  $region52: #{tpu_custom_call.1} parent=0 // pred_region
    _
  $region53: #{tpu_custom_call.1} parent=0 // pred_fallthru
    _
  // Predicated region
  $region54: #{tpu_custom_call.1} parent=0 // pred_check
    _
  $region55: #{tpu_custom_call.1} parent=0 // pred_check_branch
    %52 = sbr.rel (0) target = $region57
  $region56: #{tpu_custom_call.1} parent=0 // pred_region
    _
  $region57: #{tpu_custom_call.1} parent=0 // pred_fallthru
    _
  // Predicated region
  $region58: #{tpu_custom_call.1} parent=0 // pred_check
    _
  $region59: #{tpu_custom_call.1} parent=0 // pred_check_branch
    %54 = sbr.rel (0) target = $region61
  $region60: #{tpu_custom_call.1} parent=0 // pred_region
    _
  $region61: #{tpu_custom_call.1} parent=0 // pred_fallthru
    _
  // Predicated region
  $region62: #{tpu_custom_call.1} parent=0 // pred_check
    _
  $region63: #{tpu_custom_call.1} parent=0 // pred_check_branch
    %56 = sbr.rel (0) target = $region65
  $region64: #{tpu_custom_call.1} parent=0 // pred_region
    _
  $region65: #{tpu_custom_call.1} parent=0 // pred_fallthru
    _
  // Predicated region
  $region66: #{tpu_custom_call.1} parent=0 // pred_check
    _
  $region67: #{tpu_custom_call.1} parent=0 // pred_check_branch
    %58 = sbr.rel (0) target = $region69
  $region68: #{tpu_custom_call.1} parent=0 // pred_region
    _
  $region69: #{tpu_custom_call.1} parent=0 // pred_fallthru
    _
  // Predicated region
  $region70: #{tpu_custom_call.1} parent=0 // pred_check
    _
  $region71: #{tpu_custom_call.1} parent=0 // pred_check_branch
    %60 = sbr.rel (0) target = $region73
  $region72: #{tpu_custom_call.1} parent=0 // pred_region
    _
  $region73: #{tpu_custom_call.1} parent=0 // pred_fallthru
    _
  // Predicated region
  $region74: #{tpu_custom_call.1} parent=0 // pred_check
    _
  $region75: #{tpu_custom_call.1} parent=0 // pred_check_branch
    %62 = sbr.rel (0) target = $region77
  $region76: #{tpu_custom_call.1} parent=0 // pred_region
    _
  $region77: #{tpu_custom_call.1} parent=0 // pred_fallthru
    _
  // Predicated region
  $region78: #{tpu_custom_call.1} parent=0 // pred_check
    _
  $region79: #{tpu_custom_call.1} parent=0 // pred_check_branch
    %64 = sbr.rel (0) target = $region81
  $region80: #{tpu_custom_call.1} parent=0 // pred_region
    _
  $region81: #{tpu_custom_call.1} parent=0 // pred_fallthru
    _
  %v65 = vlaneseq
  %v66 = vand.u32 %v65, 127
  %v67 = vld [vmem:[%s0] sm:$0xff]
  %v68 = vld [vmem:[%s0 + $0x8] sm:$0xff]
  %v69 = vld [vmem:[%s0 + $0x10] sm:$0xff]
  %v70 = vld [vmem:[%s0 + $0x18] sm:$0xff]
  %v71 = vld [vmem:[%s0 + $0x20] sm:$0xff]
  %v72 = vld [vmem:[%s0 + $0x28] sm:$0xff]
  %v73 = vld [vmem:[%s0 + $0x30] sm:$0xff]
  %v74 = vld [vmem:[%s0 + $0x38] sm:$0xff]
  %v75 = vld [vmem:[%s0 + $0x40] sm:$0xff]
  %v76 = vld [vmem:[%s0 + $0x48] sm:$0xff]
  %v77 = vld [vmem:[%s0 + $0x50] sm:$0xff]
  %v78 = vld [vmem:[%s0 + $0x58] sm:$0xff]
  %v79 = vld [vmem:[%s0 + $0x60] sm:$0xff]
  %v80 = vld [vmem:[%s0 + $0x68] sm:$0xff]
  %v81 = vld [vmem:[%s0 + $0x70] sm:$0xff]
  %v82 = vld [vmem:[%s0 + $0x78] sm:$0xff]
  %83 = vset.pattern.permute.xlu0 0
  %84 = vperm.xlu0 %83, %v67
  %v85 = vpop.permute.xlu0 %84
  %86 = vset.pattern.permute.xlu0 0
  %87 = vperm.xlu0 %86, %v68
  %v88 = vpop.permute.xlu0 %87
  %89 = vset.pattern.permute.xlu0 0
  %90 = vperm.xlu0 %89, %v69
  %v91 = vpop.permute.xlu0 %90
  %92 = vset.pattern.permute.xlu0 0
  %93 = vperm.xlu0 %92, %v70
  %v94 = vpop.permute.xlu0 %93
  %95 = vset.pattern.permute.xlu0 0
  %96 = vperm.xlu0 %95, %v71
  %v97 = vpop.permute.xlu0 %96
  %98 = vset.pattern.permute.xlu0 0
  %99 = vperm.xlu0 %98, %v72
  %v100 = vpop.permute.xlu0 %99
  %101 = vset.pattern.permute.xlu0 0
  %102 = vperm.xlu0 %101, %v73
  %v103 = vpop.permute.xlu0 %102
  %104 = vset.pattern.permute.xlu0 0
  %105 = vperm.xlu0 %104, %v74
  %v106 = vpop.permute.xlu0 %105
  %107 = vset.pattern.permute.xlu0 0
  %108 = vperm.xlu0 %107, %v75
  %v109 = vpop.permute.xlu0 %108
  %110 = vset.pattern.permute.xlu0 0
  %111 = vperm.xlu0 %110, %v76
  %v112 = vpop.permute.xlu0 %111
  %113 = vset.pattern.permute.xlu0 0
  %114 = vperm.xlu0 %113, %v77
  %v115 = vpop.permute.xlu0 %114
  %116 = vset.pattern.permute.xlu0 0
  %117 = vperm.xlu0 %116, %v78
  %v118 = vpop.permute.xlu0 %117
  %119 = vset.pattern.permute.xlu0 0
  %120 = vperm.xlu0 %119, %v79
  %v121 = vpop.permute.xlu0 %120
  %122 = vset.pattern.permute.xlu0 0
  %123 = vperm.xlu0 %122, %v80
  %v124 = vpop.permute.xlu0 %123
  %125 = vset.pattern.permute.xlu0 0
  %126 = vperm.xlu0 %125, %v81
  %v127 = vpop.permute.xlu0 %126
  %128 = vset.pattern.permute.xlu0 0
  %129 = vperm.xlu0 %128, %v82
  %v130 = vpop.permute.xlu0 %129
  %vm131 = vcmp.eq.s32.totalorder %v85, %v66
  %vm132 = vcmp.eq.s32.totalorder %v88, %v66
  %vm133 = vcmp.eq.s32.totalorder %v91, %v66
  %vm134 = vcmp.eq.s32.totalorder %v94, %v66
  %vm135 = vcmp.eq.s32.totalorder %v97, %v66
  %vm136 = vcmp.eq.s32.totalorder %v100, %v66
  %vm137 = vcmp.eq.s32.totalorder %v103, %v66
  %vm138 = vcmp.eq.s32.totalorder %v106, %v66
  %vm139 = vcmp.eq.s32.totalorder %v109, %v66
  %vm140 = vcmp.eq.s32.totalorder %v112, %v66
  %vm141 = vcmp.eq.s32.totalorder %v115, %v66
  %vm142 = vcmp.eq.s32.totalorder %v118, %v66
  %vm143 = vcmp.eq.s32.totalorder %v121, %v66
  %vm144 = vcmp.eq.s32.totalorder %v124, %v66
  %vm145 = vcmp.eq.s32.totalorder %v127, %v66
  %vm146 = vcmp.eq.s32.totalorder %v130, %v66
  %v147 = vsel %vm131, 1, 0
  %v148 = vsel %vm132, 1, 0
  %v149 = vsel %vm133, 1, 0
  %v150 = vsel %vm134, 1, 0
  %v151 = vsel %vm135, 1, 0
  %v152 = vsel %vm136, 1, 0
  %v153 = vsel %vm137, 1, 0
  %v154 = vsel %vm138, 1, 0
  %v155 = vsel %vm139, 1, 0
  %v156 = vsel %vm140, 1, 0
  %v157 = vsel %vm141, 1, 0
  %v158 = vsel %vm142, 1, 0
  %v159 = vsel %vm143, 1, 0
  %v160 = vsel %vm144, 1, 0
  %v161 = vsel %vm145, 1, 0
  %v162 = vsel %vm146, 1, 0
  %v163 = vcvt.s32.f32 %v147
  %v164 = vcvt.s32.f32 %v148
  %v165 = vcvt.s32.f32 %v149
  %v166 = vcvt.s32.f32 %v150
  %v167 = vcvt.s32.f32 %v151
  %v168 = vcvt.s32.f32 %v152
  %v169 = vcvt.s32.f32 %v153
  %v170 = vcvt.s32.f32 %v154
  %v171 = vcvt.s32.f32 %v155
  %v172 = vcvt.s32.f32 %v156
  %v173 = vcvt.s32.f32 %v157
  %v174 = vcvt.s32.f32 %v158
  %v175 = vcvt.s32.f32 %v159
  %v176 = vcvt.s32.f32 %v160
  %v177 = vcvt.s32.f32 %v161
  %v178 = vcvt.s32.f32 %v162
  %v179 = vlaneseq
  %v180 = vshrl.u32 %v179, 7
  %v181 = vadd.s32 %v180, 8
  %v182 = vadd.s32 %v180, 16
  %v183 = vadd.s32 %v180, 24
  %v184 = vadd.s32 %v180, 32
  %v185 = vadd.s32 %v180, 40
  %v186 = vadd.s32 %v180, 48
  %v187 = vadd.s32 %v180, 56
  %v188 = vld [vmem:[%s1] sm:$0x1]
  %v189 = vlaneseq
  %v190 = vshrl.u32 %v189, 7
  %v191 = vsub.s32 0, %v190
  %v192 = vrot.slane %v188, %v191
  %vm193 = vcmp.eq.s32.totalorder %v192, %v180
  %vm194 = vcmp.eq.s32.totalorder %v192, %v181
  %vm195 = vcmp.eq.s32.totalorder %v192, %v182
  %vm196 = vcmp.eq.s32.totalorder %v192, %v183
  %vm197 = vcmp.eq.s32.totalorder %v192, %v184
  %vm198 = vcmp.eq.s32.totalorder %v192, %v185
  %vm199 = vcmp.eq.s32.totalorder %v192, %v186
  %vm200 = vcmp.eq.s32.totalorder %v192, %v187
  %v201 = vsel %vm193, 1, 0
  %v202 = vsel %vm194, 1, 0
  %v203 = vsel %vm195, 1, 0
  %v204 = vsel %vm196, 1, 0
  %v205 = vsel %vm197, 1, 0
  %v206 = vsel %vm198, 1, 0
  %v207 = vsel %vm199, 1, 0
  %v208 = vsel %vm200, 1, 0
  %v209 = vcvt.s32.f32 %v201
  %v210 = vcvt.s32.f32 %v202
  %v211 = vcvt.s32.f32 %v203
  %v212 = vcvt.s32.f32 %v204
  %v213 = vcvt.s32.f32 %v205
  %v214 = vcvt.s32.f32 %v206
  %v215 = vcvt.s32.f32 %v207
  %v216 = vcvt.s32.f32 %v208
  %217 = vmatprep.subr.mxu0 0.0
  %218 = vmatpush1.msra.mxu0 %v163
  %219 = vmatprep.subr.mxu0 0.0
  %220 = vmatpush1.msra.mxu0 %v164
  %221 = vmatprep.subr.mxu0 0.0
  %222 = vmatpush1.msra.mxu0 %v165
  %223 = vmatprep.subr.mxu0 0.0
  %224 = vmatpush1.msra.mxu0 %v166
  %225 = vmatprep.subr.mxu0 0.0
  %226 = vmatpush1.msra.mxu0 %v167
  %227 = vmatprep.subr.mxu0 0.0
  %228 = vmatpush1.msra.mxu0 %v168
  %229 = vmatprep.subr.mxu0 0.0
  %230 = vmatpush1.msra.mxu0 %v169
  %231 = vmatprep.subr.mxu0 0.0
  %232 = vmatpush1.msra.mxu0 %v170
  %233 = vmatprep.subr.mxu0 0.0
  %234 = vmatpush1.msra.mxu0 %v171
  %235 = vmatprep.subr.mxu0 0.0
  %236 = vmatpush1.msra.mxu0 %v172
  %237 = vmatprep.subr.mxu0 0.0
  %238 = vmatpush1.msra.mxu0 %v173
  %239 = vmatprep.subr.mxu0 0.0
  %240 = vmatpush1.msra.mxu0 %v174
  %241 = vmatprep.subr.mxu0 0.0
  %242 = vmatpush1.msra.mxu0 %v175
  %243 = vmatprep.subr.mxu0 0.0
  %244 = vmatpush1.msra.mxu0 %v176
  %245 = vmatprep.subr.mxu0 0.0
  %246 = vmatpush1.msra.mxu0 %v177
  %247 = vmatprep.subr.mxu0 0.0
  %248 = vmatpush1.msra.mxu0 %v178
  %249 = vmatprep.subr.mxu0 0.0
  %250 = vmatpush1.msra.mxu0 0.0
  %251 = vmatprep.subr.mxu0 0.0
  %252 = vmatpush1.msra.mxu0 0.0
  %253 = vmatprep.subr.mxu0 0.0
  %254 = vmatpush1.msra.mxu0 0.0
  %255 = vmatprep.subr.mxu0 0.0
  %256 = vmatpush1.msra.mxu0 0.0
  %257 = vmatprep.subr.mxu0 0.0
  %258 = vmatpush1.msra.mxu0 0.0
  %259 = vmatprep.subr.mxu0 0.0
  %260 = vmatpush1.msra.mxu0 0.0
  %261 = vmatprep.subr.mxu0 0.0
  %262 = vmatpush1.msra.mxu0 0.0
  %263 = vmatprep.subr.mxu0 0.0
  %264 = vmatpush1.msra.mxu0 0.0
  %265 = vmatprep.subr.mxu0 0.0
  %266 = vmatpush1.msra.mxu0 0.0
  %267 = vmatprep.subr.mxu0 0.0
  %268 = vmatpush1.msra.mxu0 0.0
  %269 = vmatprep.subr.mxu0 0.0
  %270 = vmatpush1.msra.mxu0 0.0
  %271 = vmatprep.subr.mxu0 0.0
  %272 = vmatpush1.msra.mxu0 0.0
  %273 = vmatprep.subr.mxu0 0.0
  %274 = vmatpush1.msra.mxu0 0.0
  %275 = vmatprep.subr.mxu0 0.0
  %276 = vmatpush1.msra.mxu0 0.0
  %277 = vmatprep.subr.mxu0 0.0
  %278 = vmatpush1.msra.mxu0 0.0
  %279 = vmatprep.subr.mxu0 0.0
  %280 = vmatpush1.msra.mxu0 0.0
  %281 = vmatprep.mubr.f32.mxu0 0.0
  %282 = vmatmul.mubr.f32.gmra.mrb[0].mxu0 %v209
  %v283 = vpop.f32.mrb[0].mxu0
  %v284 = vadd.f32 0.0, %v283
  %v285 = vpop.f32.mrb[0].mxu0
  %286 = vmatprep.mubr.f32.mxu0 0.0
  %287 = vmatmul.mubr.f32.gmra.mrb[0].mxu0 %v210
  %v288 = vpop.f32.mrb[0].mxu0
  %v289 = vadd.f32 0.0, %v288
  %v290 = vpop.f32.mrb[0].mxu0
  %291 = vmatprep.mubr.f32.mxu0 0.0
  %292 = vmatmul.mubr.f32.gmra.mrb[0].mxu0 %v211
  %v293 = vpop.f32.mrb[0].mxu0
  %v294 = vadd.f32 0.0, %v293
  %v295 = vpop.f32.mrb[0].mxu0
  %296 = vmatprep.mubr.f32.mxu0 0.0
  %297 = vmatmul.mubr.f32.gmra.mrb[0].mxu0 %v212
  %v298 = vpop.f32.mrb[0].mxu0
  %v299 = vadd.f32 0.0, %v298
  %v300 = vpop.f32.mrb[0].mxu0
  %301 = vmatprep.mubr.f32.mxu0 0.0
  %302 = vmatmul.mubr.f32.gmra.mrb[0].mxu0 %v213
  %v303 = vpop.f32.mrb[0].mxu0
  %v304 = vadd.f32 0.0, %v303
  %v305 = vpop.f32.mrb[0].mxu0
  %306 = vmatprep.mubr.f32.mxu0 0.0
  %307 = vmatmul.mubr.f32.gmra.mrb[0].mxu0 %v214
  %v308 = vpop.f32.mrb[0].mxu0
  %v309 = vadd.f32 0.0, %v308
  %v310 = vpop.f32.mrb[0].mxu0
  %311 = vmatprep.mubr.f32.mxu0 0.0
  %312 = vmatmul.mubr.f32.gmra.mrb[0].mxu0 %v215
  %v313 = vpop.f32.mrb[0].mxu0
  %v314 = vadd.f32 0.0, %v313
  %v315 = vpop.f32.mrb[0].mxu0
  %316 = vmatprep.mubr.f32.mxu0 0.0
  %317 = vmatmul.mubr.f32.gmra.mrb[0].mxu0 %v216
  %v318 = vpop.f32.mrb[0].mxu0
  %v319 = vadd.f32 0.0, %v318
  %v320 = vpop.f32.mrb[0].mxu0
  %321 = vdwg.mxu0
  %vm322 = vcmp.eq.s32.totalorder %v180, %v66
  %vm323 = vcmp.eq.s32.totalorder %v181, %v66
  %vm324 = vcmp.eq.s32.totalorder %v182, %v66
  %vm325 = vcmp.eq.s32.totalorder %v183, %v66
  %vm326 = vcmp.eq.s32.totalorder %v184, %v66
  %vm327 = vcmp.eq.s32.totalorder %v185, %v66
  %vm328 = vcmp.eq.s32.totalorder %v186, %v66
  %vm329 = vcmp.eq.s32.totalorder %v187, %v66
  %v330 = vsel %vm322, 1.0, %v284
  %v331 = vsel %vm323, 1.0, %v289
  %v332 = vsel %vm324, 1.0, %v294
  %v333 = vsel %vm325, 1.0, %v299
  %v334 = vsel %vm326, 1.0, %v304
  %v335 = vsel %vm327, 1.0, %v309
  %v336 = vsel %vm328, 1.0, %v314
  %v337 = vsel %vm329, 1.0, %v319
  %vm338 = vcmp.gt.f32.partialorder %v330, 0.0
  %vm339 = vcmp.gt.f32.partialorder %v331, 0.0
  %vm340 = vcmp.gt.f32.partialorder %v332, 0.0
  %vm341 = vcmp.gt.f32.partialorder %v333, 0.0
  %vm342 = vcmp.gt.f32.partialorder %v334, 0.0
  %vm343 = vcmp.gt.f32.partialorder %v335, 0.0
  %vm344 = vcmp.gt.f32.partialorder %v336, 0.0
  %vm345 = vcmp.gt.f32.partialorder %v337, 0.0
  %v346 = vsel %vm338, 0.0, -1e+30
  %v347 = vsel %vm339, 0.0, -1e+30
  %v348 = vsel %vm340, 0.0, -1e+30
  %v349 = vsel %vm341, 0.0, -1e+30
  %v350 = vsel %vm342, 0.0, -1e+30
  %v351 = vsel %vm343, 0.0, -1e+30
  %v352 = vsel %vm344, 0.0, -1e+30
  %v353 = vsel %vm345, 0.0, -1e+30
  %v354 = vld [vmem:[%s2] sm:$0xff]
  %v355 = vld [vmem:[%s2 + $0x8] sm:$0xff]
  %v356 = vld [vmem:[%s2 + $0x10] sm:$0xff]
  %v357 = vld [vmem:[%s2 + $0x18] sm:$0xff]
  %v358 = vld [vmem:[%s2 + $0x20] sm:$0xff]
  %v359 = vld [vmem:[%s2 + $0x28] sm:$0xff]
  %v360 = vld [vmem:[%s2 + $0x30] sm:$0xff]
  %v361 = vld [vmem:[%s2 + $0x38] sm:$0xff]
  %v362 = vld [vmem:[%s3] sm:$0x1]
  %364 = vset.pattern.permute.xlu0 0
  %365 = vperm.xlu0 %364, %v354
  %v366 = vpop.permute.xlu0 %365
  %369 = vset.pattern.permute.xlu0 0
  %370 = vperm.xlu0 %369, %v355
  %v371 = vpop.permute.xlu0 %370
  %374 = vset.pattern.permute.xlu0 0
  %375 = vperm.xlu0 %374, %v356
  %v376 = vpop.permute.xlu0 %375
  %379 = vset.pattern.permute.xlu0 0
  %380 = vperm.xlu0 %379, %v357
  %v381 = vpop.permute.xlu0 %380
  %384 = vset.pattern.permute.xlu0 0
  %385 = vperm.xlu0 %384, %v358
  %v386 = vpop.permute.xlu0 %385
  %389 = vset.pattern.permute.xlu0 0
  %390 = vperm.xlu0 %389, %v359
  %v391 = vpop.permute.xlu0 %390
  %394 = vset.pattern.permute.xlu0 0
  %395 = vperm.xlu0 %394, %v360
  %v396 = vpop.permute.xlu0 %395
  %399 = vset.pattern.permute.xlu0 0
  %400 = vperm.xlu0 %399, %v361
  %v401 = vpop.permute.xlu0 %400
  %v404 = vlaneseq
  %v405 = vshrl.u32 %v404, 7
  %v406 = vsub.s32 0, %v405
  %v407 = vrot.slane %v362, %v406
  %v409 = vmul.f32 %v366, %v407
  %v410 = vmul.f32 %v371, %v407
  %v411 = vmul.f32 %v376, %v407
  %v412 = vmul.f32 %v381, %v407
  %v413 = vmul.f32 %v386, %v407
  %v414 = vmul.f32 %v391, %v407
  %v415 = vmul.f32 %v396, %v407
  %v416 = vmul.f32 %v401, %v407
  %v417 = vld [vmem:[%s4] sm:$0x1]
  %v419 = vlaneseq
  %v420 = vshrl.u32 %v419, 7
  %v421 = vsub.s32 0, %v420
  %v422 = vrot.slane %v417, %v421
  %v424 = vadd.f32 %v409, %v422
  %v425 = vadd.f32 %v410, %v422
  %v426 = vadd.f32 %v411, %v422
  %v427 = vadd.f32 %v412, %v422
  %v428 = vadd.f32 %v413, %v422
  %v429 = vadd.f32 %v414, %v422
  %v430 = vadd.f32 %v415, %v422
  %v431 = vadd.f32 %v416, %v422
  %vm432 = vcmp.gt.f32.partialorder %v424, 0.0
  %vm433 = vcmp.gt.f32.partialorder %v425, 0.0
  %vm434 = vcmp.gt.f32.partialorder %v426, 0.0
  %vm435 = vcmp.gt.f32.partialorder %v427, 0.0
  %vm436 = vcmp.gt.f32.partialorder %v428, 0.0
  %vm437 = vcmp.gt.f32.partialorder %v429, 0.0
  %vm438 = vcmp.gt.f32.partialorder %v430, 0.0
  %vm439 = vcmp.gt.f32.partialorder %v431, 0.0
  %v440 = vmul.f32 %v424, 1.442695
  %v441 = vpow.pop %v440
  %v442 = vmul.f32 %v425, 1.442695
  %v443 = vpow.pop %v442
  %v444 = vmul.f32 %v426, 1.442695
  %v445 = vpow.pop %v444
  %v446 = vmul.f32 %v427, 1.442695
  %v447 = vpow.pop %v446
  %v448 = vmul.f32 %v428, 1.442695
  %v449 = vpow.pop %v448
  %v450 = vmul.f32 %v429, 1.442695
  %v451 = vpow.pop %v450
  %v452 = vmul.f32 %v430, 1.442695
  %v453 = vpow.pop %v452
  %v454 = vmul.f32 %v431, 1.442695
  %v455 = vpow.pop %v454
  %v456 = vsub.f32 %v441, 1.0
  %v457 = vsub.f32 %v443, 1.0
  %v458 = vsub.f32 %v445, 1.0
  %v459 = vsub.f32 %v447, 1.0
  %v460 = vsub.f32 %v449, 1.0
  %v461 = vsub.f32 %v451, 1.0
  %v462 = vsub.f32 %v453, 1.0
  %v463 = vsub.f32 %v455, 1.0
  %v464 = vsel %vm432, %v424, %v456
  %v465 = vsel %vm433, %v425, %v457
  %v466 = vsel %vm434, %v426, %v458
  %v467 = vsel %vm435, %v427, %v459
  %v468 = vsel %vm436, %v428, %v460
  %v469 = vsel %vm437, %v429, %v461
  %v470 = vsel %vm438, %v430, %v462
  %v471 = vsel %vm439, %v431, %v463
  %v472 = vld [vmem:[%s5] sm:$0xff]
  %v473 = vld [vmem:[%s5 + $0x8] sm:$0xff]
  %vm474 = vcmask 130048
  %v476 = vsel %vm474, %v464, 0
  %v479 = vsel %vm474, %v465, 0
  %v482 = vsel %vm474, %v466, 0
  %v485 = vsel %vm474, %v467, 0
  %v488 = vsel %vm474, %v468, 0
  %v491 = vsel %vm474, %v469, 0
  %v494 = vsel %vm474, %v470, 0
  %v497 = vsel %vm474, %v471, 0
  %499 = vmatprep.subr.mxu0 0.0
  %500 = vmatpush1.msra.mxu0 %v472
  %501 = vmatprep.subr.mxu0 0.0
  %502 = vmatpush1.msra.mxu0 %v473
  %503 = vmatprep.subr.mxu0 0.0
  %504 = vmatpush1.msra.mxu0 0.0
  %505 = vmatprep.subr.mxu0 0.0
  %506 = vmatpush1.msra.mxu0 0.0
  %507 = vmatprep.subr.mxu0 0.0
  %508 = vmatpush1.msra.mxu0 0.0
  %509 = vmatprep.subr.mxu0 0.0
  %510 = vmatpush1.msra.mxu0 0.0
  %511 = vmatprep.subr.mxu0 0.0
  %512 = vmatpush1.msra.mxu0 0.0
  %513 = vmatprep.subr.mxu0 0.0
  %514 = vmatpush1.msra.mxu0 0.0
  %515 = vmatprep.subr.mxu0 0.0
  %516 = vmatpush1.msra.mxu0 0.0
  %517 = vmatprep.subr.mxu0 0.0
  %518 = vmatpush1.msra.mxu0 0.0
  %519 = vmatprep.subr.mxu0 0.0
  %520 = vmatpush1.msra.mxu0 0.0
  %521 = vmatprep.subr.mxu0 0.0
  %522 = vmatpush1.msra.mxu0 0.0
  %523 = vmatprep.subr.mxu0 0.0
  %524 = vmatpush1.msra.mxu0 0.0
  %525 = vmatprep.subr.mxu0 0.0
  %526 = vmatpush1.msra.mxu0 0.0
  %527 = vmatprep.subr.mxu0 0.0
  %528 = vmatpush1.msra.mxu0 0.0
  %529 = vmatprep.subr.mxu0 0.0
  %530 = vmatpush1.msra.mxu0 0.0
  %531 = vmatprep.subr.mxu0 0.0
  %532 = vmatpush1.msra.mxu0 0.0
  %533 = vmatprep.subr.mxu0 0.0
  %534 = vmatpush1.msra.mxu0 0.0
  %535 = vmatprep.subr.mxu0 0.0
  %536 = vmatpush1.msra.mxu0 0.0
  %537 = vmatprep.subr.mxu0 0.0
  %538 = vmatpush1.msra.mxu0 0.0
  %539 = vmatprep.subr.mxu0 0.0
  %540 = vmatpush1.msra.mxu0 0.0
  %541 = vmatprep.subr.mxu0 0.0
  %542 = vmatpush1.msra.mxu0 0.0
  %543 = vmatprep.subr.mxu0 0.0
  %544 = vmatpush1.msra.mxu0 0.0
  %545 = vmatprep.subr.mxu0 0.0
  %546 = vmatpush1.msra.mxu0 0.0
  %547 = vmatprep.subr.mxu0 0.0
  %548 = vmatpush1.msra.mxu0 0.0
  %549 = vmatprep.subr.mxu0 0.0
  %550 = vmatpush1.msra.mxu0 0.0
  %551 = vmatprep.subr.mxu0 0.0
  %552 = vmatpush1.msra.mxu0 0.0
  %553 = vmatprep.subr.mxu0 0.0
  %554 = vmatpush1.msra.mxu0 0.0
  %555 = vmatprep.subr.mxu0 0.0
  %556 = vmatpush1.msra.mxu0 0.0
  %557 = vmatprep.subr.mxu0 0.0
  %558 = vmatpush1.msra.mxu0 0.0
  %559 = vmatprep.subr.mxu0 0.0
  %560 = vmatpush1.msra.mxu0 0.0
  %561 = vmatprep.subr.mxu0 0.0
  %562 = vmatpush1.msra.mxu0 0.0
  %563 = vmatprep.mubr.f32.mxu0 0.0
  %564 = vmatmul.mubr.f32.gmra.mrb[0].mxu0 %v476
  %v565 = vpop.f32.mrb[0].mxu0
  %v566 = vadd.f32 0.0, %v565
  %v567 = vpop.f32.mrb[0].mxu0
  %568 = vmatprep.mubr.f32.mxu0 0.0
  %569 = vmatmul.mubr.f32.gmra.mrb[0].mxu0 %v479
  %v570 = vpop.f32.mrb[0].mxu0
  %v571 = vadd.f32 0.0, %v570
  %v572 = vpop.f32.mrb[0].mxu0
  %573 = vmatprep.mubr.f32.mxu0 0.0
  %574 = vmatmul.mubr.f32.gmra.mrb[0].mxu0 %v482
  %v575 = vpop.f32.mrb[0].mxu0
  %v576 = vadd.f32 0.0, %v575
  %v577 = vpop.f32.mrb[0].mxu0
  %578 = vmatprep.mubr.f32.mxu0 0.0
  %579 = vmatmul.mubr.f32.gmra.mrb[0].mxu0 %v485
  %v580 = vpop.f32.mrb[0].mxu0
  %v581 = vadd.f32 0.0, %v580
  %v582 = vpop.f32.mrb[0].mxu0
  %583 = vmatprep.mubr.f32.mxu0 0.0
  %584 = vmatmul.mubr.f32.gmra.mrb[0].mxu0 %v488
  %v585 = vpop.f32.mrb[0].mxu0
  %v586 = vadd.f32 0.0, %v585
  %v587 = vpop.f32.mrb[0].mxu0
  %588 = vmatprep.mubr.f32.mxu0 0.0
  %589 = vmatmul.mubr.f32.gmra.mrb[0].mxu0 %v491
  %v590 = vpop.f32.mrb[0].mxu0
  %v591 = vadd.f32 0.0, %v590
  %v592 = vpop.f32.mrb[0].mxu0
  %593 = vmatprep.mubr.f32.mxu0 0.0
  %594 = vmatmul.mubr.f32.gmra.mrb[0].mxu0 %v494
  %v595 = vpop.f32.mrb[0].mxu0
  %v596 = vadd.f32 0.0, %v595
  %v597 = vpop.f32.mrb[0].mxu0
  %598 = vmatprep.mubr.f32.mxu0 0.0
  %599 = vmatmul.mubr.f32.gmra.mrb[0].mxu0 %v497
  %v600 = vpop.f32.mrb[0].mxu0
  %v601 = vadd.f32 0.0, %v600
  %v602 = vpop.f32.mrb[0].mxu0
  %603 = vdwg.mxu0
  %v604 = vld [vmem:[%s6] sm:$0xff]
  %v605 = vld [vmem:[%s6 + $0x8] sm:$0xff]
  %v606 = vld [vmem:[%s6 + $0x10] sm:$0xff]
  %v607 = vld [vmem:[%s6 + $0x18] sm:$0xff]
  %vm608 = vcmask 261120
  %v610 = vsel %vm608, %v566, 0
  %v613 = vsel %vm608, %v571, 0
  %v616 = vsel %vm608, %v576, 0
  %v619 = vsel %vm608, %v581, 0
  %v622 = vsel %vm608, %v586, 0
  %v625 = vsel %vm608, %v591, 0
  %v628 = vsel %vm608, %v596, 0
  %v631 = vsel %vm608, %v601, 0
  %633 = vmatprep.subr.mxu0 0.0
  %634 = vmatpush1.msra.mxu0 %v604
  %635 = vmatprep.subr.mxu0 0.0
  %636 = vmatpush1.msra.mxu0 %v605
  %637 = vmatprep.subr.mxu0 0.0
  %638 = vmatpush1.msra.mxu0 %v606
  %639 = vmatprep.subr.mxu0 0.0
  %640 = vmatpush1.msra.mxu0 %v607
  %641 = vmatprep.subr.mxu0 0.0
  %642 = vmatpush1.msra.mxu0 0.0
  %643 = vmatprep.subr.mxu0 0.0
  %644 = vmatpush1.msra.mxu0 0.0
  %645 = vmatprep.subr.mxu0 0.0
  %646 = vmatpush1.msra.mxu0 0.0
  %647 = vmatprep.subr.mxu0 0.0
  %648 = vmatpush1.msra.mxu0 0.0
  %649 = vmatprep.subr.mxu0 0.0
  %650 = vmatpush1.msra.mxu0 0.0
  %651 = vmatprep.subr.mxu0 0.0
  %652 = vmatpush1.msra.mxu0 0.0
  %653 = vmatprep.subr.mxu0 0.0
  %654 = vmatpush1.msra.mxu0 0.0
  %655 = vmatprep.subr.mxu0 0.0
  %656 = vmatpush1.msra.mxu0 0.0
  %657 = vmatprep.subr.mxu0 0.0
  %658 = vmatpush1.msra.mxu0 0.0
  %659 = vmatprep.subr.mxu0 0.0
  %660 = vmatpush1.msra.mxu0 0.0
  %661 = vmatprep.subr.mxu0 0.0
  %662 = vmatpush1.msra.mxu0 0.0
  %663 = vmatprep.subr.mxu0 0.0
  %664 = vmatpush1.msra.mxu0 0.0
  %665 = vmatprep.subr.mxu0 0.0
  %666 = vmatpush1.msra.mxu0 0.0
  %667 = vmatprep.subr.mxu0 0.0
  %668 = vmatpush1.msra.mxu0 0.0
  %669 = vmatprep.subr.mxu0 0.0
  %670 = vmatpush1.msra.mxu0 0.0
  %671 = vmatprep.subr.mxu0 0.0
  %672 = vmatpush1.msra.mxu0 0.0
  %673 = vmatprep.subr.mxu0 0.0
  %674 = vmatpush1.msra.mxu0 0.0
  %675 = vmatprep.subr.mxu0 0.0
  %676 = vmatpush1.msra.mxu0 0.0
  %677 = vmatprep.subr.mxu0 0.0
  %678 = vmatpush1.msra.mxu0 0.0
  %679 = vmatprep.subr.mxu0 0.0
  %680 = vmatpush1.msra.mxu0 0.0
  %681 = vmatprep.subr.mxu0 0.0
  %682 = vmatpush1.msra.mxu0 0.0
  %683 = vmatprep.subr.mxu0 0.0
  %684 = vmatpush1.msra.mxu0 0.0
  %685 = vmatprep.subr.mxu0 0.0
  %686 = vmatpush1.msra.mxu0 0.0
  %687 = vmatprep.subr.mxu0 0.0
  %688 = vmatpush1.msra.mxu0 0.0
  %689 = vmatprep.subr.mxu0 0.0
  %690 = vmatpush1.msra.mxu0 0.0
  %691 = vmatprep.subr.mxu0 0.0
  %692 = vmatpush1.msra.mxu0 0.0
  %693 = vmatprep.subr.mxu0 0.0
  %694 = vmatpush1.msra.mxu0 0.0
  %695 = vmatprep.subr.mxu0 0.0
  %696 = vmatpush1.msra.mxu0 0.0
  %697 = vmatprep.mubr.f32.mxu0 0.0
  %698 = vmatmul.mubr.f32.gmra.mrb[0].mxu0 %v610
  %v699 = vpop.f32.mrb[0].mxu0
  %v700 = vadd.f32 0.0, %v699
  %v701 = vpop.f32.mrb[0].mxu0
  %702 = vmatprep.mubr.f32.mxu0 0.0
  %703 = vmatmul.mubr.f32.gmra.mrb[0].mxu0 %v613
  %v704 = vpop.f32.mrb[0].mxu0
  %v705 = vadd.f32 0.0, %v704
  %v706 = vpop.f32.mrb[0].mxu0
  %707 = vmatprep.mubr.f32.mxu0 0.0
  %708 = vmatmul.mubr.f32.gmra.mrb[0].mxu0 %v616
  %v709 = vpop.f32.mrb[0].mxu0
  %v710 = vadd.f32 0.0, %v709
  %v711 = vpop.f32.mrb[0].mxu0
  %712 = vmatprep.mubr.f32.mxu0 0.0
  %713 = vmatmul.mubr.f32.gmra.mrb[0].mxu0 %v619
  %v714 = vpop.f32.mrb[0].mxu0
  %v715 = vadd.f32 0.0, %v714
  %v716 = vpop.f32.mrb[0].mxu0
  %717 = vmatprep.mubr.f32.mxu0 0.0
  %718 = vmatmul.mubr.f32.gmra.mrb[0].mxu0 %v622
  %v719 = vpop.f32.mrb[0].mxu0
  %v720 = vadd.f32 0.0, %v719
  %v721 = vpop.f32.mrb[0].mxu0
  %722 = vmatprep.mubr.f32.mxu0 0.0
  %723 = vmatmul.mubr.f32.gmra.mrb[0].mxu0 %v625
  %v724 = vpop.f32.mrb[0].mxu0
  %v725 = vadd.f32 0.0, %v724
  %v726 = vpop.f32.mrb[0].mxu0
  %727 = vmatprep.mubr.f32.mxu0 0.0
  %728 = vmatmul.mubr.f32.gmra.mrb[0].mxu0 %v628
  %v729 = vpop.f32.mrb[0].mxu0
  %v730 = vadd.f32 0.0, %v729
  %v731 = vpop.f32.mrb[0].mxu0
  %732 = vmatprep.mubr.f32.mxu0 0.0
  %733 = vmatmul.mubr.f32.gmra.mrb[0].mxu0 %v631
  %v734 = vpop.f32.mrb[0].mxu0
  %v735 = vadd.f32 0.0, %v734
  %v736 = vpop.f32.mrb[0].mxu0
  %737 = vdwg.mxu0
  %v738 = vld [vmem:[%s7] sm:$0xf]
  %v740 = vsel %vm608, %v738, 0
  %742 = vmatprep.subr.mxu0 0.0
  %743 = vmatpush1.xpose.msra.mxu0 %v610
  %744 = vmatprep.subr.mxu0 0.0
  %745 = vmatpush1.xpose.msra.mxu0 %v613
  %746 = vmatprep.subr.mxu0 0.0
  %747 = vmatpush1.xpose.msra.mxu0 %v616
  %748 = vmatprep.subr.mxu0 0.0
  %749 = vmatpush1.xpose.msra.mxu0 %v619
  %750 = vmatprep.subr.mxu0 0.0
  %751 = vmatpush1.xpose.msra.mxu0 %v622
  %752 = vmatprep.subr.mxu0 0.0
  %753 = vmatpush1.xpose.msra.mxu0 %v625
  %754 = vmatprep.subr.mxu0 0.0
  %755 = vmatpush1.xpose.msra.mxu0 %v628
  %756 = vmatprep.subr.mxu0 0.0
  %757 = vmatpush1.xpose.msra.mxu0 %v631
  %758 = vmatprep.subr.mxu0 0.0
  %759 = vmatpush1.xpose.msra.mxu0 0.0
  %760 = vmatprep.subr.mxu0 0.0
  %761 = vmatpush1.xpose.msra.mxu0 0.0
  %762 = vmatprep.subr.mxu0 0.0
  %763 = vmatpush1.xpose.msra.mxu0 0.0
  %764 = vmatprep.subr.mxu0 0.0
  %765 = vmatpush1.xpose.msra.mxu0 0.0
  %766 = vmatprep.subr.mxu0 0.0
  %767 = vmatpush1.xpose.msra.mxu0 0.0
  %768 = vmatprep.subr.mxu0 0.0
  %769 = vmatpush1.xpose.msra.mxu0 0.0
  %770 = vmatprep.subr.mxu0 0.0
  %771 = vmatpush1.xpose.msra.mxu0 0.0
  %772 = vmatprep.subr.mxu0 0.0
  %773 = vmatpush1.xpose.msra.mxu0 0.0
  %774 = vmatprep.subr.mxu0 0.0
  %775 = vmatpush1.xpose.msra.mxu0 0.0
  %776 = vmatprep.subr.mxu0 0.0
  %777 = vmatpush1.xpose.msra.mxu0 0.0
  %778 = vmatprep.subr.mxu0 0.0
  %779 = vmatpush1.xpose.msra.mxu0 0.0
  %780 = vmatprep.subr.mxu0 0.0
  %781 = vmatpush1.xpose.msra.mxu0 0.0
  %782 = vmatprep.subr.mxu0 0.0
  %783 = vmatpush1.xpose.msra.mxu0 0.0
  %784 = vmatprep.subr.mxu0 0.0
  %785 = vmatpush1.xpose.msra.mxu0 0.0
  %786 = vmatprep.subr.mxu0 0.0
  %787 = vmatpush1.xpose.msra.mxu0 0.0
  %788 = vmatprep.subr.mxu0 0.0
  %789 = vmatpush1.xpose.msra.mxu0 0.0
  %790 = vmatprep.subr.mxu0 0.0
  %791 = vmatpush1.xpose.msra.mxu0 0.0
  %792 = vmatprep.subr.mxu0 0.0
  %793 = vmatpush1.xpose.msra.mxu0 0.0
  %794 = vmatprep.subr.mxu0 0.0
  %795 = vmatpush1.xpose.msra.mxu0 0.0
  %796 = vmatprep.subr.mxu0 0.0
  %797 = vmatpush1.xpose.msra.mxu0 0.0
  %798 = vmatprep.subr.mxu0 0.0
  %799 = vmatpush1.xpose.msra.mxu0 0.0
  %800 = vmatprep.subr.mxu0 0.0
  %801 = vmatpush1.xpose.msra.mxu0 0.0
  %802 = vmatprep.subr.mxu0 0.0
  %803 = vmatpush1.xpose.msra.mxu0 0.0
  %804 = vmatprep.subr.mxu0 0.0
  %805 = vmatpush1.xpose.msra.mxu0 0.0
  %806 = vmatprep.mubr.f32.mxu0 0.0
  %807 = vmatmul.mubr.f32.gmra.mrb[0].mxu0 %v740
  %v808 = vpop.f32.mrb[0].mxu0
  %v809 = vadd.f32 0.0, %v808
  %v810 = vpop.f32.mrb[0].mxu0
  %811 = vdwg.mxu0
  %813 = vset.pattern.permute.xlu0 0
  %814 = vperm.xlu0 %813, %v700
  %v815 = vpop.permute.xlu0 %814
  %818 = vset.pattern.permute.xlu0 0
  %819 = vperm.xlu0 %818, %v705
  %v820 = vpop.permute.xlu0 %819
  %823 = vset.pattern.permute.xlu0 0
  %824 = vperm.xlu0 %823, %v710
  %v825 = vpop.permute.xlu0 %824
  %828 = vset.pattern.permute.xlu0 0
  %829 = vperm.xlu0 %828, %v715
  %v830 = vpop.permute.xlu0 %829
  %833 = vset.pattern.permute.xlu0 0
  %834 = vperm.xlu0 %833, %v720
  %v835 = vpop.permute.xlu0 %834
  %838 = vset.pattern.permute.xlu0 0
  %839 = vperm.xlu0 %838, %v725
  %v840 = vpop.permute.xlu0 %839
  %843 = vset.pattern.permute.xlu0 0
  %844 = vperm.xlu0 %843, %v730
  %v845 = vpop.permute.xlu0 %844
  %848 = vset.pattern.permute.xlu0 0
  %849 = vperm.xlu0 %848, %v735
  %v850 = vpop.permute.xlu0 %849
  %v852 = vlaneseq
  %v853 = vshrl.u32 %v852, 7
  %v854 = vsub.s32 0, %v853
  %v855 = vrot.slane %v809, %v854
  %v856 = vadd.f32 %v815, %v855
  %v857 = vadd.f32 %v820, %v855
  %v858 = vadd.f32 %v825, %v855
  %v859 = vadd.f32 %v830, %v855
  %v860 = vadd.f32 %v835, %v855
  %v861 = vadd.f32 %v840, %v855
  %v862 = vadd.f32 %v845, %v855
  %v863 = vadd.f32 %v850, %v855
  %vm864 = vcmp.gt.f32.partialorder %v856, 0.0
  %vm865 = vcmp.gt.f32.partialorder %v857, 0.0
  %vm866 = vcmp.gt.f32.partialorder %v858, 0.0
  %vm867 = vcmp.gt.f32.partialorder %v859, 0.0
  %vm868 = vcmp.gt.f32.partialorder %v860, 0.0
  %vm869 = vcmp.gt.f32.partialorder %v861, 0.0
  %vm870 = vcmp.gt.f32.partialorder %v862, 0.0
  %vm871 = vcmp.gt.f32.partialorder %v863, 0.0
  %v872 = vmul.f32 %v856, 0.2
  %v873 = vmul.f32 %v857, 0.2
  %v874 = vmul.f32 %v858, 0.2
  %v875 = vmul.f32 %v859, 0.2
  %v876 = vmul.f32 %v860, 0.2
  %v877 = vmul.f32 %v861, 0.2
  %v878 = vmul.f32 %v862, 0.2
  %v879 = vmul.f32 %v863, 0.2
  %v880 = vsel %vm864, %v856, %v872
  %v881 = vsel %vm865, %v857, %v873
  %v882 = vsel %vm866, %v858, %v874
  %v883 = vsel %vm867, %v859, %v875
  %v884 = vsel %vm868, %v860, %v876
  %v885 = vsel %vm869, %v861, %v877
  %v886 = vsel %vm870, %v862, %v878
  %v887 = vsel %vm871, %v863, %v879
  %v888 = vadd.f32 %v880, %v346
  %v889 = vadd.f32 %v881, %v347
  %v890 = vadd.f32 %v882, %v348
  %v891 = vadd.f32 %v883, %v349
  %v892 = vadd.f32 %v884, %v350
  %v893 = vadd.f32 %v885, %v351
  %v894 = vadd.f32 %v886, %v352
  %v895 = vadd.f32 %v887, %v353
  %vm896 = vcmask 523264
  %v897 = vsel %vm896, %v888, -inf
  %898 = vmax.xlane.f32.xlu0 %v897
  %v899 = vpop.xlane.xlu0 %898
  %v900 = vsel %vm896, %v889, -inf
  %901 = vmax.xlane.f32.xlu0 %v900
  %v902 = vpop.xlane.xlu0 %901
  %v903 = vsel %vm896, %v890, -inf
  %904 = vmax.xlane.f32.xlu0 %v903
  %v905 = vpop.xlane.xlu0 %904
  %v906 = vsel %vm896, %v891, -inf
  %907 = vmax.xlane.f32.xlu0 %v906
  %v908 = vpop.xlane.xlu0 %907
  %v909 = vsel %vm896, %v892, -inf
  %910 = vmax.xlane.f32.xlu0 %v909
  %v911 = vpop.xlane.xlu0 %910
  %v912 = vsel %vm896, %v893, -inf
  %913 = vmax.xlane.f32.xlu0 %v912
  %v914 = vpop.xlane.xlu0 %913
  %v915 = vsel %vm896, %v894, -inf
  %916 = vmax.xlane.f32.xlu0 %v915
  %v917 = vpop.xlane.xlu0 %916
  %v918 = vsel %vm896, %v895, -inf
  %919 = vmax.xlane.f32.xlu0 %v918
  %v920 = vpop.xlane.xlu0 %919
  %v921 = vsub.f32 %v888, %v899
  %v922 = vsub.f32 %v889, %v902
  %v923 = vsub.f32 %v890, %v905
  %v924 = vsub.f32 %v891, %v908
  %v925 = vsub.f32 %v892, %v911
  %v926 = vsub.f32 %v893, %v914
  %v927 = vsub.f32 %v894, %v917
  %v928 = vsub.f32 %v895, %v920
  %v929 = vmul.f32 %v921, 1.442695
  %v930 = vpow.pop %v929
  %v931 = vmul.f32 %v922, 1.442695
  %v932 = vpow.pop %v931
  %v933 = vmul.f32 %v923, 1.442695
  %v934 = vpow.pop %v933
  %v935 = vmul.f32 %v924, 1.442695
  %v936 = vpow.pop %v935
  %v937 = vmul.f32 %v925, 1.442695
  %v938 = vpow.pop %v937
  %v939 = vmul.f32 %v926, 1.442695
  %v940 = vpow.pop %v939
  %v941 = vmul.f32 %v927, 1.442695
  %v942 = vpow.pop %v941
  %v943 = vmul.f32 %v928, 1.442695
  %v944 = vpow.pop %v943
  %v945 = vmul.f32 %v930, %v330
  %v946 = vmul.f32 %v932, %v331
  %v947 = vmul.f32 %v934, %v332
  %v948 = vmul.f32 %v936, %v333
  %v949 = vmul.f32 %v938, %v334
  %v950 = vmul.f32 %v940, %v335
  %v951 = vmul.f32 %v942, %v336
  %v952 = vmul.f32 %v944, %v337
  %v953 = vsel %vm896, %v945, 0.0
  %954 = vadd.xlane.f32.xlu0 %v953
  %v955 = vpop.xlane.xlu0 %954
  %v956 = vsel %vm896, %v946, 0.0
  %957 = vadd.xlane.f32.xlu0 %v956
  %v958 = vpop.xlane.xlu0 %957
  %v959 = vsel %vm896, %v947, 0.0
  %960 = vadd.xlane.f32.xlu0 %v959
  %v961 = vpop.xlane.xlu0 %960
  %v962 = vsel %vm896, %v948, 0.0
  %963 = vadd.xlane.f32.xlu0 %v962
  %v964 = vpop.xlane.xlu0 %963
  %v965 = vsel %vm896, %v949, 0.0
  %966 = vadd.xlane.f32.xlu0 %v965
  %v967 = vpop.xlane.xlu0 %966
  %v968 = vsel %vm896, %v950, 0.0
  %969 = vadd.xlane.f32.xlu0 %v968
  %v970 = vpop.xlane.xlu0 %969
  %v971 = vsel %vm896, %v951, 0.0
  %972 = vadd.xlane.f32.xlu0 %v971
  %v973 = vpop.xlane.xlu0 %972
  %v974 = vsel %vm896, %v952, 0.0
  %975 = vadd.xlane.f32.xlu0 %v974
  %v976 = vpop.xlane.xlu0 %975
  %v977 = vrcp.pop %v955
  %v978 = vrcp.pop %v958
  %v979 = vrcp.pop %v961
  %v980 = vrcp.pop %v964
  %v981 = vrcp.pop %v967
  %v982 = vrcp.pop %v970
  %v983 = vrcp.pop %v973
  %v984 = vrcp.pop %v976
  %v985 = vmul.f32 %v945, %v977
  %v986 = vmul.f32 %v946, %v978
  %v987 = vmul.f32 %v947, %v979
  %v988 = vmul.f32 %v948, %v980
  %v989 = vmul.f32 %v949, %v981
  %v990 = vmul.f32 %v950, %v982
  %v991 = vmul.f32 %v951, %v983
  %v992 = vmul.f32 %v952, %v984
  %v994 = vsel %vm896, %v985, 0
  %v997 = vsel %vm896, %v986, 0
  %v1000 = vsel %vm896, %v987, 0
  %v1003 = vsel %vm896, %v988, 0
  %v1006 = vsel %vm896, %v989, 0
  %v1009 = vsel %vm896, %v990, 0
  %v1012 = vsel %vm896, %v991, 0
  %v1015 = vsel %vm896, %v992, 0
  %1017 = vmatprep.subr.mxu0 0.0
  %1018 = vmatpush1.msra.mxu0 %v566
  %1019 = vmatprep.subr.mxu0 0.0
  %1020 = vmatpush1.msra.mxu0 %v571
  %1021 = vmatprep.subr.mxu0 0.0
  %1022 = vmatpush1.msra.mxu0 %v576
  %1023 = vmatprep.subr.mxu0 0.0
  %1024 = vmatpush1.msra.mxu0 %v581
  %1025 = vmatprep.subr.mxu0 0.0
  %1026 = vmatpush1.msra.mxu0 %v586
  %1027 = vmatprep.subr.mxu0 0.0
  %1028 = vmatpush1.msra.mxu0 %v591
  %1029 = vmatprep.subr.mxu0 0.0
  %1030 = vmatpush1.msra.mxu0 %v596
  %1031 = vmatprep.subr.mxu0 0.0
  %1032 = vmatpush1.msra.mxu0 %v601
  %1033 = vmatprep.subr.mxu0 0.0
  %1034 = vmatpush1.msra.mxu0 0.0
  %1035 = vmatprep.subr.mxu0 0.0
  %1036 = vmatpush1.msra.mxu0 0.0
  %1037 = vmatprep.subr.mxu0 0.0
  %1038 = vmatpush1.msra.mxu0 0.0
  %1039 = vmatprep.subr.mxu0 0.0
  %1040 = vmatpush1.msra.mxu0 0.0
  %1041 = vmatprep.subr.mxu0 0.0
  %1042 = vmatpush1.msra.mxu0 0.0
  %1043 = vmatprep.subr.mxu0 0.0
  %1044 = vmatpush1.msra.mxu0 0.0
  %1045 = vmatprep.subr.mxu0 0.0
  %1046 = vmatpush1.msra.mxu0 0.0
  %1047 = vmatprep.subr.mxu0 0.0
  %1048 = vmatpush1.msra.mxu0 0.0
  %1049 = vmatprep.subr.mxu0 0.0
  %1050 = vmatpush1.msra.mxu0 0.0
  %1051 = vmatprep.subr.mxu0 0.0
  %1052 = vmatpush1.msra.mxu0 0.0
  %1053 = vmatprep.subr.mxu0 0.0
  %1054 = vmatpush1.msra.mxu0 0.0
  %1055 = vmatprep.subr.mxu0 0.0
  %1056 = vmatpush1.msra.mxu0 0.0
  %1057 = vmatprep.subr.mxu0 0.0
  %1058 = vmatpush1.msra.mxu0 0.0
  %1059 = vmatprep.subr.mxu0 0.0
  %1060 = vmatpush1.msra.mxu0 0.0
  %1061 = vmatprep.subr.mxu0 0.0
  %1062 = vmatpush1.msra.mxu0 0.0
  %1063 = vmatprep.subr.mxu0 0.0
  %1064 = vmatpush1.msra.mxu0 0.0
  %1065 = vmatprep.subr.mxu0 0.0
  %1066 = vmatpush1.msra.mxu0 0.0
  %1067 = vmatprep.subr.mxu0 0.0
  %1068 = vmatpush1.msra.mxu0 0.0
  %1069 = vmatprep.subr.mxu0 0.0
  %1070 = vmatpush1.msra.mxu0 0.0
  %1071 = vmatprep.subr.mxu0 0.0
  %1072 = vmatpush1.msra.mxu0 0.0
  %1073 = vmatprep.subr.mxu0 0.0
  %1074 = vmatpush1.msra.mxu0 0.0
  %1075 = vmatprep.subr.mxu0 0.0
  %1076 = vmatpush1.msra.mxu0 0.0
  %1077 = vmatprep.subr.mxu0 0.0
  %1078 = vmatpush1.msra.mxu0 0.0
  %1079 = vmatprep.subr.mxu0 0.0
  %1080 = vmatpush1.msra.mxu0 0.0
  %1081 = vmatprep.mubr.f32.mxu0 0.0
  %1082 = vmatmul.mubr.f32.gmra.mrb[0].mxu0 %v994
  %v1083 = vpop.f32.mrb[0].mxu0
  %v1084 = vadd.f32 0.0, %v1083
  %v1085 = vpop.f32.mrb[0].mxu0
  %1086 = vmatprep.mubr.f32.mxu0 0.0
  %1087 = vmatmul.mubr.f32.gmra.mrb[0].mxu0 %v997
  %v1088 = vpop.f32.mrb[0].mxu0
  %v1089 = vadd.f32 0.0, %v1088
  %v1090 = vpop.f32.mrb[0].mxu0
  %1091 = vmatprep.mubr.f32.mxu0 0.0
  %1092 = vmatmul.mubr.f32.gmra.mrb[0].mxu0 %v1000
  %v1093 = vpop.f32.mrb[0].mxu0
  %v1094 = vadd.f32 0.0, %v1093
  %v1095 = vpop.f32.mrb[0].mxu0
  %1096 = vmatprep.mubr.f32.mxu0 0.0
  %1097 = vmatmul.mubr.f32.gmra.mrb[0].mxu0 %v1003
  %v1098 = vpop.f32.mrb[0].mxu0
  %v1099 = vadd.f32 0.0, %v1098
  %v1100 = vpop.f32.mrb[0].mxu0
  %1101 = vmatprep.mubr.f32.mxu0 0.0
  %1102 = vmatmul.mubr.f32.gmra.mrb[0].mxu0 %v1006
  %v1103 = vpop.f32.mrb[0].mxu0
  %v1104 = vadd.f32 0.0, %v1103
  %v1105 = vpop.f32.mrb[0].mxu0
  %1106 = vmatprep.mubr.f32.mxu0 0.0
  %1107 = vmatmul.mubr.f32.gmra.mrb[0].mxu0 %v1009
  %v1108 = vpop.f32.mrb[0].mxu0
  %v1109 = vadd.f32 0.0, %v1108
  %v1110 = vpop.f32.mrb[0].mxu0
  %1111 = vmatprep.mubr.f32.mxu0 0.0
  %1112 = vmatmul.mubr.f32.gmra.mrb[0].mxu0 %v1012
  %v1113 = vpop.f32.mrb[0].mxu0
  %v1114 = vadd.f32 0.0, %v1113
  %v1115 = vpop.f32.mrb[0].mxu0
  %1116 = vmatprep.mubr.f32.mxu0 0.0
  %1117 = vmatmul.mubr.f32.gmra.mrb[0].mxu0 %v1015
  %v1118 = vpop.f32.mrb[0].mxu0
  %v1119 = vadd.f32 0.0, %v1118
  %v1120 = vpop.f32.mrb[0].mxu0
  %1121 = vdwg.mxu0
  %1122 = vset.pattern.permute.xlu0 1
  %1123 = vperm.xlu0 %1122, %v700
  %v1124 = vpop.permute.xlu0 %1123
  %1126 = vset.pattern.permute.xlu0 1
  %1127 = vperm.xlu0 %1126, %v705
  %v1128 = vpop.permute.xlu0 %1127
  %1130 = vset.pattern.permute.xlu0 1
  %1131 = vperm.xlu0 %1130, %v710
  %v1132 = vpop.permute.xlu0 %1131
  %1134 = vset.pattern.permute.xlu0 1
  %1135 = vperm.xlu0 %1134, %v715
  %v1136 = vpop.permute.xlu0 %1135
  %1138 = vset.pattern.permute.xlu0 1
  %1139 = vperm.xlu0 %1138, %v720
  %v1140 = vpop.permute.xlu0 %1139
  %1142 = vset.pattern.permute.xlu0 1
  %1143 = vperm.xlu0 %1142, %v725
  %v1144 = vpop.permute.xlu0 %1143
  %1146 = vset.pattern.permute.xlu0 1
  %1147 = vperm.xlu0 %1146, %v730
  %v1148 = vpop.permute.xlu0 %1147
  %1150 = vset.pattern.permute.xlu0 1
  %1151 = vperm.xlu0 %1150, %v735
  %v1152 = vpop.permute.xlu0 %1151
  %v1154 = vlaneseq
  %v1155 = vshrl.u32 %v1154, 7
  %v1156 = vsub.s32 1, %v1155
  %v1157 = vrot.slane %v809, %v1156
  %v1158 = vadd.f32 %v1124, %v1157
  %v1159 = vadd.f32 %v1128, %v1157
  %v1160 = vadd.f32 %v1132, %v1157
  %v1161 = vadd.f32 %v1136, %v1157
  %v1162 = vadd.f32 %v1140, %v1157
  %v1163 = vadd.f32 %v1144, %v1157
  %v1164 = vadd.f32 %v1148, %v1157
  %v1165 = vadd.f32 %v1152, %v1157
  %vm1166 = vcmp.gt.f32.partialorder %v1158, 0.0
  %vm1167 = vcmp.gt.f32.partialorder %v1159, 0.0
  %vm1168 = vcmp.gt.f32.partialorder %v1160, 0.0
  %vm1169 = vcmp.gt.f32.partialorder %v1161, 0.0
  %vm1170 = vcmp.gt.f32.partialorder %v1162, 0.0
  %vm1171 = vcmp.gt.f32.partialorder %v1163, 0.0
  %vm1172 = vcmp.gt.f32.partialorder %v1164, 0.0
  %vm1173 = vcmp.gt.f32.partialorder %v1165, 0.0
  %v1174 = vmul.f32 %v1158, 0.2
  %v1175 = vmul.f32 %v1159, 0.2
  %v1176 = vmul.f32 %v1160, 0.2
  %v1177 = vmul.f32 %v1161, 0.2
  %v1178 = vmul.f32 %v1162, 0.2
  %v1179 = vmul.f32 %v1163, 0.2
  %v1180 = vmul.f32 %v1164, 0.2
  %v1181 = vmul.f32 %v1165, 0.2
  %v1182 = vsel %vm1166, %v1158, %v1174
  %v1183 = vsel %vm1167, %v1159, %v1175
  %v1184 = vsel %vm1168, %v1160, %v1176
  %v1185 = vsel %vm1169, %v1161, %v1177
  %v1186 = vsel %vm1170, %v1162, %v1178
  %v1187 = vsel %vm1171, %v1163, %v1179
  %v1188 = vsel %vm1172, %v1164, %v1180
  %v1189 = vsel %vm1173, %v1165, %v1181
  %v1190 = vadd.f32 %v1182, %v346
  %v1191 = vadd.f32 %v1183, %v347
  %v1192 = vadd.f32 %v1184, %v348
  %v1193 = vadd.f32 %v1185, %v349
  %v1194 = vadd.f32 %v1186, %v350
  %v1195 = vadd.f32 %v1187, %v351
  %v1196 = vadd.f32 %v1188, %v352
  %v1197 = vadd.f32 %v1189, %v353
  %v1198 = vsel %vm896, %v1190, -inf
  %1199 = vmax.xlane.f32.xlu0 %v1198
  %v1200 = vpop.xlane.xlu0 %1199
  %v1201 = vsel %vm896, %v1191, -inf
  %1202 = vmax.xlane.f32.xlu0 %v1201
  %v1203 = vpop.xlane.xlu0 %1202
  %v1204 = vsel %vm896, %v1192, -inf
  %1205 = vmax.xlane.f32.xlu0 %v1204
  %v1206 = vpop.xlane.xlu0 %1205
  %v1207 = vsel %vm896, %v1193, -inf
  %1208 = vmax.xlane.f32.xlu0 %v1207
  %v1209 = vpop.xlane.xlu0 %1208
  %v1210 = vsel %vm896, %v1194, -inf
  %1211 = vmax.xlane.f32.xlu0 %v1210
  %v1212 = vpop.xlane.xlu0 %1211
  %v1213 = vsel %vm896, %v1195, -inf
  %1214 = vmax.xlane.f32.xlu0 %v1213
  %v1215 = vpop.xlane.xlu0 %1214
  %v1216 = vsel %vm896, %v1196, -inf
  %1217 = vmax.xlane.f32.xlu0 %v1216
  %v1218 = vpop.xlane.xlu0 %1217
  %v1219 = vsel %vm896, %v1197, -inf
  %1220 = vmax.xlane.f32.xlu0 %v1219
  %v1221 = vpop.xlane.xlu0 %1220
  %v1222 = vsub.f32 %v1190, %v1200
  %v1223 = vsub.f32 %v1191, %v1203
  %v1224 = vsub.f32 %v1192, %v1206
  %v1225 = vsub.f32 %v1193, %v1209
  %v1226 = vsub.f32 %v1194, %v1212
  %v1227 = vsub.f32 %v1195, %v1215
  %v1228 = vsub.f32 %v1196, %v1218
  %v1229 = vsub.f32 %v1197, %v1221
  %v1230 = vmul.f32 %v1222, 1.442695
  %v1231 = vpow.pop %v1230
  %v1232 = vmul.f32 %v1223, 1.442695
  %v1233 = vpow.pop %v1232
  %v1234 = vmul.f32 %v1224, 1.442695
  %v1235 = vpow.pop %v1234
  %v1236 = vmul.f32 %v1225, 1.442695
  %v1237 = vpow.pop %v1236
  %v1238 = vmul.f32 %v1226, 1.442695
  %v1239 = vpow.pop %v1238
  %v1240 = vmul.f32 %v1227, 1.442695
  %v1241 = vpow.pop %v1240
  %v1242 = vmul.f32 %v1228, 1.442695
  %v1243 = vpow.pop %v1242
  %v1244 = vmul.f32 %v1229, 1.442695
  %v1245 = vpow.pop %v1244
  %v1246 = vmul.f32 %v1231, %v330
  %v1247 = vmul.f32 %v1233, %v331
  %v1248 = vmul.f32 %v1235, %v332
  %v1249 = vmul.f32 %v1237, %v333
  %v1250 = vmul.f32 %v1239, %v334
  %v1251 = vmul.f32 %v1241, %v335
  %v1252 = vmul.f32 %v1243, %v336
  %v1253 = vmul.f32 %v1245, %v337
  %v1254 = vsel %vm896, %v1246, 0.0
  %1255 = vadd.xlane.f32.xlu0 %v1254
  %v1256 = vpop.xlane.xlu0 %1255
  %v1257 = vsel %vm896, %v1247, 0.0
  %1258 = vadd.xlane.f32.xlu0 %v1257
  %v1259 = vpop.xlane.xlu0 %1258
  %v1260 = vsel %vm896, %v1248, 0.0
  %1261 = vadd.xlane.f32.xlu0 %v1260
  %v1262 = vpop.xlane.xlu0 %1261
  %v1263 = vsel %vm896, %v1249, 0.0
  %1264 = vadd.xlane.f32.xlu0 %v1263
  %v1265 = vpop.xlane.xlu0 %1264
  %v1266 = vsel %vm896, %v1250, 0.0
  %1267 = vadd.xlane.f32.xlu0 %v1266
  %v1268 = vpop.xlane.xlu0 %1267
  %v1269 = vsel %vm896, %v1251, 0.0
  %1270 = vadd.xlane.f32.xlu0 %v1269
  %v1271 = vpop.xlane.xlu0 %1270
  %v1272 = vsel %vm896, %v1252, 0.0
  %1273 = vadd.xlane.f32.xlu0 %v1272
  %v1274 = vpop.xlane.xlu0 %1273
  %v1275 = vsel %vm896, %v1253, 0.0
  %1276 = vadd.xlane.f32.xlu0 %v1275
  %v1277 = vpop.xlane.xlu0 %1276
  %v1278 = vrcp.pop %v1256
  %v1279 = vrcp.pop %v1259
  %v1280 = vrcp.pop %v1262
  %v1281 = vrcp.pop %v1265
  %v1282 = vrcp.pop %v1268
  %v1283 = vrcp.pop %v1271
  %v1284 = vrcp.pop %v1274
  %v1285 = vrcp.pop %v1277
  %v1286 = vmul.f32 %v1246, %v1278
  %v1287 = vmul.f32 %v1247, %v1279
  %v1288 = vmul.f32 %v1248, %v1280
  %v1289 = vmul.f32 %v1249, %v1281
  %v1290 = vmul.f32 %v1250, %v1282
  %v1291 = vmul.f32 %v1251, %v1283
  %v1292 = vmul.f32 %v1252, %v1284
  %v1293 = vmul.f32 %v1253, %v1285
  %1294 = vrot.lane.b32.xlu0 %v566, 120
  %v1295 = vpop.permute.xlu0 %1294
  %1296 = vrot.lane.b32.xlu0 %v571, 120
  %v1297 = vpop.permute.xlu0 %1296
  %1298 = vrot.lane.b32.xlu0 %v576, 120
  %v1299 = vpop.permute.xlu0 %1298
  %1300 = vrot.lane.b32.xlu0 %v581, 120
  %v1301 = vpop.permute.xlu0 %1300
  %1302 = vrot.lane.b32.xlu0 %v586, 120
  %v1303 = vpop.permute.xlu0 %1302
  %1304 = vrot.lane.b32.xlu0 %v591, 120
  %v1305 = vpop.permute.xlu0 %1304
  %1306 = vrot.lane.b32.xlu0 %v596, 120
  %v1307 = vpop.permute.xlu0 %1306
  %1308 = vrot.lane.b32.xlu0 %v601, 120
  %v1309 = vpop.permute.xlu0 %1308
  %v1319 = vsel %vm896, %v1286, 0
  %v1322 = vsel %vm896, %v1287, 0
  %v1325 = vsel %vm896, %v1288, 0
  %v1328 = vsel %vm896, %v1289, 0
  %v1331 = vsel %vm896, %v1290, 0
  %v1334 = vsel %vm896, %v1291, 0
  %v1337 = vsel %vm896, %v1292, 0
  %v1340 = vsel %vm896, %v1293, 0
  %1342 = vmatprep.subr.mxu0 0.0
  %1343 = vmatpush1.msra.mxu0 %v1295
  %1344 = vmatprep.subr.mxu0 0.0
  %1345 = vmatpush1.msra.mxu0 %v1297
  %1346 = vmatprep.subr.mxu0 0.0
  %1347 = vmatpush1.msra.mxu0 %v1299
  %1348 = vmatprep.subr.mxu0 0.0
  %1349 = vmatpush1.msra.mxu0 %v1301
  %1350 = vmatprep.subr.mxu0 0.0
  %1351 = vmatpush1.msra.mxu0 %v1303
  %1352 = vmatprep.subr.mxu0 0.0
  %1353 = vmatpush1.msra.mxu0 %v1305
  %1354 = vmatprep.subr.mxu0 0.0
  %1355 = vmatpush1.msra.mxu0 %v1307
  %1356 = vmatprep.subr.mxu0 0.0
  %1357 = vmatpush1.msra.mxu0 %v1309
  %1358 = vmatprep.subr.mxu0 0.0
  %1359 = vmatpush1.msra.mxu0 0.0
  %1360 = vmatprep.subr.mxu0 0.0
  %1361 = vmatpush1.msra.mxu0 0.0
  %1362 = vmatprep.subr.mxu0 0.0
  %1363 = vmatpush1.msra.mxu0 0.0
  %1364 = vmatprep.subr.mxu0 0.0
  %1365 = vmatpush1.msra.mxu0 0.0
  %1366 = vmatprep.subr.mxu0 0.0
  %1367 = vmatpush1.msra.mxu0 0.0
  %1368 = vmatprep.subr.mxu0 0.0
  %1369 = vmatpush1.msra.mxu0 0.0
  %1370 = vmatprep.subr.mxu0 0.0
  %1371 = vmatpush1.msra.mxu0 0.0
  %1372 = vmatprep.subr.mxu0 0.0
  %1373 = vmatpush1.msra.mxu0 0.0
  %1374 = vmatprep.subr.mxu0 0.0
  %1375 = vmatpush1.msra.mxu0 0.0
  %1376 = vmatprep.subr.mxu0 0.0
  %1377 = vmatpush1.msra.mxu0 0.0
  %1378 = vmatprep.subr.mxu0 0.0
  %1379 = vmatpush1.msra.mxu0 0.0
  %1380 = vmatprep.subr.mxu0 0.0
  %1381 = vmatpush1.msra.mxu0 0.0
  %1382 = vmatprep.subr.mxu0 0.0
  %1383 = vmatpush1.msra.mxu0 0.0
  %1384 = vmatprep.subr.mxu0 0.0
  %1385 = vmatpush1.msra.mxu0 0.0
  %1386 = vmatprep.subr.mxu0 0.0
  %1387 = vmatpush1.msra.mxu0 0.0
  %1388 = vmatprep.subr.mxu0 0.0
  %1389 = vmatpush1.msra.mxu0 0.0
  %1390 = vmatprep.subr.mxu0 0.0
  %1391 = vmatpush1.msra.mxu0 0.0
  %1392 = vmatprep.subr.mxu0 0.0
  %1393 = vmatpush1.msra.mxu0 0.0
  %1394 = vmatprep.subr.mxu0 0.0
  %1395 = vmatpush1.msra.mxu0 0.0
  %1396 = vmatprep.subr.mxu0 0.0
  %1397 = vmatpush1.msra.mxu0 0.0
  %1398 = vmatprep.subr.mxu0 0.0
  %1399 = vmatpush1.msra.mxu0 0.0
  %1400 = vmatprep.subr.mxu0 0.0
  %1401 = vmatpush1.msra.mxu0 0.0
  %1402 = vmatprep.subr.mxu0 0.0
  %1403 = vmatpush1.msra.mxu0 0.0
  %1404 = vmatprep.subr.mxu0 0.0
  %1405 = vmatpush1.msra.mxu0 0.0
  %1406 = vmatprep.mubr.f32.mxu0 0.0
  %1407 = vmatmul.mubr.f32.gmra.mrb[0].mxu0 %v1319
  %v1408 = vpop.f32.mrb[0].mxu0
  %v1409 = vadd.f32 0.0, %v1408
  %v1410 = vpop.f32.mrb[0].mxu0
  %1411 = vmatprep.mubr.f32.mxu0 0.0
  %1412 = vmatmul.mubr.f32.gmra.mrb[0].mxu0 %v1322
  %v1413 = vpop.f32.mrb[0].mxu0
  %v1414 = vadd.f32 0.0, %v1413
  %v1415 = vpop.f32.mrb[0].mxu0
  %1416 = vmatprep.mubr.f32.mxu0 0.0
  %1417 = vmatmul.mubr.f32.gmra.mrb[0].mxu0 %v1325
  %v1418 = vpop.f32.mrb[0].mxu0
  %v1419 = vadd.f32 0.0, %v1418
  %v1420 = vpop.f32.mrb[0].mxu0
  %1421 = vmatprep.mubr.f32.mxu0 0.0
  %1422 = vmatmul.mubr.f32.gmra.mrb[0].mxu0 %v1328
  %v1423 = vpop.f32.mrb[0].mxu0
  %v1424 = vadd.f32 0.0, %v1423
  %v1425 = vpop.f32.mrb[0].mxu0
  %1426 = vmatprep.mubr.f32.mxu0 0.0
  %1427 = vmatmul.mubr.f32.gmra.mrb[0].mxu0 %v1331
  %v1428 = vpop.f32.mrb[0].mxu0
  %v1429 = vadd.f32 0.0, %v1428
  %v1430 = vpop.f32.mrb[0].mxu0
  %1431 = vmatprep.mubr.f32.mxu0 0.0
  %1432 = vmatmul.mubr.f32.gmra.mrb[0].mxu0 %v1334
  %v1433 = vpop.f32.mrb[0].mxu0
  %v1434 = vadd.f32 0.0, %v1433
  %v1435 = vpop.f32.mrb[0].mxu0
  %1436 = vmatprep.mubr.f32.mxu0 0.0
  %1437 = vmatmul.mubr.f32.gmra.mrb[0].mxu0 %v1337
  %v1438 = vpop.f32.mrb[0].mxu0
  %v1439 = vadd.f32 0.0, %v1438
  %v1440 = vpop.f32.mrb[0].mxu0
  %1441 = vmatprep.mubr.f32.mxu0 0.0
  %1442 = vmatmul.mubr.f32.gmra.mrb[0].mxu0 %v1340
  %v1443 = vpop.f32.mrb[0].mxu0
  %v1444 = vadd.f32 0.0, %v1443
  %v1445 = vpop.f32.mrb[0].mxu0
  %1446 = vdwg.mxu0
  %1447 = vset.pattern.permute.xlu0 2
  %1448 = vperm.xlu0 %1447, %v700
  %v1449 = vpop.permute.xlu0 %1448
  %1451 = vset.pattern.permute.xlu0 2
  %1452 = vperm.xlu0 %1451, %v705
  %v1453 = vpop.permute.xlu0 %1452
  %1455 = vset.pattern.permute.xlu0 2
  %1456 = vperm.xlu0 %1455, %v710
  %v1457 = vpop.permute.xlu0 %1456
  %1459 = vset.pattern.permute.xlu0 2
  %1460 = vperm.xlu0 %1459, %v715
  %v1461 = vpop.permute.xlu0 %1460
  %1463 = vset.pattern.permute.xlu0 2
  %1464 = vperm.xlu0 %1463, %v720
  %v1465 = vpop.permute.xlu0 %1464
  %1467 = vset.pattern.permute.xlu0 2
  %1468 = vperm.xlu0 %1467, %v725
  %v1469 = vpop.permute.xlu0 %1468
  %1471 = vset.pattern.permute.xlu0 2
  %1472 = vperm.xlu0 %1471, %v730
  %v1473 = vpop.permute.xlu0 %1472
  %1475 = vset.pattern.permute.xlu0 2
  %1476 = vperm.xlu0 %1475, %v735
  %v1477 = vpop.permute.xlu0 %1476
  %v1479 = vlaneseq
  %v1480 = vshrl.u32 %v1479, 7
  %v1481 = vsub.s32 2, %v1480
  %v1482 = vrot.slane %v809, %v1481
  %v1483 = vadd.f32 %v1449, %v1482
  %v1484 = vadd.f32 %v1453, %v1482
  %v1485 = vadd.f32 %v1457, %v1482
  %v1486 = vadd.f32 %v1461, %v1482
  %v1487 = vadd.f32 %v1465, %v1482
  %v1488 = vadd.f32 %v1469, %v1482
  %v1489 = vadd.f32 %v1473, %v1482
  %v1490 = vadd.f32 %v1477, %v1482
  %vm1491 = vcmp.gt.f32.partialorder %v1483, 0.0
  %vm1492 = vcmp.gt.f32.partialorder %v1484, 0.0
  %vm1493 = vcmp.gt.f32.partialorder %v1485, 0.0
  %vm1494 = vcmp.gt.f32.partialorder %v1486, 0.0
  %vm1495 = vcmp.gt.f32.partialorder %v1487, 0.0
  %vm1496 = vcmp.gt.f32.partialorder %v1488, 0.0
  %vm1497 = vcmp.gt.f32.partialorder %v1489, 0.0
  %vm1498 = vcmp.gt.f32.partialorder %v1490, 0.0
  %v1499 = vmul.f32 %v1483, 0.2
  %v1500 = vmul.f32 %v1484, 0.2
  %v1501 = vmul.f32 %v1485, 0.2
  %v1502 = vmul.f32 %v1486, 0.2
  %v1503 = vmul.f32 %v1487, 0.2
  %v1504 = vmul.f32 %v1488, 0.2
  %v1505 = vmul.f32 %v1489, 0.2
  %v1506 = vmul.f32 %v1490, 0.2
  %v1507 = vsel %vm1491, %v1483, %v1499
  %v1508 = vsel %vm1492, %v1484, %v1500
  %v1509 = vsel %vm1493, %v1485, %v1501
  %v1510 = vsel %vm1494, %v1486, %v1502
  %v1511 = vsel %vm1495, %v1487, %v1503
  %v1512 = vsel %vm1496, %v1488, %v1504
  %v1513 = vsel %vm1497, %v1489, %v1505
  %v1514 = vsel %vm1498, %v1490, %v1506
  %v1515 = vadd.f32 %v1507, %v346
  %v1516 = vadd.f32 %v1508, %v347
  %v1517 = vadd.f32 %v1509, %v348
  %v1518 = vadd.f32 %v1510, %v349
  %v1519 = vadd.f32 %v1511, %v350
  %v1520 = vadd.f32 %v1512, %v351
  %v1521 = vadd.f32 %v1513, %v352
  %v1522 = vadd.f32 %v1514, %v353
  %v1523 = vsel %vm896, %v1515, -inf
  %1524 = vmax.xlane.f32.xlu0 %v1523
  %v1525 = vpop.xlane.xlu0 %1524
  %v1526 = vsel %vm896, %v1516, -inf
  %1527 = vmax.xlane.f32.xlu0 %v1526
  %v1528 = vpop.xlane.xlu0 %1527
  %v1529 = vsel %vm896, %v1517, -inf
  %1530 = vmax.xlane.f32.xlu0 %v1529
  %v1531 = vpop.xlane.xlu0 %1530
  %v1532 = vsel %vm896, %v1518, -inf
  %1533 = vmax.xlane.f32.xlu0 %v1532
  %v1534 = vpop.xlane.xlu0 %1533
  %v1535 = vsel %vm896, %v1519, -inf
  %1536 = vmax.xlane.f32.xlu0 %v1535
  %v1537 = vpop.xlane.xlu0 %1536
  %v1538 = vsel %vm896, %v1520, -inf
  %1539 = vmax.xlane.f32.xlu0 %v1538
  %v1540 = vpop.xlane.xlu0 %1539
  %v1541 = vsel %vm896, %v1521, -inf
  %1542 = vmax.xlane.f32.xlu0 %v1541
  %v1543 = vpop.xlane.xlu0 %1542
  %v1544 = vsel %vm896, %v1522, -inf
  %1545 = vmax.xlane.f32.xlu0 %v1544
  %v1546 = vpop.xlane.xlu0 %1545
  %v1547 = vsub.f32 %v1515, %v1525
  %v1548 = vsub.f32 %v1516, %v1528
  %v1549 = vsub.f32 %v1517, %v1531
  %v1550 = vsub.f32 %v1518, %v1534
  %v1551 = vsub.f32 %v1519, %v1537
  %v1552 = vsub.f32 %v1520, %v1540
  %v1553 = vsub.f32 %v1521, %v1543
  %v1554 = vsub.f32 %v1522, %v1546
  %v1555 = vmul.f32 %v1547, 1.442695
  %v1556 = vpow.pop %v1555
  %v1557 = vmul.f32 %v1548, 1.442695
  %v1558 = vpow.pop %v1557
  %v1559 = vmul.f32 %v1549, 1.442695
  %v1560 = vpow.pop %v1559
  %v1561 = vmul.f32 %v1550, 1.442695
  %v1562 = vpow.pop %v1561
  %v1563 = vmul.f32 %v1551, 1.442695
  %v1564 = vpow.pop %v1563
  %v1565 = vmul.f32 %v1552, 1.442695
  %v1566 = vpow.pop %v1565
  %v1567 = vmul.f32 %v1553, 1.442695
  %v1568 = vpow.pop %v1567
  %v1569 = vmul.f32 %v1554, 1.442695
  %v1570 = vpow.pop %v1569
  %v1571 = vmul.f32 %v1556, %v330
  %v1572 = vmul.f32 %v1558, %v331
  %v1573 = vmul.f32 %v1560, %v332
  %v1574 = vmul.f32 %v1562, %v333
  %v1575 = vmul.f32 %v1564, %v334
  %v1576 = vmul.f32 %v1566, %v335
  %v1577 = vmul.f32 %v1568, %v336
  %v1578 = vmul.f32 %v1570, %v337
  %v1579 = vsel %vm896, %v1571, 0.0
  %1580 = vadd.xlane.f32.xlu0 %v1579
  %v1581 = vpop.xlane.xlu0 %1580
  %v1582 = vsel %vm896, %v1572, 0.0
  %1583 = vadd.xlane.f32.xlu0 %v1582
  %v1584 = vpop.xlane.xlu0 %1583
  %v1585 = vsel %vm896, %v1573, 0.0
  %1586 = vadd.xlane.f32.xlu0 %v1585
  %v1587 = vpop.xlane.xlu0 %1586
  %v1588 = vsel %vm896, %v1574, 0.0
  %1589 = vadd.xlane.f32.xlu0 %v1588
  %v1590 = vpop.xlane.xlu0 %1589
  %v1591 = vsel %vm896, %v1575, 0.0
  %1592 = vadd.xlane.f32.xlu0 %v1591
  %v1593 = vpop.xlane.xlu0 %1592
  %v1594 = vsel %vm896, %v1576, 0.0
  %1595 = vadd.xlane.f32.xlu0 %v1594
  %v1596 = vpop.xlane.xlu0 %1595
  %v1597 = vsel %vm896, %v1577, 0.0
  %1598 = vadd.xlane.f32.xlu0 %v1597
  %v1599 = vpop.xlane.xlu0 %1598
  %v1600 = vsel %vm896, %v1578, 0.0
  %1601 = vadd.xlane.f32.xlu0 %v1600
  %v1602 = vpop.xlane.xlu0 %1601
  %v1603 = vrcp.pop %v1581
  %v1604 = vrcp.pop %v1584
  %v1605 = vrcp.pop %v1587
  %v1606 = vrcp.pop %v1590
  %v1607 = vrcp.pop %v1593
  %v1608 = vrcp.pop %v1596
  %v1609 = vrcp.pop %v1599
  %v1610 = vrcp.pop %v1602
  %v1611 = vmul.f32 %v1571, %v1603
  %v1612 = vmul.f32 %v1572, %v1604
  %v1613 = vmul.f32 %v1573, %v1605
  %v1614 = vmul.f32 %v1574, %v1606
  %v1615 = vmul.f32 %v1575, %v1607
  %v1616 = vmul.f32 %v1576, %v1608
  %v1617 = vmul.f32 %v1577, %v1609
  %v1618 = vmul.f32 %v1578, %v1610
  %1619 = vrot.lane.b32.xlu0 %v566, 112
  %v1620 = vpop.permute.xlu0 %1619
  %1621 = vrot.lane.b32.xlu0 %v571, 112
  %v1622 = vpop.permute.xlu0 %1621
  %1623 = vrot.lane.b32.xlu0 %v576, 112
  %v1624 = vpop.permute.xlu0 %1623
  %1625 = vrot.lane.b32.xlu0 %v581, 112
  %v1626 = vpop.permute.xlu0 %1625
  %1627 = vrot.lane.b32.xlu0 %v586, 112
  %v1628 = vpop.permute.xlu0 %1627
  %1629 = vrot.lane.b32.xlu0 %v591, 112
  %v1630 = vpop.permute.xlu0 %1629
  %1631 = vrot.lane.b32.xlu0 %v596, 112
  %v1632 = vpop.permute.xlu0 %1631
  %1633 = vrot.lane.b32.xlu0 %v601, 112
  %v1634 = vpop.permute.xlu0 %1633
  %v1644 = vsel %vm896, %v1611, 0
  %v1647 = vsel %vm896, %v1612, 0
  %v1650 = vsel %vm896, %v1613, 0
  %v1653 = vsel %vm896, %v1614, 0
  %v1656 = vsel %vm896, %v1615, 0
  %v1659 = vsel %vm896, %v1616, 0
  %v1662 = vsel %vm896, %v1617, 0
  %v1665 = vsel %vm896, %v1618, 0
  %1667 = vmatprep.subr.mxu0 0.0
  %1668 = vmatpush1.msra.mxu0 %v1620
  %1669 = vmatprep.subr.mxu0 0.0
  %1670 = vmatpush1.msra.mxu0 %v1622
  %1671 = vmatprep.subr.mxu0 0.0
  %1672 = vmatpush1.msra.mxu0 %v1624
  %1673 = vmatprep.subr.mxu0 0.0
  %1674 = vmatpush1.msra.mxu0 %v1626
  %1675 = vmatprep.subr.mxu0 0.0
  %1676 = vmatpush1.msra.mxu0 %v1628
  %1677 = vmatprep.subr.mxu0 0.0
  %1678 = vmatpush1.msra.mxu0 %v1630
  %1679 = vmatprep.subr.mxu0 0.0
  %1680 = vmatpush1.msra.mxu0 %v1632
  %1681 = vmatprep.subr.mxu0 0.0
  %1682 = vmatpush1.msra.mxu0 %v1634
  %1683 = vmatprep.subr.mxu0 0.0
  %1684 = vmatpush1.msra.mxu0 0.0
  %1685 = vmatprep.subr.mxu0 0.0
  %1686 = vmatpush1.msra.mxu0 0.0
  %1687 = vmatprep.subr.mxu0 0.0
  %1688 = vmatpush1.msra.mxu0 0.0
  %1689 = vmatprep.subr.mxu0 0.0
  %1690 = vmatpush1.msra.mxu0 0.0
  %1691 = vmatprep.subr.mxu0 0.0
  %1692 = vmatpush1.msra.mxu0 0.0
  %1693 = vmatprep.subr.mxu0 0.0
  %1694 = vmatpush1.msra.mxu0 0.0
  %1695 = vmatprep.subr.mxu0 0.0
  %1696 = vmatpush1.msra.mxu0 0.0
  %1697 = vmatprep.subr.mxu0 0.0
  %1698 = vmatpush1.msra.mxu0 0.0
  %1699 = vmatprep.subr.mxu0 0.0
  %1700 = vmatpush1.msra.mxu0 0.0
  %1701 = vmatprep.subr.mxu0 0.0
  %1702 = vmatpush1.msra.mxu0 0.0
  %1703 = vmatprep.subr.mxu0 0.0
  %1704 = vmatpush1.msra.mxu0 0.0
  %1705 = vmatprep.subr.mxu0 0.0
  %1706 = vmatpush1.msra.mxu0 0.0
  %1707 = vmatprep.subr.mxu0 0.0
  %1708 = vmatpush1.msra.mxu0 0.0
  %1709 = vmatprep.subr.mxu0 0.0
  %1710 = vmatpush1.msra.mxu0 0.0
  %1711 = vmatprep.subr.mxu0 0.0
  %1712 = vmatpush1.msra.mxu0 0.0
  %1713 = vmatprep.subr.mxu0 0.0
  %1714 = vmatpush1.msra.mxu0 0.0
  %1715 = vmatprep.subr.mxu0 0.0
  %1716 = vmatpush1.msra.mxu0 0.0
  %1717 = vmatprep.subr.mxu0 0.0
  %1718 = vmatpush1.msra.mxu0 0.0
  %1719 = vmatprep.subr.mxu0 0.0
  %1720 = vmatpush1.msra.mxu0 0.0
  %1721 = vmatprep.subr.mxu0 0.0
  %1722 = vmatpush1.msra.mxu0 0.0
  %1723 = vmatprep.subr.mxu0 0.0
  %1724 = vmatpush1.msra.mxu0 0.0
  %1725 = vmatprep.subr.mxu0 0.0
  %1726 = vmatpush1.msra.mxu0 0.0
  %1727 = vmatprep.subr.mxu0 0.0
  %1728 = vmatpush1.msra.mxu0 0.0
  %1729 = vmatprep.subr.mxu0 0.0
  %1730 = vmatpush1.msra.mxu0 0.0
  %1731 = vmatprep.mubr.f32.mxu0 0.0
  %1732 = vmatmul.mubr.f32.gmra.mrb[0].mxu0 %v1644
  %v1733 = vpop.f32.mrb[0].mxu0
  %v1734 = vadd.f32 0.0, %v1733
  %v1735 = vpop.f32.mrb[0].mxu0
  %1736 = vmatprep.mubr.f32.mxu0 0.0
  %1737 = vmatmul.mubr.f32.gmra.mrb[0].mxu0 %v1647
  %v1738 = vpop.f32.mrb[0].mxu0
  %v1739 = vadd.f32 0.0, %v1738
  %v1740 = vpop.f32.mrb[0].mxu0
  %1741 = vmatprep.mubr.f32.mxu0 0.0
  %1742 = vmatmul.mubr.f32.gmra.mrb[0].mxu0 %v1650
  %v1743 = vpop.f32.mrb[0].mxu0
  %v1744 = vadd.f32 0.0, %v1743
  %v1745 = vpop.f32.mrb[0].mxu0
  %1746 = vmatprep.mubr.f32.mxu0 0.0
  %1747 = vmatmul.mubr.f32.gmra.mrb[0].mxu0 %v1653
  %v1748 = vpop.f32.mrb[0].mxu0
  %v1749 = vadd.f32 0.0, %v1748
  %v1750 = vpop.f32.mrb[0].mxu0
  %1751 = vmatprep.mubr.f32.mxu0 0.0
  %1752 = vmatmul.mubr.f32.gmra.mrb[0].mxu0 %v1656
  %v1753 = vpop.f32.mrb[0].mxu0
  %v1754 = vadd.f32 0.0, %v1753
  %v1755 = vpop.f32.mrb[0].mxu0
  %1756 = vmatprep.mubr.f32.mxu0 0.0
  %1757 = vmatmul.mubr.f32.gmra.mrb[0].mxu0 %v1659
  %v1758 = vpop.f32.mrb[0].mxu0
  %v1759 = vadd.f32 0.0, %v1758
  %v1760 = vpop.f32.mrb[0].mxu0
  %1761 = vmatprep.mubr.f32.mxu0 0.0
  %1762 = vmatmul.mubr.f32.gmra.mrb[0].mxu0 %v1662
  %v1763 = vpop.f32.mrb[0].mxu0
  %v1764 = vadd.f32 0.0, %v1763
  %v1765 = vpop.f32.mrb[0].mxu0
  %1766 = vmatprep.mubr.f32.mxu0 0.0
  %1767 = vmatmul.mubr.f32.gmra.mrb[0].mxu0 %v1665
  %v1768 = vpop.f32.mrb[0].mxu0
  %v1769 = vadd.f32 0.0, %v1768
  %v1770 = vpop.f32.mrb[0].mxu0
  %1771 = vdwg.mxu0
  %1772 = vset.pattern.permute.xlu0 3
  %1773 = vperm.xlu0 %1772, %v700
  %v1774 = vpop.permute.xlu0 %1773
  %1776 = vset.pattern.permute.xlu0 3
  %1777 = vperm.xlu0 %1776, %v705
  %v1778 = vpop.permute.xlu0 %1777
  %1780 = vset.pattern.permute.xlu0 3
  %1781 = vperm.xlu0 %1780, %v710
  %v1782 = vpop.permute.xlu0 %1781
  %1784 = vset.pattern.permute.xlu0 3
  %1785 = vperm.xlu0 %1784, %v715
  %v1786 = vpop.permute.xlu0 %1785
  %1788 = vset.pattern.permute.xlu0 3
  %1789 = vperm.xlu0 %1788, %v720
  %v1790 = vpop.permute.xlu0 %1789
  %1792 = vset.pattern.permute.xlu0 3
  %1793 = vperm.xlu0 %1792, %v725
  %v1794 = vpop.permute.xlu0 %1793
  %1796 = vset.pattern.permute.xlu0 3
  %1797 = vperm.xlu0 %1796, %v730
  %v1798 = vpop.permute.xlu0 %1797
  %1800 = vset.pattern.permute.xlu0 3
  %1801 = vperm.xlu0 %1800, %v735
  %v1802 = vpop.permute.xlu0 %1801
  %v1804 = vlaneseq
  %v1805 = vshrl.u32 %v1804, 7
  %v1806 = vsub.s32 3, %v1805
  %v1807 = vrot.slane %v809, %v1806
  %v1808 = vadd.f32 %v1774, %v1807
  %v1809 = vadd.f32 %v1778, %v1807
  %v1810 = vadd.f32 %v1782, %v1807
  %v1811 = vadd.f32 %v1786, %v1807
  %v1812 = vadd.f32 %v1790, %v1807
  %v1813 = vadd.f32 %v1794, %v1807
  %v1814 = vadd.f32 %v1798, %v1807
  %v1815 = vadd.f32 %v1802, %v1807
  %vm1816 = vcmp.gt.f32.partialorder %v1808, 0.0
  %vm1817 = vcmp.gt.f32.partialorder %v1809, 0.0
  %vm1818 = vcmp.gt.f32.partialorder %v1810, 0.0
  %vm1819 = vcmp.gt.f32.partialorder %v1811, 0.0
  %vm1820 = vcmp.gt.f32.partialorder %v1812, 0.0
  %vm1821 = vcmp.gt.f32.partialorder %v1813, 0.0
  %vm1822 = vcmp.gt.f32.partialorder %v1814, 0.0
  %vm1823 = vcmp.gt.f32.partialorder %v1815, 0.0
  %v1824 = vmul.f32 %v1808, 0.2
  %v1825 = vmul.f32 %v1809, 0.2
  %v1826 = vmul.f32 %v1810, 0.2
  %v1827 = vmul.f32 %v1811, 0.2
  %v1828 = vmul.f32 %v1812, 0.2
  %v1829 = vmul.f32 %v1813, 0.2
  %v1830 = vmul.f32 %v1814, 0.2
  %v1831 = vmul.f32 %v1815, 0.2
  %v1832 = vsel %vm1816, %v1808, %v1824
  %v1833 = vsel %vm1817, %v1809, %v1825
  %v1834 = vsel %vm1818, %v1810, %v1826
  %v1835 = vsel %vm1819, %v1811, %v1827
  %v1836 = vsel %vm1820, %v1812, %v1828
  %v1837 = vsel %vm1821, %v1813, %v1829
  %v1838 = vsel %vm1822, %v1814, %v1830
  %v1839 = vsel %vm1823, %v1815, %v1831
  %v1840 = vadd.f32 %v1832, %v346
  %v1841 = vadd.f32 %v1833, %v347
  %v1842 = vadd.f32 %v1834, %v348
  %v1843 = vadd.f32 %v1835, %v349
  %v1844 = vadd.f32 %v1836, %v350
  %v1845 = vadd.f32 %v1837, %v351
  %v1846 = vadd.f32 %v1838, %v352
  %v1847 = vadd.f32 %v1839, %v353
  %v1848 = vsel %vm896, %v1840, -inf
  %1849 = vmax.xlane.f32.xlu0 %v1848
  %v1850 = vpop.xlane.xlu0 %1849
  %v1851 = vsel %vm896, %v1841, -inf
  %1852 = vmax.xlane.f32.xlu0 %v1851
  %v1853 = vpop.xlane.xlu0 %1852
  %v1854 = vsel %vm896, %v1842, -inf
  %1855 = vmax.xlane.f32.xlu0 %v1854
  %v1856 = vpop.xlane.xlu0 %1855
  %v1857 = vsel %vm896, %v1843, -inf
  %1858 = vmax.xlane.f32.xlu0 %v1857
  %v1859 = vpop.xlane.xlu0 %1858
  %v1860 = vsel %vm896, %v1844, -inf
  %1861 = vmax.xlane.f32.xlu0 %v1860
  %v1862 = vpop.xlane.xlu0 %1861
  %v1863 = vsel %vm896, %v1845, -inf
  %1864 = vmax.xlane.f32.xlu0 %v1863
  %v1865 = vpop.xlane.xlu0 %1864
  %v1866 = vsel %vm896, %v1846, -inf
  %1867 = vmax.xlane.f32.xlu0 %v1866
  %v1868 = vpop.xlane.xlu0 %1867
  %v1869 = vsel %vm896, %v1847, -inf
  %1870 = vmax.xlane.f32.xlu0 %v1869
  %v1871 = vpop.xlane.xlu0 %1870
  %v1872 = vsub.f32 %v1840, %v1850
  %v1873 = vsub.f32 %v1841, %v1853
  %v1874 = vsub.f32 %v1842, %v1856
  %v1875 = vsub.f32 %v1843, %v1859
  %v1876 = vsub.f32 %v1844, %v1862
  %v1877 = vsub.f32 %v1845, %v1865
  %v1878 = vsub.f32 %v1846, %v1868
  %v1879 = vsub.f32 %v1847, %v1871
  %v1880 = vmul.f32 %v1872, 1.442695
  %v1881 = vpow.pop %v1880
  %v1882 = vmul.f32 %v1873, 1.442695
  %v1883 = vpow.pop %v1882
  %v1884 = vmul.f32 %v1874, 1.442695
  %v1885 = vpow.pop %v1884
  %v1886 = vmul.f32 %v1875, 1.442695
  %v1887 = vpow.pop %v1886
  %v1888 = vmul.f32 %v1876, 1.442695
  %v1889 = vpow.pop %v1888
  %v1890 = vmul.f32 %v1877, 1.442695
  %v1891 = vpow.pop %v1890
  %v1892 = vmul.f32 %v1878, 1.442695
  %v1893 = vpow.pop %v1892
  %v1894 = vmul.f32 %v1879, 1.442695
  %v1895 = vpow.pop %v1894
  %v1896 = vmul.f32 %v1881, %v330
  %v1897 = vmul.f32 %v1883, %v331
  %v1898 = vmul.f32 %v1885, %v332
  %v1899 = vmul.f32 %v1887, %v333
  %v1900 = vmul.f32 %v1889, %v334
  %v1901 = vmul.f32 %v1891, %v335
  %v1902 = vmul.f32 %v1893, %v336
  %v1903 = vmul.f32 %v1895, %v337
  %v1904 = vsel %vm896, %v1896, 0.0
  %1905 = vadd.xlane.f32.xlu0 %v1904
  %v1906 = vpop.xlane.xlu0 %1905
  %v1907 = vsel %vm896, %v1897, 0.0
  %1908 = vadd.xlane.f32.xlu0 %v1907
  %v1909 = vpop.xlane.xlu0 %1908
  %v1910 = vsel %vm896, %v1898, 0.0
  %1911 = vadd.xlane.f32.xlu0 %v1910
  %v1912 = vpop.xlane.xlu0 %1911
  %v1913 = vsel %vm896, %v1899, 0.0
  %1914 = vadd.xlane.f32.xlu0 %v1913
  %v1915 = vpop.xlane.xlu0 %1914
  %v1916 = vsel %vm896, %v1900, 0.0
  %1917 = vadd.xlane.f32.xlu0 %v1916
  %v1918 = vpop.xlane.xlu0 %1917
  %v1919 = vsel %vm896, %v1901, 0.0
  %1920 = vadd.xlane.f32.xlu0 %v1919
  %v1921 = vpop.xlane.xlu0 %1920
  %v1922 = vsel %vm896, %v1902, 0.0
  %1923 = vadd.xlane.f32.xlu0 %v1922
  %v1924 = vpop.xlane.xlu0 %1923
  %v1925 = vsel %vm896, %v1903, 0.0
  %1926 = vadd.xlane.f32.xlu0 %v1925
  %v1927 = vpop.xlane.xlu0 %1926
  %v1928 = vrcp.pop %v1906
  %v1929 = vrcp.pop %v1909
  %v1930 = vrcp.pop %v1912
  %v1931 = vrcp.pop %v1915
  %v1932 = vrcp.pop %v1918
  %v1933 = vrcp.pop %v1921
  %v1934 = vrcp.pop %v1924
  %v1935 = vrcp.pop %v1927
  %v1936 = vmul.f32 %v1896, %v1928
  %v1937 = vmul.f32 %v1897, %v1929
  %v1938 = vmul.f32 %v1898, %v1930
  %v1939 = vmul.f32 %v1899, %v1931
  %v1940 = vmul.f32 %v1900, %v1932
  %v1941 = vmul.f32 %v1901, %v1933
  %v1942 = vmul.f32 %v1902, %v1934
  %v1943 = vmul.f32 %v1903, %v1935
  %1944 = vrot.lane.b32.xlu0 %v566, 104
  %v1945 = vpop.permute.xlu0 %1944
  %1946 = vrot.lane.b32.xlu0 %v571, 104
  %v1947 = vpop.permute.xlu0 %1946
  %1948 = vrot.lane.b32.xlu0 %v576, 104
  %v1949 = vpop.permute.xlu0 %1948
  %1950 = vrot.lane.b32.xlu0 %v581, 104
  %v1951 = vpop.permute.xlu0 %1950
  %1952 = vrot.lane.b32.xlu0 %v586, 104
  %v1953 = vpop.permute.xlu0 %1952
  %1954 = vrot.lane.b32.xlu0 %v591, 104
  %v1955 = vpop.permute.xlu0 %1954
  %1956 = vrot.lane.b32.xlu0 %v596, 104
  %v1957 = vpop.permute.xlu0 %1956
  %1958 = vrot.lane.b32.xlu0 %v601, 104
  %v1959 = vpop.permute.xlu0 %1958
  %v1969 = vsel %vm896, %v1936, 0
  %v1972 = vsel %vm896, %v1937, 0
  %v1975 = vsel %vm896, %v1938, 0
  %v1978 = vsel %vm896, %v1939, 0
  %v1981 = vsel %vm896, %v1940, 0
  %v1984 = vsel %vm896, %v1941, 0
  %v1987 = vsel %vm896, %v1942, 0
  %v1990 = vsel %vm896, %v1943, 0
  %1992 = vmatprep.subr.mxu0 0.0
  %1993 = vmatpush1.msra.mxu0 %v1945
  %1994 = vmatprep.subr.mxu0 0.0
  %1995 = vmatpush1.msra.mxu0 %v1947
  %1996 = vmatprep.subr.mxu0 0.0
  %1997 = vmatpush1.msra.mxu0 %v1949
  %1998 = vmatprep.subr.mxu0 0.0
  %1999 = vmatpush1.msra.mxu0 %v1951
  %2000 = vmatprep.subr.mxu0 0.0
  %2001 = vmatpush1.msra.mxu0 %v1953
  %2002 = vmatprep.subr.mxu0 0.0
  %2003 = vmatpush1.msra.mxu0 %v1955
  %2004 = vmatprep.subr.mxu0 0.0
  %2005 = vmatpush1.msra.mxu0 %v1957
  %2006 = vmatprep.subr.mxu0 0.0
  %2007 = vmatpush1.msra.mxu0 %v1959
  %2008 = vmatprep.subr.mxu0 0.0
  %2009 = vmatpush1.msra.mxu0 0.0
  %2010 = vmatprep.subr.mxu0 0.0
  %2011 = vmatpush1.msra.mxu0 0.0
  %2012 = vmatprep.subr.mxu0 0.0
  %2013 = vmatpush1.msra.mxu0 0.0
  %2014 = vmatprep.subr.mxu0 0.0
  %2015 = vmatpush1.msra.mxu0 0.0
  %2016 = vmatprep.subr.mxu0 0.0
  %2017 = vmatpush1.msra.mxu0 0.0
  %2018 = vmatprep.subr.mxu0 0.0
  %2019 = vmatpush1.msra.mxu0 0.0
  %2020 = vmatprep.subr.mxu0 0.0
  %2021 = vmatpush1.msra.mxu0 0.0
  %2022 = vmatprep.subr.mxu0 0.0
  %2023 = vmatpush1.msra.mxu0 0.0
  %2024 = vmatprep.subr.mxu0 0.0
  %2025 = vmatpush1.msra.mxu0 0.0
  %2026 = vmatprep.subr.mxu0 0.0
  %2027 = vmatpush1.msra.mxu0 0.0
  %2028 = vmatprep.subr.mxu0 0.0
  %2029 = vmatpush1.msra.mxu0 0.0
  %2030 = vmatprep.subr.mxu0 0.0
  %2031 = vmatpush1.msra.mxu0 0.0
  %2032 = vmatprep.subr.mxu0 0.0
  %2033 = vmatpush1.msra.mxu0 0.0
  %2034 = vmatprep.subr.mxu0 0.0
  %2035 = vmatpush1.msra.mxu0 0.0
  %2036 = vmatprep.subr.mxu0 0.0
  %2037 = vmatpush1.msra.mxu0 0.0
  %2038 = vmatprep.subr.mxu0 0.0
  %2039 = vmatpush1.msra.mxu0 0.0
  %2040 = vmatprep.subr.mxu0 0.0
  %2041 = vmatpush1.msra.mxu0 0.0
  %2042 = vmatprep.subr.mxu0 0.0
  %2043 = vmatpush1.msra.mxu0 0.0
  %2044 = vmatprep.subr.mxu0 0.0
  %2045 = vmatpush1.msra.mxu0 0.0
  %2046 = vmatprep.subr.mxu0 0.0
  %2047 = vmatpush1.msra.mxu0 0.0
  %2048 = vmatprep.subr.mxu0 0.0
  %2049 = vmatpush1.msra.mxu0 0.0
  %2050 = vmatprep.subr.mxu0 0.0
  %2051 = vmatpush1.msra.mxu0 0.0
  %2052 = vmatprep.subr.mxu0 0.0
  %2053 = vmatpush1.msra.mxu0 0.0
  %2054 = vmatprep.subr.mxu0 0.0
  %2055 = vmatpush1.msra.mxu0 0.0
  %2056 = vmatprep.mubr.f32.mxu0 0.0
  %2057 = vmatmul.mubr.f32.gmra.mrb[0].mxu0 %v1969
  %v2058 = vpop.f32.mrb[0].mxu0
  %v2059 = vadd.f32 0.0, %v2058
  %v2060 = vpop.f32.mrb[0].mxu0
  %2061 = vmatprep.mubr.f32.mxu0 0.0
  %2062 = vmatmul.mubr.f32.gmra.mrb[0].mxu0 %v1972
  %v2063 = vpop.f32.mrb[0].mxu0
  %v2064 = vadd.f32 0.0, %v2063
  %v2065 = vpop.f32.mrb[0].mxu0
  %2066 = vmatprep.mubr.f32.mxu0 0.0
  %2067 = vmatmul.mubr.f32.gmra.mrb[0].mxu0 %v1975
  %v2068 = vpop.f32.mrb[0].mxu0
  %v2069 = vadd.f32 0.0, %v2068
  %v2070 = vpop.f32.mrb[0].mxu0
  %2071 = vmatprep.mubr.f32.mxu0 0.0
  %2072 = vmatmul.mubr.f32.gmra.mrb[0].mxu0 %v1978
  %v2073 = vpop.f32.mrb[0].mxu0
  %v2074 = vadd.f32 0.0, %v2073
  %v2075 = vpop.f32.mrb[0].mxu0
  %2076 = vmatprep.mubr.f32.mxu0 0.0
  %2077 = vmatmul.mubr.f32.gmra.mrb[0].mxu0 %v1981
  %v2078 = vpop.f32.mrb[0].mxu0
  %v2079 = vadd.f32 0.0, %v2078
  %v2080 = vpop.f32.mrb[0].mxu0
  %2081 = vmatprep.mubr.f32.mxu0 0.0
  %2082 = vmatmul.mubr.f32.gmra.mrb[0].mxu0 %v1984
  %v2083 = vpop.f32.mrb[0].mxu0
  %v2084 = vadd.f32 0.0, %v2083
  %v2085 = vpop.f32.mrb[0].mxu0
  %2086 = vmatprep.mubr.f32.mxu0 0.0
  %2087 = vmatmul.mubr.f32.gmra.mrb[0].mxu0 %v1987
  %v2088 = vpop.f32.mrb[0].mxu0
  %v2089 = vadd.f32 0.0, %v2088
  %v2090 = vpop.f32.mrb[0].mxu0
  %2091 = vmatprep.mubr.f32.mxu0 0.0
  %2092 = vmatmul.mubr.f32.gmra.mrb[0].mxu0 %v1990
  %v2093 = vpop.f32.mrb[0].mxu0
  %v2094 = vadd.f32 0.0, %v2093
  %v2095 = vpop.f32.mrb[0].mxu0
  %2096 = vdwg.mxu0
  %2105 = vrot.lane.b32.xlu0 %v1409, 8
  %v2106 = vpop.permute.xlu0 %2105
  %2107 = vrot.lane.b32.xlu0 %v1414, 8
  %v2108 = vpop.permute.xlu0 %2107
  %2109 = vrot.lane.b32.xlu0 %v1419, 8
  %v2110 = vpop.permute.xlu0 %2109
  %2111 = vrot.lane.b32.xlu0 %v1424, 8
  %v2112 = vpop.permute.xlu0 %2111
  %2113 = vrot.lane.b32.xlu0 %v1429, 8
  %v2114 = vpop.permute.xlu0 %2113
  %2115 = vrot.lane.b32.xlu0 %v1434, 8
  %v2116 = vpop.permute.xlu0 %2115
  %2117 = vrot.lane.b32.xlu0 %v1439, 8
  %v2118 = vpop.permute.xlu0 %2117
  %2119 = vrot.lane.b32.xlu0 %v1444, 8
  %v2120 = vpop.permute.xlu0 %2119
  %2137 = vrot.lane.b32.xlu0 %v1734, 16
  %v2138 = vpop.permute.xlu0 %2137
  %2139 = vrot.lane.b32.xlu0 %v1739, 16
  %v2140 = vpop.permute.xlu0 %2139
  %2141 = vrot.lane.b32.xlu0 %v1744, 16
  %v2142 = vpop.permute.xlu0 %2141
  %2143 = vrot.lane.b32.xlu0 %v1749, 16
  %v2144 = vpop.permute.xlu0 %2143
  %2145 = vrot.lane.b32.xlu0 %v1754, 16
  %v2146 = vpop.permute.xlu0 %2145
  %2147 = vrot.lane.b32.xlu0 %v1759, 16
  %v2148 = vpop.permute.xlu0 %2147
  %2149 = vrot.lane.b32.xlu0 %v1764, 16
  %v2150 = vpop.permute.xlu0 %2149
  %2151 = vrot.lane.b32.xlu0 %v1769, 16
  %v2152 = vpop.permute.xlu0 %2151
  %2169 = vrot.lane.b32.xlu0 %v2059, 24
  %v2170 = vpop.permute.xlu0 %2169
  %2171 = vrot.lane.b32.xlu0 %v2064, 24
  %v2172 = vpop.permute.xlu0 %2171
  %2173 = vrot.lane.b32.xlu0 %v2069, 24
  %v2174 = vpop.permute.xlu0 %2173
  %2175 = vrot.lane.b32.xlu0 %v2074, 24
  %v2176 = vpop.permute.xlu0 %2175
  %2177 = vrot.lane.b32.xlu0 %v2079, 24
  %v2178 = vpop.permute.xlu0 %2177
  %2179 = vrot.lane.b32.xlu0 %v2084, 24
  %v2180 = vpop.permute.xlu0 %2179
  %2181 = vrot.lane.b32.xlu0 %v2089, 24
  %v2182 = vpop.permute.xlu0 %2181
  %2183 = vrot.lane.b32.xlu0 %v2094, 24
  %v2184 = vpop.permute.xlu0 %2183
  %vm2193 = vcmask 64512
  %v2194 = vsel %vm2193, %v1084, %v2106
  %v2195 = vsel %vm2193, %v1089, %v2108
  %v2196 = vsel %vm2193, %v1094, %v2110
  %v2197 = vsel %vm2193, %v1099, %v2112
  %v2198 = vsel %vm2193, %v1104, %v2114
  %v2199 = vsel %vm2193, %v1109, %v2116
  %v2200 = vsel %vm2193, %v1114, %v2118
  %v2201 = vsel %vm2193, %v1119, %v2120
  %v2202 = vsel %vm474, %v2194, %v2138
  %v2203 = vsel %vm474, %v2195, %v2140
  %v2204 = vsel %vm474, %v2196, %v2142
  %v2205 = vsel %vm474, %v2197, %v2144
  %v2206 = vsel %vm474, %v2198, %v2146
  %v2207 = vsel %vm474, %v2199, %v2148
  %v2208 = vsel %vm474, %v2200, %v2150
  %v2209 = vsel %vm474, %v2201, %v2152
  %vm2210 = vcmask 195584
  %v2211 = vsel %vm2210, %v2202, %v2170
  %v2212 = vsel %vm2210, %v2203, %v2172
  %v2213 = vsel %vm2210, %v2204, %v2174
  %v2214 = vsel %vm2210, %v2205, %v2176
  %v2215 = vsel %vm2210, %v2206, %v2178
  %v2216 = vsel %vm2210, %v2207, %v2180
  %v2217 = vsel %vm2210, %v2208, %v2182
  %v2218 = vsel %vm2210, %v2209, %v2184
  %v2219 = vld [vmem:[%s8] sm:$0x1]
  %v2221 = vlaneseq
  %v2222 = vshrl.u32 %v2221, 7
  %v2223 = vsub.s32 0, %v2222
  %v2224 = vrot.slane %v2219, %v2223
  %v2226 = vadd.f32 %v2211, %v2224
  %v2227 = vadd.f32 %v2212, %v2224
  %v2228 = vadd.f32 %v2213, %v2224
  %v2229 = vadd.f32 %v2214, %v2224
  %v2230 = vadd.f32 %v2215, %v2224
  %v2231 = vadd.f32 %v2216, %v2224
  %v2232 = vadd.f32 %v2217, %v2224
  %v2233 = vadd.f32 %v2218, %v2224
  %vm2234 = vcmp.gt.f32.partialorder %v2226, 0.0
  %vm2235 = vcmp.gt.f32.partialorder %v2227, 0.0
  %vm2236 = vcmp.gt.f32.partialorder %v2228, 0.0
  %vm2237 = vcmp.gt.f32.partialorder %v2229, 0.0
  %vm2238 = vcmp.gt.f32.partialorder %v2230, 0.0
  %vm2239 = vcmp.gt.f32.partialorder %v2231, 0.0
  %vm2240 = vcmp.gt.f32.partialorder %v2232, 0.0
  %vm2241 = vcmp.gt.f32.partialorder %v2233, 0.0
  %v2242 = vmul.f32 %v2226, 1.442695
  %v2243 = vpow.pop %v2242
  %v2244 = vmul.f32 %v2227, 1.442695
  %v2245 = vpow.pop %v2244
  %v2246 = vmul.f32 %v2228, 1.442695
  %v2247 = vpow.pop %v2246
  %v2248 = vmul.f32 %v2229, 1.442695
  %v2249 = vpow.pop %v2248
  %v2250 = vmul.f32 %v2230, 1.442695
  %v2251 = vpow.pop %v2250
  %v2252 = vmul.f32 %v2231, 1.442695
  %v2253 = vpow.pop %v2252
  %v2254 = vmul.f32 %v2232, 1.442695
  %v2255 = vpow.pop %v2254
  %v2256 = vmul.f32 %v2233, 1.442695
  %v2257 = vpow.pop %v2256
  %v2258 = vsub.f32 %v2243, 1.0
  %v2259 = vsub.f32 %v2245, 1.0
  %v2260 = vsub.f32 %v2247, 1.0
  %v2261 = vsub.f32 %v2249, 1.0
  %v2262 = vsub.f32 %v2251, 1.0
  %v2263 = vsub.f32 %v2253, 1.0
  %v2264 = vsub.f32 %v2255, 1.0
  %v2265 = vsub.f32 %v2257, 1.0
  %v2266 = vsel %vm2234, %v2226, %v2258
  %v2267 = vsel %vm2235, %v2227, %v2259
  %v2268 = vsel %vm2236, %v2228, %v2260
  %v2269 = vsel %vm2237, %v2229, %v2261
  %v2270 = vsel %vm2238, %v2230, %v2262
  %v2271 = vsel %vm2239, %v2231, %v2263
  %v2272 = vsel %vm2240, %v2232, %v2264
  %v2273 = vsel %vm2241, %v2233, %v2265
  %v2274 = vld [vmem:[%s9] sm:$0xff]
  %v2275 = vld [vmem:[%s9 + $0x8] sm:$0xff]
  %v2276 = vld [vmem:[%s9 + $0x10] sm:$0xff]
  %v2277 = vld [vmem:[%s9 + $0x18] sm:$0xff]
  %v2279 = vsel %vm608, %v2266, 0
  %v2282 = vsel %vm608, %v2267, 0
  %v2285 = vsel %vm608, %v2268, 0
  %v2288 = vsel %vm608, %v2269, 0
  %v2291 = vsel %vm608, %v2270, 0
  %v2294 = vsel %vm608, %v2271, 0
  %v2297 = vsel %vm608, %v2272, 0
  %v2300 = vsel %vm608, %v2273, 0
  %2302 = vmatprep.subr.mxu0 0.0
  %2303 = vmatpush1.msra.mxu0 %v2274
  %2304 = vmatprep.subr.mxu0 0.0
  %2305 = vmatpush1.msra.mxu0 %v2275
  %2306 = vmatprep.subr.mxu0 0.0
  %2307 = vmatpush1.msra.mxu0 %v2276
  %2308 = vmatprep.subr.mxu0 0.0
  %2309 = vmatpush1.msra.mxu0 %v2277
  %2310 = vmatprep.subr.mxu0 0.0
  %2311 = vmatpush1.msra.mxu0 0.0
  %2312 = vmatprep.subr.mxu0 0.0
  %2313 = vmatpush1.msra.mxu0 0.0
  %2314 = vmatprep.subr.mxu0 0.0
  %2315 = vmatpush1.msra.mxu0 0.0
  %2316 = vmatprep.subr.mxu0 0.0
  %2317 = vmatpush1.msra.mxu0 0.0
  %2318 = vmatprep.subr.mxu0 0.0
  %2319 = vmatpush1.msra.mxu0 0.0
  %2320 = vmatprep.subr.mxu0 0.0
  %2321 = vmatpush1.msra.mxu0 0.0
  %2322 = vmatprep.subr.mxu0 0.0
  %2323 = vmatpush1.msra.mxu0 0.0
  %2324 = vmatprep.subr.mxu0 0.0
  %2325 = vmatpush1.msra.mxu0 0.0
  %2326 = vmatprep.subr.mxu0 0.0
  %2327 = vmatpush1.msra.mxu0 0.0
  %2328 = vmatprep.subr.mxu0 0.0
  %2329 = vmatpush1.msra.mxu0 0.0
  %2330 = vmatprep.subr.mxu0 0.0
  %2331 = vmatpush1.msra.mxu0 0.0
  %2332 = vmatprep.subr.mxu0 0.0
  %2333 = vmatpush1.msra.mxu0 0.0
  %2334 = vmatprep.subr.mxu0 0.0
  %2335 = vmatpush1.msra.mxu0 0.0
  %2336 = vmatprep.subr.mxu0 0.0
  %2337 = vmatpush1.msra.mxu0 0.0
  %2338 = vmatprep.subr.mxu0 0.0
  %2339 = vmatpush1.msra.mxu0 0.0
  %2340 = vmatprep.subr.mxu0 0.0
  %2341 = vmatpush1.msra.mxu0 0.0
  %2342 = vmatprep.subr.mxu0 0.0
  %2343 = vmatpush1.msra.mxu0 0.0
  %2344 = vmatprep.subr.mxu0 0.0
  %2345 = vmatpush1.msra.mxu0 0.0
  %2346 = vmatprep.subr.mxu0 0.0
  %2347 = vmatpush1.msra.mxu0 0.0
  %2348 = vmatprep.subr.mxu0 0.0
  %2349 = vmatpush1.msra.mxu0 0.0
  %2350 = vmatprep.subr.mxu0 0.0
  %2351 = vmatpush1.msra.mxu0 0.0
  %2352 = vmatprep.subr.mxu0 0.0
  %2353 = vmatpush1.msra.mxu0 0.0
  %2354 = vmatprep.subr.mxu0 0.0
  %2355 = vmatpush1.msra.mxu0 0.0
  %2356 = vmatprep.subr.mxu0 0.0
  %2357 = vmatpush1.msra.mxu0 0.0
  %2358 = vmatprep.subr.mxu0 0.0
  %2359 = vmatpush1.msra.mxu0 0.0
  %2360 = vmatprep.subr.mxu0 0.0
  %2361 = vmatpush1.msra.mxu0 0.0
  %2362 = vmatprep.subr.mxu0 0.0
  %2363 = vmatpush1.msra.mxu0 0.0
  %2364 = vmatprep.subr.mxu0 0.0
  %2365 = vmatpush1.msra.mxu0 0.0
  %2366 = vmatprep.mubr.f32.mxu0 0.0
  %2367 = vmatmul.mubr.f32.gmra.mrb[0].mxu0 %v2279
  %v2368 = vpop.f32.mrb[0].mxu0
  %v2369 = vadd.f32 0.0, %v2368
  %v2370 = vpop.f32.mrb[0].mxu0
  %2371 = vmatprep.mubr.f32.mxu0 0.0
  %2372 = vmatmul.mubr.f32.gmra.mrb[0].mxu0 %v2282
  %v2373 = vpop.f32.mrb[0].mxu0
  %v2374 = vadd.f32 0.0, %v2373
  %v2375 = vpop.f32.mrb[0].mxu0
  %2376 = vmatprep.mubr.f32.mxu0 0.0
  %2377 = vmatmul.mubr.f32.gmra.mrb[0].mxu0 %v2285
  %v2378 = vpop.f32.mrb[0].mxu0
  %v2379 = vadd.f32 0.0, %v2378
  %v2380 = vpop.f32.mrb[0].mxu0
  %2381 = vmatprep.mubr.f32.mxu0 0.0
  %2382 = vmatmul.mubr.f32.gmra.mrb[0].mxu0 %v2288
  %v2383 = vpop.f32.mrb[0].mxu0
  %v2384 = vadd.f32 0.0, %v2383
  %v2385 = vpop.f32.mrb[0].mxu0
  %2386 = vmatprep.mubr.f32.mxu0 0.0
  %2387 = vmatmul.mubr.f32.gmra.mrb[0].mxu0 %v2291
  %v2388 = vpop.f32.mrb[0].mxu0
  %v2389 = vadd.f32 0.0, %v2388
  %v2390 = vpop.f32.mrb[0].mxu0
  %2391 = vmatprep.mubr.f32.mxu0 0.0
  %2392 = vmatmul.mubr.f32.gmra.mrb[0].mxu0 %v2294
  %v2393 = vpop.f32.mrb[0].mxu0
  %v2394 = vadd.f32 0.0, %v2393
  %v2395 = vpop.f32.mrb[0].mxu0
  %2396 = vmatprep.mubr.f32.mxu0 0.0
  %2397 = vmatmul.mubr.f32.gmra.mrb[0].mxu0 %v2297
  %v2398 = vpop.f32.mrb[0].mxu0
  %v2399 = vadd.f32 0.0, %v2398
  %v2400 = vpop.f32.mrb[0].mxu0
  %2401 = vmatprep.mubr.f32.mxu0 0.0
  %2402 = vmatmul.mubr.f32.gmra.mrb[0].mxu0 %v2300
  %v2403 = vpop.f32.mrb[0].mxu0
  %v2404 = vadd.f32 0.0, %v2403
  %v2405 = vpop.f32.mrb[0].mxu0
  %2406 = vdwg.mxu0
  %v2407 = vld [vmem:[%s10] sm:$0xff]
  %v2408 = vld [vmem:[%s10 + $0x8] sm:$0xff]
  %v2409 = vld [vmem:[%s10 + $0x10] sm:$0xff]
  %v2410 = vld [vmem:[%s10 + $0x18] sm:$0xff]
  %v2412 = vsel %vm608, %v2369, 0
  %v2415 = vsel %vm608, %v2374, 0
  %v2418 = vsel %vm608, %v2379, 0
  %v2421 = vsel %vm608, %v2384, 0
  %v2424 = vsel %vm608, %v2389, 0
  %v2427 = vsel %vm608, %v2394, 0
  %v2430 = vsel %vm608, %v2399, 0
  %v2433 = vsel %vm608, %v2404, 0
  %2435 = vmatprep.subr.mxu0 0.0
  %2436 = vmatpush1.msra.mxu0 %v2407
  %2437 = vmatprep.subr.mxu0 0.0
  %2438 = vmatpush1.msra.mxu0 %v2408
  %2439 = vmatprep.subr.mxu0 0.0
  %2440 = vmatpush1.msra.mxu0 %v2409
  %2441 = vmatprep.subr.mxu0 0.0
  %2442 = vmatpush1.msra.mxu0 %v2410
  %2443 = vmatprep.subr.mxu0 0.0
  %2444 = vmatpush1.msra.mxu0 0.0
  %2445 = vmatprep.subr.mxu0 0.0
  %2446 = vmatpush1.msra.mxu0 0.0
  %2447 = vmatprep.subr.mxu0 0.0
  %2448 = vmatpush1.msra.mxu0 0.0
  %2449 = vmatprep.subr.mxu0 0.0
  %2450 = vmatpush1.msra.mxu0 0.0
  %2451 = vmatprep.subr.mxu0 0.0
  %2452 = vmatpush1.msra.mxu0 0.0
  %2453 = vmatprep.subr.mxu0 0.0
  %2454 = vmatpush1.msra.mxu0 0.0
  %2455 = vmatprep.subr.mxu0 0.0
  %2456 = vmatpush1.msra.mxu0 0.0
  %2457 = vmatprep.subr.mxu0 0.0
  %2458 = vmatpush1.msra.mxu0 0.0
  %2459 = vmatprep.subr.mxu0 0.0
  %2460 = vmatpush1.msra.mxu0 0.0
  %2461 = vmatprep.subr.mxu0 0.0
  %2462 = vmatpush1.msra.mxu0 0.0
  %2463 = vmatprep.subr.mxu0 0.0
  %2464 = vmatpush1.msra.mxu0 0.0
  %2465 = vmatprep.subr.mxu0 0.0
  %2466 = vmatpush1.msra.mxu0 0.0
  %2467 = vmatprep.subr.mxu0 0.0
  %2468 = vmatpush1.msra.mxu0 0.0
  %2469 = vmatprep.subr.mxu0 0.0
  %2470 = vmatpush1.msra.mxu0 0.0
  %2471 = vmatprep.subr.mxu0 0.0
  %2472 = vmatpush1.msra.mxu0 0.0
  %2473 = vmatprep.subr.mxu0 0.0
  %2474 = vmatpush1.msra.mxu0 0.0
  %2475 = vmatprep.subr.mxu0 0.0
  %2476 = vmatpush1.msra.mxu0 0.0
  %2477 = vmatprep.subr.mxu0 0.0
  %2478 = vmatpush1.msra.mxu0 0.0
  %2479 = vmatprep.subr.mxu0 0.0
  %2480 = vmatpush1.msra.mxu0 0.0
  %2481 = vmatprep.subr.mxu0 0.0
  %2482 = vmatpush1.msra.mxu0 0.0
  %2483 = vmatprep.subr.mxu0 0.0
  %2484 = vmatpush1.msra.mxu0 0.0
  %2485 = vmatprep.subr.mxu0 0.0
  %2486 = vmatpush1.msra.mxu0 0.0
  %2487 = vmatprep.subr.mxu0 0.0
  %2488 = vmatpush1.msra.mxu0 0.0
  %2489 = vmatprep.subr.mxu0 0.0
  %2490 = vmatpush1.msra.mxu0 0.0
  %2491 = vmatprep.subr.mxu0 0.0
  %2492 = vmatpush1.msra.mxu0 0.0
  %2493 = vmatprep.subr.mxu0 0.0
  %2494 = vmatpush1.msra.mxu0 0.0
  %2495 = vmatprep.subr.mxu0 0.0
  %2496 = vmatpush1.msra.mxu0 0.0
  %2497 = vmatprep.subr.mxu0 0.0
  %2498 = vmatpush1.msra.mxu0 0.0
  %2499 = vmatprep.mubr.f32.mxu0 0.0
  %2500 = vmatmul.mubr.f32.gmra.mrb[0].mxu0 %v2412
  %v2501 = vpop.f32.mrb[0].mxu0
  %v2502 = vadd.f32 0.0, %v2501
  %v2503 = vpop.f32.mrb[0].mxu0
  %2504 = vmatprep.mubr.f32.mxu0 0.0
  %2505 = vmatmul.mubr.f32.gmra.mrb[0].mxu0 %v2415
  %v2506 = vpop.f32.mrb[0].mxu0
  %v2507 = vadd.f32 0.0, %v2506
  %v2508 = vpop.f32.mrb[0].mxu0
  %2509 = vmatprep.mubr.f32.mxu0 0.0
  %2510 = vmatmul.mubr.f32.gmra.mrb[0].mxu0 %v2418
  %v2511 = vpop.f32.mrb[0].mxu0
  %v2512 = vadd.f32 0.0, %v2511
  %v2513 = vpop.f32.mrb[0].mxu0
  %2514 = vmatprep.mubr.f32.mxu0 0.0
  %2515 = vmatmul.mubr.f32.gmra.mrb[0].mxu0 %v2421
  %v2516 = vpop.f32.mrb[0].mxu0
  %v2517 = vadd.f32 0.0, %v2516
  %v2518 = vpop.f32.mrb[0].mxu0
  %2519 = vmatprep.mubr.f32.mxu0 0.0
  %2520 = vmatmul.mubr.f32.gmra.mrb[0].mxu0 %v2424
  %v2521 = vpop.f32.mrb[0].mxu0
  %v2522 = vadd.f32 0.0, %v2521
  %v2523 = vpop.f32.mrb[0].mxu0
  %2524 = vmatprep.mubr.f32.mxu0 0.0
  %2525 = vmatmul.mubr.f32.gmra.mrb[0].mxu0 %v2427
  %v2526 = vpop.f32.mrb[0].mxu0
  %v2527 = vadd.f32 0.0, %v2526
  %v2528 = vpop.f32.mrb[0].mxu0
  %2529 = vmatprep.mubr.f32.mxu0 0.0
  %2530 = vmatmul.mubr.f32.gmra.mrb[0].mxu0 %v2430
  %v2531 = vpop.f32.mrb[0].mxu0
  %v2532 = vadd.f32 0.0, %v2531
  %v2533 = vpop.f32.mrb[0].mxu0
  %2534 = vmatprep.mubr.f32.mxu0 0.0
  %2535 = vmatmul.mubr.f32.gmra.mrb[0].mxu0 %v2433
  %v2536 = vpop.f32.mrb[0].mxu0
  %v2537 = vadd.f32 0.0, %v2536
  %v2538 = vpop.f32.mrb[0].mxu0
  %2539 = vdwg.mxu0
  %v2540 = vld [vmem:[%s11] sm:$0xf]
  %v2542 = vsel %vm608, %v2540, 0
  %2544 = vmatprep.subr.mxu0 0.0
  %2545 = vmatpush1.xpose.msra.mxu0 %v2412
  %2546 = vmatprep.subr.mxu0 0.0
  %2547 = vmatpush1.xpose.msra.mxu0 %v2415
  %2548 = vmatprep.subr.mxu0 0.0
  %2549 = vmatpush1.xpose.msra.mxu0 %v2418
  %2550 = vmatprep.subr.mxu0 0.0
  %2551 = vmatpush1.xpose.msra.mxu0 %v2421
  %2552 = vmatprep.subr.mxu0 0.0
  %2553 = vmatpush1.xpose.msra.mxu0 %v2424
  %2554 = vmatprep.subr.mxu0 0.0
  %2555 = vmatpush1.xpose.msra.mxu0 %v2427
  %2556 = vmatprep.subr.mxu0 0.0
  %2557 = vmatpush1.xpose.msra.mxu0 %v2430
  %2558 = vmatprep.subr.mxu0 0.0
  %2559 = vmatpush1.xpose.msra.mxu0 %v2433
  %2560 = vmatprep.subr.mxu0 0.0
  %2561 = vmatpush1.xpose.msra.mxu0 0.0
  %2562 = vmatprep.subr.mxu0 0.0
  %2563 = vmatpush1.xpose.msra.mxu0 0.0
  %2564 = vmatprep.subr.mxu0 0.0
  %2565 = vmatpush1.xpose.msra.mxu0 0.0
  %2566 = vmatprep.subr.mxu0 0.0
  %2567 = vmatpush1.xpose.msra.mxu0 0.0
  %2568 = vmatprep.subr.mxu0 0.0
  %2569 = vmatpush1.xpose.msra.mxu0 0.0
  %2570 = vmatprep.subr.mxu0 0.0
  %2571 = vmatpush1.xpose.msra.mxu0 0.0
  %2572 = vmatprep.subr.mxu0 0.0
  %2573 = vmatpush1.xpose.msra.mxu0 0.0
  %2574 = vmatprep.subr.mxu0 0.0
  %2575 = vmatpush1.xpose.msra.mxu0 0.0
  %2576 = vmatprep.subr.mxu0 0.0
  %2577 = vmatpush1.xpose.msra.mxu0 0.0
  %2578 = vmatprep.subr.mxu0 0.0
  %2579 = vmatpush1.xpose.msra.mxu0 0.0
  %2580 = vmatprep.subr.mxu0 0.0
  %2581 = vmatpush1.xpose.msra.mxu0 0.0
  %2582 = vmatprep.subr.mxu0 0.0
  %2583 = vmatpush1.xpose.msra.mxu0 0.0
  %2584 = vmatprep.subr.mxu0 0.0
  %2585 = vmatpush1.xpose.msra.mxu0 0.0
  %2586 = vmatprep.subr.mxu0 0.0
  %2587 = vmatpush1.xpose.msra.mxu0 0.0
  %2588 = vmatprep.subr.mxu0 0.0
  %2589 = vmatpush1.xpose.msra.mxu0 0.0
  %2590 = vmatprep.subr.mxu0 0.0
  %2591 = vmatpush1.xpose.msra.mxu0 0.0
  %2592 = vmatprep.subr.mxu0 0.0
  %2593 = vmatpush1.xpose.msra.mxu0 0.0
  %2594 = vmatprep.subr.mxu0 0.0
  %2595 = vmatpush1.xpose.msra.mxu0 0.0
  %2596 = vmatprep.subr.mxu0 0.0
  %2597 = vmatpush1.xpose.msra.mxu0 0.0
  %2598 = vmatprep.subr.mxu0 0.0
  %2599 = vmatpush1.xpose.msra.mxu0 0.0
  %2600 = vmatprep.subr.mxu0 0.0
  %2601 = vmatpush1.xpose.msra.mxu0 0.0
  %2602 = vmatprep.subr.mxu0 0.0
  %2603 = vmatpush1.xpose.msra.mxu0 0.0
  %2604 = vmatprep.subr.mxu0 0.0
  %2605 = vmatpush1.xpose.msra.mxu0 0.0
  %2606 = vmatprep.subr.mxu0 0.0
  %2607 = vmatpush1.xpose.msra.mxu0 0.0
  %2608 = vmatprep.mubr.f32.mxu0 0.0
  %2609 = vmatmul.mubr.f32.gmra.mrb[0].mxu0 %v2542
  %v2610 = vpop.f32.mrb[0].mxu0
  %v2611 = vadd.f32 0.0, %v2610
  %v2612 = vpop.f32.mrb[0].mxu0
  %2613 = vdwg.mxu0
  %2615 = vset.pattern.permute.xlu0 0
  %2616 = vperm.xlu0 %2615, %v2502
  %v2617 = vpop.permute.xlu0 %2616
  %2620 = vset.pattern.permute.xlu0 0
  %2621 = vperm.xlu0 %2620, %v2507
  %v2622 = vpop.permute.xlu0 %2621
  %2625 = vset.pattern.permute.xlu0 0
  %2626 = vperm.xlu0 %2625, %v2512
  %v2627 = vpop.permute.xlu0 %2626
  %2630 = vset.pattern.permute.xlu0 0
  %2631 = vperm.xlu0 %2630, %v2517
  %v2632 = vpop.permute.xlu0 %2631
  %2635 = vset.pattern.permute.xlu0 0
  %2636 = vperm.xlu0 %2635, %v2522
  %v2637 = vpop.permute.xlu0 %2636
  %2640 = vset.pattern.permute.xlu0 0
  %2641 = vperm.xlu0 %2640, %v2527
  %v2642 = vpop.permute.xlu0 %2641
  %2645 = vset.pattern.permute.xlu0 0
  %2646 = vperm.xlu0 %2645, %v2532
  %v2647 = vpop.permute.xlu0 %2646
  %2650 = vset.pattern.permute.xlu0 0
  %2651 = vperm.xlu0 %2650, %v2537
  %v2652 = vpop.permute.xlu0 %2651
  %v2654 = vlaneseq
  %v2655 = vshrl.u32 %v2654, 7
  %v2656 = vsub.s32 0, %v2655
  %v2657 = vrot.slane %v2611, %v2656
  %v2658 = vadd.f32 %v2617, %v2657
  %v2659 = vadd.f32 %v2622, %v2657
  %v2660 = vadd.f32 %v2627, %v2657
  %v2661 = vadd.f32 %v2632, %v2657
  %v2662 = vadd.f32 %v2637, %v2657
  %v2663 = vadd.f32 %v2642, %v2657
  %v2664 = vadd.f32 %v2647, %v2657
  %v2665 = vadd.f32 %v2652, %v2657
  %vm2666 = vcmp.gt.f32.partialorder %v2658, 0.0
  %vm2667 = vcmp.gt.f32.partialorder %v2659, 0.0
  %vm2668 = vcmp.gt.f32.partialorder %v2660, 0.0
  %vm2669 = vcmp.gt.f32.partialorder %v2661, 0.0
  %vm2670 = vcmp.gt.f32.partialorder %v2662, 0.0
  %vm2671 = vcmp.gt.f32.partialorder %v2663, 0.0
  %vm2672 = vcmp.gt.f32.partialorder %v2664, 0.0
  %vm2673 = vcmp.gt.f32.partialorder %v2665, 0.0
  %v2674 = vmul.f32 %v2658, 0.2
  %v2675 = vmul.f32 %v2659, 0.2
  %v2676 = vmul.f32 %v2660, 0.2
  %v2677 = vmul.f32 %v2661, 0.2
  %v2678 = vmul.f32 %v2662, 0.2
  %v2679 = vmul.f32 %v2663, 0.2
  %v2680 = vmul.f32 %v2664, 0.2
  %v2681 = vmul.f32 %v2665, 0.2
  %v2682 = vsel %vm2666, %v2658, %v2674
  %v2683 = vsel %vm2667, %v2659, %v2675
  %v2684 = vsel %vm2668, %v2660, %v2676
  %v2685 = vsel %vm2669, %v2661, %v2677
  %v2686 = vsel %vm2670, %v2662, %v2678
  %v2687 = vsel %vm2671, %v2663, %v2679
  %v2688 = vsel %vm2672, %v2664, %v2680
  %v2689 = vsel %vm2673, %v2665, %v2681
  %v2690 = vadd.f32 %v2682, %v346
  %v2691 = vadd.f32 %v2683, %v347
  %v2692 = vadd.f32 %v2684, %v348
  %v2693 = vadd.f32 %v2685, %v349
  %v2694 = vadd.f32 %v2686, %v350
  %v2695 = vadd.f32 %v2687, %v351
  %v2696 = vadd.f32 %v2688, %v352
  %v2697 = vadd.f32 %v2689, %v353
  %v2698 = vsel %vm896, %v2690, -inf
  %2699 = vmax.xlane.f32.xlu0 %v2698
  %v2700 = vpop.xlane.xlu0 %2699
  %v2701 = vsel %vm896, %v2691, -inf
  %2702 = vmax.xlane.f32.xlu0 %v2701
  %v2703 = vpop.xlane.xlu0 %2702
  %v2704 = vsel %vm896, %v2692, -inf
  %2705 = vmax.xlane.f32.xlu0 %v2704
  %v2706 = vpop.xlane.xlu0 %2705
  %v2707 = vsel %vm896, %v2693, -inf
  %2708 = vmax.xlane.f32.xlu0 %v2707
  %v2709 = vpop.xlane.xlu0 %2708
  %v2710 = vsel %vm896, %v2694, -inf
  %2711 = vmax.xlane.f32.xlu0 %v2710
  %v2712 = vpop.xlane.xlu0 %2711
  %v2713 = vsel %vm896, %v2695, -inf
  %2714 = vmax.xlane.f32.xlu0 %v2713
  %v2715 = vpop.xlane.xlu0 %2714
  %v2716 = vsel %vm896, %v2696, -inf
  %2717 = vmax.xlane.f32.xlu0 %v2716
  %v2718 = vpop.xlane.xlu0 %2717
  %v2719 = vsel %vm896, %v2697, -inf
  %2720 = vmax.xlane.f32.xlu0 %v2719
  %v2721 = vpop.xlane.xlu0 %2720
  %v2722 = vsub.f32 %v2690, %v2700
  %v2723 = vsub.f32 %v2691, %v2703
  %v2724 = vsub.f32 %v2692, %v2706
  %v2725 = vsub.f32 %v2693, %v2709
  %v2726 = vsub.f32 %v2694, %v2712
  %v2727 = vsub.f32 %v2695, %v2715
  %v2728 = vsub.f32 %v2696, %v2718
  %v2729 = vsub.f32 %v2697, %v2721
  %v2730 = vmul.f32 %v2722, 1.442695
  %v2731 = vpow.pop %v2730
  %v2732 = vmul.f32 %v2723, 1.442695
  %v2733 = vpow.pop %v2732
  %v2734 = vmul.f32 %v2724, 1.442695
  %v2735 = vpow.pop %v2734
  %v2736 = vmul.f32 %v2725, 1.442695
  %v2737 = vpow.pop %v2736
  %v2738 = vmul.f32 %v2726, 1.442695
  %v2739 = vpow.pop %v2738
  %v2740 = vmul.f32 %v2727, 1.442695
  %v2741 = vpow.pop %v2740
  %v2742 = vmul.f32 %v2728, 1.442695
  %v2743 = vpow.pop %v2742
  %v2744 = vmul.f32 %v2729, 1.442695
  %v2745 = vpow.pop %v2744
  %v2746 = vmul.f32 %v2731, %v330
  %v2747 = vmul.f32 %v2733, %v331
  %v2748 = vmul.f32 %v2735, %v332
  %v2749 = vmul.f32 %v2737, %v333
  %v2750 = vmul.f32 %v2739, %v334
  %v2751 = vmul.f32 %v2741, %v335
  %v2752 = vmul.f32 %v2743, %v336
  %v2753 = vmul.f32 %v2745, %v337
  %v2754 = vsel %vm896, %v2746, 0.0
  %2755 = vadd.xlane.f32.xlu0 %v2754
  %v2756 = vpop.xlane.xlu0 %2755
  %v2757 = vsel %vm896, %v2747, 0.0
  %2758 = vadd.xlane.f32.xlu0 %v2757
  %v2759 = vpop.xlane.xlu0 %2758
  %v2760 = vsel %vm896, %v2748, 0.0
  %2761 = vadd.xlane.f32.xlu0 %v2760
  %v2762 = vpop.xlane.xlu0 %2761
  %v2763 = vsel %vm896, %v2749, 0.0
  %2764 = vadd.xlane.f32.xlu0 %v2763
  %v2765 = vpop.xlane.xlu0 %2764
  %v2766 = vsel %vm896, %v2750, 0.0
  %2767 = vadd.xlane.f32.xlu0 %v2766
  %v2768 = vpop.xlane.xlu0 %2767
  %v2769 = vsel %vm896, %v2751, 0.0
  %2770 = vadd.xlane.f32.xlu0 %v2769
  %v2771 = vpop.xlane.xlu0 %2770
  %v2772 = vsel %vm896, %v2752, 0.0
  %2773 = vadd.xlane.f32.xlu0 %v2772
  %v2774 = vpop.xlane.xlu0 %2773
  %v2775 = vsel %vm896, %v2753, 0.0
  %2776 = vadd.xlane.f32.xlu0 %v2775
  %v2777 = vpop.xlane.xlu0 %2776
  %v2778 = vrcp.pop %v2756
  %v2779 = vrcp.pop %v2759
  %v2780 = vrcp.pop %v2762
  %v2781 = vrcp.pop %v2765
  %v2782 = vrcp.pop %v2768
  %v2783 = vrcp.pop %v2771
  %v2784 = vrcp.pop %v2774
  %v2785 = vrcp.pop %v2777
  %v2786 = vmul.f32 %v2746, %v2778
  %v2787 = vmul.f32 %v2747, %v2779
  %v2788 = vmul.f32 %v2748, %v2780
  %v2789 = vmul.f32 %v2749, %v2781
  %v2790 = vmul.f32 %v2750, %v2782
  %v2791 = vmul.f32 %v2751, %v2783
  %v2792 = vmul.f32 %v2752, %v2784
  %v2793 = vmul.f32 %v2753, %v2785
  %v2795 = vsel %vm896, %v2786, 0
  %v2798 = vsel %vm896, %v2787, 0
  %v2801 = vsel %vm896, %v2788, 0
  %v2804 = vsel %vm896, %v2789, 0
  %v2807 = vsel %vm896, %v2790, 0
  %v2810 = vsel %vm896, %v2791, 0
  %v2813 = vsel %vm896, %v2792, 0
  %v2816 = vsel %vm896, %v2793, 0
  %2818 = vmatprep.subr.mxu0 0.0
  %2819 = vmatpush1.msra.mxu0 %v2369
  %2820 = vmatprep.subr.mxu0 0.0
  %2821 = vmatpush1.msra.mxu0 %v2374
  %2822 = vmatprep.subr.mxu0 0.0
  %2823 = vmatpush1.msra.mxu0 %v2379
  %2824 = vmatprep.subr.mxu0 0.0
  %2825 = vmatpush1.msra.mxu0 %v2384
  %2826 = vmatprep.subr.mxu0 0.0
  %2827 = vmatpush1.msra.mxu0 %v2389
  %2828 = vmatprep.subr.mxu0 0.0
  %2829 = vmatpush1.msra.mxu0 %v2394
  %2830 = vmatprep.subr.mxu0 0.0
  %2831 = vmatpush1.msra.mxu0 %v2399
  %2832 = vmatprep.subr.mxu0 0.0
  %2833 = vmatpush1.msra.mxu0 %v2404
  %2834 = vmatprep.subr.mxu0 0.0
  %2835 = vmatpush1.msra.mxu0 0.0
  %2836 = vmatprep.subr.mxu0 0.0
  %2837 = vmatpush1.msra.mxu0 0.0
  %2838 = vmatprep.subr.mxu0 0.0
  %2839 = vmatpush1.msra.mxu0 0.0
  %2840 = vmatprep.subr.mxu0 0.0
  %2841 = vmatpush1.msra.mxu0 0.0
  %2842 = vmatprep.subr.mxu0 0.0
  %2843 = vmatpush1.msra.mxu0 0.0
  %2844 = vmatprep.subr.mxu0 0.0
  %2845 = vmatpush1.msra.mxu0 0.0
  %2846 = vmatprep.subr.mxu0 0.0
  %2847 = vmatpush1.msra.mxu0 0.0
  %2848 = vmatprep.subr.mxu0 0.0
  %2849 = vmatpush1.msra.mxu0 0.0
  %2850 = vmatprep.subr.mxu0 0.0
  %2851 = vmatpush1.msra.mxu0 0.0
  %2852 = vmatprep.subr.mxu0 0.0
  %2853 = vmatpush1.msra.mxu0 0.0
  %2854 = vmatprep.subr.mxu0 0.0
  %2855 = vmatpush1.msra.mxu0 0.0
  %2856 = vmatprep.subr.mxu0 0.0
  %2857 = vmatpush1.msra.mxu0 0.0
  %2858 = vmatprep.subr.mxu0 0.0
  %2859 = vmatpush1.msra.mxu0 0.0
  %2860 = vmatprep.subr.mxu0 0.0
  %2861 = vmatpush1.msra.mxu0 0.0
  %2862 = vmatprep.subr.mxu0 0.0
  %2863 = vmatpush1.msra.mxu0 0.0
  %2864 = vmatprep.subr.mxu0 0.0
  %2865 = vmatpush1.msra.mxu0 0.0
  %2866 = vmatprep.subr.mxu0 0.0
  %2867 = vmatpush1.msra.mxu0 0.0
  %2868 = vmatprep.subr.mxu0 0.0
  %2869 = vmatpush1.msra.mxu0 0.0
  %2870 = vmatprep.subr.mxu0 0.0
  %2871 = vmatpush1.msra.mxu0 0.0
  %2872 = vmatprep.subr.mxu0 0.0
  %2873 = vmatpush1.msra.mxu0 0.0
  %2874 = vmatprep.subr.mxu0 0.0
  %2875 = vmatpush1.msra.mxu0 0.0
  %2876 = vmatprep.subr.mxu0 0.0
  %2877 = vmatpush1.msra.mxu0 0.0
  %2878 = vmatprep.subr.mxu0 0.0
  %2879 = vmatpush1.msra.mxu0 0.0
  %2880 = vmatprep.subr.mxu0 0.0
  %2881 = vmatpush1.msra.mxu0 0.0
  %2882 = vmatprep.mubr.f32.mxu0 0.0
  %2883 = vmatmul.mubr.f32.gmra.mrb[0].mxu0 %v2795
  %v2884 = vpop.f32.mrb[0].mxu0
  %v2885 = vadd.f32 0.0, %v2884
  %v2886 = vpop.f32.mrb[0].mxu0
  %2887 = vmatprep.mubr.f32.mxu0 0.0
  %2888 = vmatmul.mubr.f32.gmra.mrb[0].mxu0 %v2798
  %v2889 = vpop.f32.mrb[0].mxu0
  %v2890 = vadd.f32 0.0, %v2889
  %v2891 = vpop.f32.mrb[0].mxu0
  %2892 = vmatprep.mubr.f32.mxu0 0.0
  %2893 = vmatmul.mubr.f32.gmra.mrb[0].mxu0 %v2801
  %v2894 = vpop.f32.mrb[0].mxu0
  %v2895 = vadd.f32 0.0, %v2894
  %v2896 = vpop.f32.mrb[0].mxu0
  %2897 = vmatprep.mubr.f32.mxu0 0.0
  %2898 = vmatmul.mubr.f32.gmra.mrb[0].mxu0 %v2804
  %v2899 = vpop.f32.mrb[0].mxu0
  %v2900 = vadd.f32 0.0, %v2899
  %v2901 = vpop.f32.mrb[0].mxu0
  %2902 = vmatprep.mubr.f32.mxu0 0.0
  %2903 = vmatmul.mubr.f32.gmra.mrb[0].mxu0 %v2807
  %v2904 = vpop.f32.mrb[0].mxu0
  %v2905 = vadd.f32 0.0, %v2904
  %v2906 = vpop.f32.mrb[0].mxu0
  %2907 = vmatprep.mubr.f32.mxu0 0.0
  %2908 = vmatmul.mubr.f32.gmra.mrb[0].mxu0 %v2810
  %v2909 = vpop.f32.mrb[0].mxu0
  %v2910 = vadd.f32 0.0, %v2909
  %v2911 = vpop.f32.mrb[0].mxu0
  %2912 = vmatprep.mubr.f32.mxu0 0.0
  %2913 = vmatmul.mubr.f32.gmra.mrb[0].mxu0 %v2813
  %v2914 = vpop.f32.mrb[0].mxu0
  %v2915 = vadd.f32 0.0, %v2914
  %v2916 = vpop.f32.mrb[0].mxu0
  %2917 = vmatprep.mubr.f32.mxu0 0.0
  %2918 = vmatmul.mubr.f32.gmra.mrb[0].mxu0 %v2816
  %v2919 = vpop.f32.mrb[0].mxu0
  %v2920 = vadd.f32 0.0, %v2919
  %v2921 = vpop.f32.mrb[0].mxu0
  %2922 = vdwg.mxu0
  %2923 = vset.pattern.permute.xlu0 1
  %2924 = vperm.xlu0 %2923, %v2502
  %v2925 = vpop.permute.xlu0 %2924
  %2927 = vset.pattern.permute.xlu0 1
  %2928 = vperm.xlu0 %2927, %v2507
  %v2929 = vpop.permute.xlu0 %2928
  %2931 = vset.pattern.permute.xlu0 1
  %2932 = vperm.xlu0 %2931, %v2512
  %v2933 = vpop.permute.xlu0 %2932
  %2935 = vset.pattern.permute.xlu0 1
  %2936 = vperm.xlu0 %2935, %v2517
  %v2937 = vpop.permute.xlu0 %2936
  %2939 = vset.pattern.permute.xlu0 1
  %2940 = vperm.xlu0 %2939, %v2522
  %v2941 = vpop.permute.xlu0 %2940
  %2943 = vset.pattern.permute.xlu0 1
  %2944 = vperm.xlu0 %2943, %v2527
  %v2945 = vpop.permute.xlu0 %2944
  %2947 = vset.pattern.permute.xlu0 1
  %2948 = vperm.xlu0 %2947, %v2532
  %v2949 = vpop.permute.xlu0 %2948
  %2951 = vset.pattern.permute.xlu0 1
  %2952 = vperm.xlu0 %2951, %v2537
  %v2953 = vpop.permute.xlu0 %2952
  %v2955 = vlaneseq
  %v2956 = vshrl.u32 %v2955, 7
  %v2957 = vsub.s32 1, %v2956
  %v2958 = vrot.slane %v2611, %v2957
  %v2959 = vadd.f32 %v2925, %v2958
  %v2960 = vadd.f32 %v2929, %v2958
  %v2961 = vadd.f32 %v2933, %v2958
  %v2962 = vadd.f32 %v2937, %v2958
  %v2963 = vadd.f32 %v2941, %v2958
  %v2964 = vadd.f32 %v2945, %v2958
  %v2965 = vadd.f32 %v2949, %v2958
  %v2966 = vadd.f32 %v2953, %v2958
  %vm2967 = vcmp.gt.f32.partialorder %v2959, 0.0
  %vm2968 = vcmp.gt.f32.partialorder %v2960, 0.0
  %vm2969 = vcmp.gt.f32.partialorder %v2961, 0.0
  %vm2970 = vcmp.gt.f32.partialorder %v2962, 0.0
  %vm2971 = vcmp.gt.f32.partialorder %v2963, 0.0
  %vm2972 = vcmp.gt.f32.partialorder %v2964, 0.0
  %vm2973 = vcmp.gt.f32.partialorder %v2965, 0.0
  %vm2974 = vcmp.gt.f32.partialorder %v2966, 0.0
  %v2975 = vmul.f32 %v2959, 0.2
  %v2976 = vmul.f32 %v2960, 0.2
  %v2977 = vmul.f32 %v2961, 0.2
  %v2978 = vmul.f32 %v2962, 0.2
  %v2979 = vmul.f32 %v2963, 0.2
  %v2980 = vmul.f32 %v2964, 0.2
  %v2981 = vmul.f32 %v2965, 0.2
  %v2982 = vmul.f32 %v2966, 0.2
  %v2983 = vsel %vm2967, %v2959, %v2975
  %v2984 = vsel %vm2968, %v2960, %v2976
  %v2985 = vsel %vm2969, %v2961, %v2977
  %v2986 = vsel %vm2970, %v2962, %v2978
  %v2987 = vsel %vm2971, %v2963, %v2979
  %v2988 = vsel %vm2972, %v2964, %v2980
  %v2989 = vsel %vm2973, %v2965, %v2981
  %v2990 = vsel %vm2974, %v2966, %v2982
  %v2991 = vadd.f32 %v2983, %v346
  %v2992 = vadd.f32 %v2984, %v347
  %v2993 = vadd.f32 %v2985, %v348
  %v2994 = vadd.f32 %v2986, %v349
  %v2995 = vadd.f32 %v2987, %v350
  %v2996 = vadd.f32 %v2988, %v351
  %v2997 = vadd.f32 %v2989, %v352
  %v2998 = vadd.f32 %v2990, %v353
  %v2999 = vsel %vm896, %v2991, -inf
  %3000 = vmax.xlane.f32.xlu0 %v2999
  %v3001 = vpop.xlane.xlu0 %3000
  %v3002 = vsel %vm896, %v2992, -inf
  %3003 = vmax.xlane.f32.xlu0 %v3002
  %v3004 = vpop.xlane.xlu0 %3003
  %v3005 = vsel %vm896, %v2993, -inf
  %3006 = vmax.xlane.f32.xlu0 %v3005
  %v3007 = vpop.xlane.xlu0 %3006
  %v3008 = vsel %vm896, %v2994, -inf
  %3009 = vmax.xlane.f32.xlu0 %v3008
  %v3010 = vpop.xlane.xlu0 %3009
  %v3011 = vsel %vm896, %v2995, -inf
  %3012 = vmax.xlane.f32.xlu0 %v3011
  %v3013 = vpop.xlane.xlu0 %3012
  %v3014 = vsel %vm896, %v2996, -inf
  %3015 = vmax.xlane.f32.xlu0 %v3014
  %v3016 = vpop.xlane.xlu0 %3015
  %v3017 = vsel %vm896, %v2997, -inf
  %3018 = vmax.xlane.f32.xlu0 %v3017
  %v3019 = vpop.xlane.xlu0 %3018
  %v3020 = vsel %vm896, %v2998, -inf
  %3021 = vmax.xlane.f32.xlu0 %v3020
  %v3022 = vpop.xlane.xlu0 %3021
  %v3023 = vsub.f32 %v2991, %v3001
  %v3024 = vsub.f32 %v2992, %v3004
  %v3025 = vsub.f32 %v2993, %v3007
  %v3026 = vsub.f32 %v2994, %v3010
  %v3027 = vsub.f32 %v2995, %v3013
  %v3028 = vsub.f32 %v2996, %v3016
  %v3029 = vsub.f32 %v2997, %v3019
  %v3030 = vsub.f32 %v2998, %v3022
  %v3031 = vmul.f32 %v3023, 1.442695
  %v3032 = vpow.pop %v3031
  %v3033 = vmul.f32 %v3024, 1.442695
  %v3034 = vpow.pop %v3033
  %v3035 = vmul.f32 %v3025, 1.442695
  %v3036 = vpow.pop %v3035
  %v3037 = vmul.f32 %v3026, 1.442695
  %v3038 = vpow.pop %v3037
  %v3039 = vmul.f32 %v3027, 1.442695
  %v3040 = vpow.pop %v3039
  %v3041 = vmul.f32 %v3028, 1.442695
  %v3042 = vpow.pop %v3041
  %v3043 = vmul.f32 %v3029, 1.442695
  %v3044 = vpow.pop %v3043
  %v3045 = vmul.f32 %v3030, 1.442695
  %v3046 = vpow.pop %v3045
  %v3047 = vmul.f32 %v3032, %v330
  %v3048 = vmul.f32 %v3034, %v331
  %v3049 = vmul.f32 %v3036, %v332
  %v3050 = vmul.f32 %v3038, %v333
  %v3051 = vmul.f32 %v3040, %v334
  %v3052 = vmul.f32 %v3042, %v335
  %v3053 = vmul.f32 %v3044, %v336
  %v3054 = vmul.f32 %v3046, %v337
  %v3055 = vsel %vm896, %v3047, 0.0
  %3056 = vadd.xlane.f32.xlu0 %v3055
  %v3057 = vpop.xlane.xlu0 %3056
  %v3058 = vsel %vm896, %v3048, 0.0
  %3059 = vadd.xlane.f32.xlu0 %v3058
  %v3060 = vpop.xlane.xlu0 %3059
  %v3061 = vsel %vm896, %v3049, 0.0
  %3062 = vadd.xlane.f32.xlu0 %v3061
  %v3063 = vpop.xlane.xlu0 %3062
  %v3064 = vsel %vm896, %v3050, 0.0
  %3065 = vadd.xlane.f32.xlu0 %v3064
  %v3066 = vpop.xlane.xlu0 %3065
  %v3067 = vsel %vm896, %v3051, 0.0
  %3068 = vadd.xlane.f32.xlu0 %v3067
  %v3069 = vpop.xlane.xlu0 %3068
  %v3070 = vsel %vm896, %v3052, 0.0
  %3071 = vadd.xlane.f32.xlu0 %v3070
  %v3072 = vpop.xlane.xlu0 %3071
  %v3073 = vsel %vm896, %v3053, 0.0
  %3074 = vadd.xlane.f32.xlu0 %v3073
  %v3075 = vpop.xlane.xlu0 %3074
  %v3076 = vsel %vm896, %v3054, 0.0
  %3077 = vadd.xlane.f32.xlu0 %v3076
  %v3078 = vpop.xlane.xlu0 %3077
  %v3079 = vrcp.pop %v3057
  %v3080 = vrcp.pop %v3060
  %v3081 = vrcp.pop %v3063
  %v3082 = vrcp.pop %v3066
  %v3083 = vrcp.pop %v3069
  %v3084 = vrcp.pop %v3072
  %v3085 = vrcp.pop %v3075
  %v3086 = vrcp.pop %v3078
  %v3087 = vmul.f32 %v3047, %v3079
  %v3088 = vmul.f32 %v3048, %v3080
  %v3089 = vmul.f32 %v3049, %v3081
  %v3090 = vmul.f32 %v3050, %v3082
  %v3091 = vmul.f32 %v3051, %v3083
  %v3092 = vmul.f32 %v3052, %v3084
  %v3093 = vmul.f32 %v3053, %v3085
  %v3094 = vmul.f32 %v3054, %v3086
  %3095 = vrot.lane.b32.xlu0 %v2369, 120
  %v3096 = vpop.permute.xlu0 %3095
  %3097 = vrot.lane.b32.xlu0 %v2374, 120
  %v3098 = vpop.permute.xlu0 %3097
  %3099 = vrot.lane.b32.xlu0 %v2379, 120
  %v3100 = vpop.permute.xlu0 %3099
  %3101 = vrot.lane.b32.xlu0 %v2384, 120
  %v3102 = vpop.permute.xlu0 %3101
  %3103 = vrot.lane.b32.xlu0 %v2389, 120
  %v3104 = vpop.permute.xlu0 %3103
  %3105 = vrot.lane.b32.xlu0 %v2394, 120
  %v3106 = vpop.permute.xlu0 %3105
  %3107 = vrot.lane.b32.xlu0 %v2399, 120
  %v3108 = vpop.permute.xlu0 %3107
  %3109 = vrot.lane.b32.xlu0 %v2404, 120
  %v3110 = vpop.permute.xlu0 %3109
  %v3120 = vsel %vm896, %v3087, 0
  %v3123 = vsel %vm896, %v3088, 0
  %v3126 = vsel %vm896, %v3089, 0
  %v3129 = vsel %vm896, %v3090, 0
  %v3132 = vsel %vm896, %v3091, 0
  %v3135 = vsel %vm896, %v3092, 0
  %v3138 = vsel %vm896, %v3093, 0
  %v3141 = vsel %vm896, %v3094, 0
  %3143 = vmatprep.subr.mxu0 0.0
  %3144 = vmatpush1.msra.mxu0 %v3096
  %3145 = vmatprep.subr.mxu0 0.0
  %3146 = vmatpush1.msra.mxu0 %v3098
  %3147 = vmatprep.subr.mxu0 0.0
  %3148 = vmatpush1.msra.mxu0 %v3100
  %3149 = vmatprep.subr.mxu0 0.0
  %3150 = vmatpush1.msra.mxu0 %v3102
  %3151 = vmatprep.subr.mxu0 0.0
  %3152 = vmatpush1.msra.mxu0 %v3104
  %3153 = vmatprep.subr.mxu0 0.0
  %3154 = vmatpush1.msra.mxu0 %v3106
  %3155 = vmatprep.subr.mxu0 0.0
  %3156 = vmatpush1.msra.mxu0 %v3108
  %3157 = vmatprep.subr.mxu0 0.0
  %3158 = vmatpush1.msra.mxu0 %v3110
  %3159 = vmatprep.subr.mxu0 0.0
  %3160 = vmatpush1.msra.mxu0 0.0
  %3161 = vmatprep.subr.mxu0 0.0
  %3162 = vmatpush1.msra.mxu0 0.0
  %3163 = vmatprep.subr.mxu0 0.0
  %3164 = vmatpush1.msra.mxu0 0.0
  %3165 = vmatprep.subr.mxu0 0.0
  %3166 = vmatpush1.msra.mxu0 0.0
  %3167 = vmatprep.subr.mxu0 0.0
  %3168 = vmatpush1.msra.mxu0 0.0
  %3169 = vmatprep.subr.mxu0 0.0
  %3170 = vmatpush1.msra.mxu0 0.0
  %3171 = vmatprep.subr.mxu0 0.0
  %3172 = vmatpush1.msra.mxu0 0.0
  %3173 = vmatprep.subr.mxu0 0.0
  %3174 = vmatpush1.msra.mxu0 0.0
  %3175 = vmatprep.subr.mxu0 0.0
  %3176 = vmatpush1.msra.mxu0 0.0
  %3177 = vmatprep.subr.mxu0 0.0
  %3178 = vmatpush1.msra.mxu0 0.0
  %3179 = vmatprep.subr.mxu0 0.0
  %3180 = vmatpush1.msra.mxu0 0.0
  %3181 = vmatprep.subr.mxu0 0.0
  %3182 = vmatpush1.msra.mxu0 0.0
  %3183 = vmatprep.subr.mxu0 0.0
  %3184 = vmatpush1.msra.mxu0 0.0
  %3185 = vmatprep.subr.mxu0 0.0
  %3186 = vmatpush1.msra.mxu0 0.0
  %3187 = vmatprep.subr.mxu0 0.0
  %3188 = vmatpush1.msra.mxu0 0.0
  %3189 = vmatprep.subr.mxu0 0.0
  %3190 = vmatpush1.msra.mxu0 0.0
  %3191 = vmatprep.subr.mxu0 0.0
  %3192 = vmatpush1.msra.mxu0 0.0
  %3193 = vmatprep.subr.mxu0 0.0
  %3194 = vmatpush1.msra.mxu0 0.0
  %3195 = vmatprep.subr.mxu0 0.0
  %3196 = vmatpush1.msra.mxu0 0.0
  %3197 = vmatprep.subr.mxu0 0.0
  %3198 = vmatpush1.msra.mxu0 0.0
  %3199 = vmatprep.subr.mxu0 0.0
  %3200 = vmatpush1.msra.mxu0 0.0
  %3201 = vmatprep.subr.mxu0 0.0
  %3202 = vmatpush1.msra.mxu0 0.0
  %3203 = vmatprep.subr.mxu0 0.0
  %3204 = vmatpush1.msra.mxu0 0.0
  %3205 = vmatprep.subr.mxu0 0.0
  %3206 = vmatpush1.msra.mxu0 0.0
  %3207 = vmatprep.mubr.f32.mxu0 0.0
  %3208 = vmatmul.mubr.f32.gmra.mrb[0].mxu0 %v3120
  %v3209 = vpop.f32.mrb[0].mxu0
  %v3210 = vadd.f32 0.0, %v3209
  %v3211 = vpop.f32.mrb[0].mxu0
  %3212 = vmatprep.mubr.f32.mxu0 0.0
  %3213 = vmatmul.mubr.f32.gmra.mrb[0].mxu0 %v3123
  %v3214 = vpop.f32.mrb[0].mxu0
  %v3215 = vadd.f32 0.0, %v3214
  %v3216 = vpop.f32.mrb[0].mxu0
  %3217 = vmatprep.mubr.f32.mxu0 0.0
  %3218 = vmatmul.mubr.f32.gmra.mrb[0].mxu0 %v3126
  %v3219 = vpop.f32.mrb[0].mxu0
  %v3220 = vadd.f32 0.0, %v3219
  %v3221 = vpop.f32.mrb[0].mxu0
  %3222 = vmatprep.mubr.f32.mxu0 0.0
  %3223 = vmatmul.mubr.f32.gmra.mrb[0].mxu0 %v3129
  %v3224 = vpop.f32.mrb[0].mxu0
  %v3225 = vadd.f32 0.0, %v3224
  %v3226 = vpop.f32.mrb[0].mxu0
  %3227 = vmatprep.mubr.f32.mxu0 0.0
  %3228 = vmatmul.mubr.f32.gmra.mrb[0].mxu0 %v3132
  %v3229 = vpop.f32.mrb[0].mxu0
  %v3230 = vadd.f32 0.0, %v3229
  %v3231 = vpop.f32.mrb[0].mxu0
  %3232 = vmatprep.mubr.f32.mxu0 0.0
  %3233 = vmatmul.mubr.f32.gmra.mrb[0].mxu0 %v3135
  %v3234 = vpop.f32.mrb[0].mxu0
  %v3235 = vadd.f32 0.0, %v3234
  %v3236 = vpop.f32.mrb[0].mxu0
  %3237 = vmatprep.mubr.f32.mxu0 0.0
  %3238 = vmatmul.mubr.f32.gmra.mrb[0].mxu0 %v3138
  %v3239 = vpop.f32.mrb[0].mxu0
  %v3240 = vadd.f32 0.0, %v3239
  %v3241 = vpop.f32.mrb[0].mxu0
  %3242 = vmatprep.mubr.f32.mxu0 0.0
  %3243 = vmatmul.mubr.f32.gmra.mrb[0].mxu0 %v3141
  %v3244 = vpop.f32.mrb[0].mxu0
  %v3245 = vadd.f32 0.0, %v3244
  %v3246 = vpop.f32.mrb[0].mxu0
  %3247 = vdwg.mxu0
  %3248 = vset.pattern.permute.xlu0 2
  %3249 = vperm.xlu0 %3248, %v2502
  %v3250 = vpop.permute.xlu0 %3249
  %3252 = vset.pattern.permute.xlu0 2
  %3253 = vperm.xlu0 %3252, %v2507
  %v3254 = vpop.permute.xlu0 %3253
  %3256 = vset.pattern.permute.xlu0 2
  %3257 = vperm.xlu0 %3256, %v2512
  %v3258 = vpop.permute.xlu0 %3257
  %3260 = vset.pattern.permute.xlu0 2
  %3261 = vperm.xlu0 %3260, %v2517
  %v3262 = vpop.permute.xlu0 %3261
  %3264 = vset.pattern.permute.xlu0 2
  %3265 = vperm.xlu0 %3264, %v2522
  %v3266 = vpop.permute.xlu0 %3265
  %3268 = vset.pattern.permute.xlu0 2
  %3269 = vperm.xlu0 %3268, %v2527
  %v3270 = vpop.permute.xlu0 %3269
  %3272 = vset.pattern.permute.xlu0 2
  %3273 = vperm.xlu0 %3272, %v2532
  %v3274 = vpop.permute.xlu0 %3273
  %3276 = vset.pattern.permute.xlu0 2
  %3277 = vperm.xlu0 %3276, %v2537
  %v3278 = vpop.permute.xlu0 %3277
  %v3280 = vlaneseq
  %v3281 = vshrl.u32 %v3280, 7
  %v3282 = vsub.s32 2, %v3281
  %v3283 = vrot.slane %v2611, %v3282
  %v3284 = vadd.f32 %v3250, %v3283
  %v3285 = vadd.f32 %v3254, %v3283
  %v3286 = vadd.f32 %v3258, %v3283
  %v3287 = vadd.f32 %v3262, %v3283
  %v3288 = vadd.f32 %v3266, %v3283
  %v3289 = vadd.f32 %v3270, %v3283
  %v3290 = vadd.f32 %v3274, %v3283
  %v3291 = vadd.f32 %v3278, %v3283
  %vm3292 = vcmp.gt.f32.partialorder %v3284, 0.0
  %vm3293 = vcmp.gt.f32.partialorder %v3285, 0.0
  %vm3294 = vcmp.gt.f32.partialorder %v3286, 0.0
  %vm3295 = vcmp.gt.f32.partialorder %v3287, 0.0
  %vm3296 = vcmp.gt.f32.partialorder %v3288, 0.0
  %vm3297 = vcmp.gt.f32.partialorder %v3289, 0.0
  %vm3298 = vcmp.gt.f32.partialorder %v3290, 0.0
  %vm3299 = vcmp.gt.f32.partialorder %v3291, 0.0
  %v3300 = vmul.f32 %v3284, 0.2
  %v3301 = vmul.f32 %v3285, 0.2
  %v3302 = vmul.f32 %v3286, 0.2
  %v3303 = vmul.f32 %v3287, 0.2
  %v3304 = vmul.f32 %v3288, 0.2
  %v3305 = vmul.f32 %v3289, 0.2
  %v3306 = vmul.f32 %v3290, 0.2
  %v3307 = vmul.f32 %v3291, 0.2
  %v3308 = vsel %vm3292, %v3284, %v3300
  %v3309 = vsel %vm3293, %v3285, %v3301
  %v3310 = vsel %vm3294, %v3286, %v3302
  %v3311 = vsel %vm3295, %v3287, %v3303
  %v3312 = vsel %vm3296, %v3288, %v3304
  %v3313 = vsel %vm3297, %v3289, %v3305
  %v3314 = vsel %vm3298, %v3290, %v3306
  %v3315 = vsel %vm3299, %v3291, %v3307
  %v3316 = vadd.f32 %v3308, %v346
  %v3317 = vadd.f32 %v3309, %v347
  %v3318 = vadd.f32 %v3310, %v348
  %v3319 = vadd.f32 %v3311, %v349
  %v3320 = vadd.f32 %v3312, %v350
  %v3321 = vadd.f32 %v3313, %v351
  %v3322 = vadd.f32 %v3314, %v352
  %v3323 = vadd.f32 %v3315, %v353
  %v3324 = vsel %vm896, %v3316, -inf
  %3325 = vmax.xlane.f32.xlu0 %v3324
  %v3326 = vpop.xlane.xlu0 %3325
  %v3327 = vsel %vm896, %v3317, -inf
  %3328 = vmax.xlane.f32.xlu0 %v3327
  %v3329 = vpop.xlane.xlu0 %3328
  %v3330 = vsel %vm896, %v3318, -inf
  %3331 = vmax.xlane.f32.xlu0 %v3330
  %v3332 = vpop.xlane.xlu0 %3331
  %v3333 = vsel %vm896, %v3319, -inf
  %3334 = vmax.xlane.f32.xlu0 %v3333
  %v3335 = vpop.xlane.xlu0 %3334
  %v3336 = vsel %vm896, %v3320, -inf
  %3337 = vmax.xlane.f32.xlu0 %v3336
  %v3338 = vpop.xlane.xlu0 %3337
  %v3339 = vsel %vm896, %v3321, -inf
  %3340 = vmax.xlane.f32.xlu0 %v3339
  %v3341 = vpop.xlane.xlu0 %3340
  %v3342 = vsel %vm896, %v3322, -inf
  %3343 = vmax.xlane.f32.xlu0 %v3342
  %v3344 = vpop.xlane.xlu0 %3343
  %v3345 = vsel %vm896, %v3323, -inf
  %3346 = vmax.xlane.f32.xlu0 %v3345
  %v3347 = vpop.xlane.xlu0 %3346
  %v3348 = vsub.f32 %v3316, %v3326
  %v3349 = vsub.f32 %v3317, %v3329
  %v3350 = vsub.f32 %v3318, %v3332
  %v3351 = vsub.f32 %v3319, %v3335
  %v3352 = vsub.f32 %v3320, %v3338
  %v3353 = vsub.f32 %v3321, %v3341
  %v3354 = vsub.f32 %v3322, %v3344
  %v3355 = vsub.f32 %v3323, %v3347
  %v3356 = vmul.f32 %v3348, 1.442695
  %v3357 = vpow.pop %v3356
  %v3358 = vmul.f32 %v3349, 1.442695
  %v3359 = vpow.pop %v3358
  %v3360 = vmul.f32 %v3350, 1.442695
  %v3361 = vpow.pop %v3360
  %v3362 = vmul.f32 %v3351, 1.442695
  %v3363 = vpow.pop %v3362
  %v3364 = vmul.f32 %v3352, 1.442695
  %v3365 = vpow.pop %v3364
  %v3366 = vmul.f32 %v3353, 1.442695
  %v3367 = vpow.pop %v3366
  %v3368 = vmul.f32 %v3354, 1.442695
  %v3369 = vpow.pop %v3368
  %v3370 = vmul.f32 %v3355, 1.442695
  %v3371 = vpow.pop %v3370
  %v3372 = vmul.f32 %v3357, %v330
  %v3373 = vmul.f32 %v3359, %v331
  %v3374 = vmul.f32 %v3361, %v332
  %v3375 = vmul.f32 %v3363, %v333
  %v3376 = vmul.f32 %v3365, %v334
  %v3377 = vmul.f32 %v3367, %v335
  %v3378 = vmul.f32 %v3369, %v336
  %v3379 = vmul.f32 %v3371, %v337
  %v3380 = vsel %vm896, %v3372, 0.0
  %3381 = vadd.xlane.f32.xlu0 %v3380
  %v3382 = vpop.xlane.xlu0 %3381
  %v3383 = vsel %vm896, %v3373, 0.0
  %3384 = vadd.xlane.f32.xlu0 %v3383
  %v3385 = vpop.xlane.xlu0 %3384
  %v3386 = vsel %vm896, %v3374, 0.0
  %3387 = vadd.xlane.f32.xlu0 %v3386
  %v3388 = vpop.xlane.xlu0 %3387
  %v3389 = vsel %vm896, %v3375, 0.0
  %3390 = vadd.xlane.f32.xlu0 %v3389
  %v3391 = vpop.xlane.xlu0 %3390
  %v3392 = vsel %vm896, %v3376, 0.0
  %3393 = vadd.xlane.f32.xlu0 %v3392
  %v3394 = vpop.xlane.xlu0 %3393
  %v3395 = vsel %vm896, %v3377, 0.0
  %3396 = vadd.xlane.f32.xlu0 %v3395
  %v3397 = vpop.xlane.xlu0 %3396
  %v3398 = vsel %vm896, %v3378, 0.0
  %3399 = vadd.xlane.f32.xlu0 %v3398
  %v3400 = vpop.xlane.xlu0 %3399
  %v3401 = vsel %vm896, %v3379, 0.0
  %3402 = vadd.xlane.f32.xlu0 %v3401
  %v3403 = vpop.xlane.xlu0 %3402
  %v3404 = vrcp.pop %v3382
  %v3405 = vrcp.pop %v3385
  %v3406 = vrcp.pop %v3388
  %v3407 = vrcp.pop %v3391
  %v3408 = vrcp.pop %v3394
  %v3409 = vrcp.pop %v3397
  %v3410 = vrcp.pop %v3400
  %v3411 = vrcp.pop %v3403
  %v3412 = vmul.f32 %v3372, %v3404
  %v3413 = vmul.f32 %v3373, %v3405
  %v3414 = vmul.f32 %v3374, %v3406
  %v3415 = vmul.f32 %v3375, %v3407
  %v3416 = vmul.f32 %v3376, %v3408
  %v3417 = vmul.f32 %v3377, %v3409
  %v3418 = vmul.f32 %v3378, %v3410
  %v3419 = vmul.f32 %v3379, %v3411
  %3420 = vrot.lane.b32.xlu0 %v2369, 112
  %v3421 = vpop.permute.xlu0 %3420
  %3422 = vrot.lane.b32.xlu0 %v2374, 112
  %v3423 = vpop.permute.xlu0 %3422
  %3424 = vrot.lane.b32.xlu0 %v2379, 112
  %v3425 = vpop.permute.xlu0 %3424
  %3426 = vrot.lane.b32.xlu0 %v2384, 112
  %v3427 = vpop.permute.xlu0 %3426
  %3428 = vrot.lane.b32.xlu0 %v2389, 112
  %v3429 = vpop.permute.xlu0 %3428
  %3430 = vrot.lane.b32.xlu0 %v2394, 112
  %v3431 = vpop.permute.xlu0 %3430
  %3432 = vrot.lane.b32.xlu0 %v2399, 112
  %v3433 = vpop.permute.xlu0 %3432
  %3434 = vrot.lane.b32.xlu0 %v2404, 112
  %v3435 = vpop.permute.xlu0 %3434
  %v3445 = vsel %vm896, %v3412, 0
  %v3448 = vsel %vm896, %v3413, 0
  %v3451 = vsel %vm896, %v3414, 0
  %v3454 = vsel %vm896, %v3415, 0
  %v3457 = vsel %vm896, %v3416, 0
  %v3460 = vsel %vm896, %v3417, 0
  %v3463 = vsel %vm896, %v3418, 0
  %v3466 = vsel %vm896, %v3419, 0
  %3468 = vmatprep.subr.mxu0 0.0
  %3469 = vmatpush1.msra.mxu0 %v3421
  %3470 = vmatprep.subr.mxu0 0.0
  %3471 = vmatpush1.msra.mxu0 %v3423
  %3472 = vmatprep.subr.mxu0 0.0
  %3473 = vmatpush1.msra.mxu0 %v3425
  %3474 = vmatprep.subr.mxu0 0.0
  %3475 = vmatpush1.msra.mxu0 %v3427
  %3476 = vmatprep.subr.mxu0 0.0
  %3477 = vmatpush1.msra.mxu0 %v3429
  %3478 = vmatprep.subr.mxu0 0.0
  %3479 = vmatpush1.msra.mxu0 %v3431
  %3480 = vmatprep.subr.mxu0 0.0
  %3481 = vmatpush1.msra.mxu0 %v3433
  %3482 = vmatprep.subr.mxu0 0.0
  %3483 = vmatpush1.msra.mxu0 %v3435
  %3484 = vmatprep.subr.mxu0 0.0
  %3485 = vmatpush1.msra.mxu0 0.0
  %3486 = vmatprep.subr.mxu0 0.0
  %3487 = vmatpush1.msra.mxu0 0.0
  %3488 = vmatprep.subr.mxu0 0.0
  %3489 = vmatpush1.msra.mxu0 0.0
  %3490 = vmatprep.subr.mxu0 0.0
  %3491 = vmatpush1.msra.mxu0 0.0
  %3492 = vmatprep.subr.mxu0 0.0
  %3493 = vmatpush1.msra.mxu0 0.0
  %3494 = vmatprep.subr.mxu0 0.0
  %3495 = vmatpush1.msra.mxu0 0.0
  %3496 = vmatprep.subr.mxu0 0.0
  %3497 = vmatpush1.msra.mxu0 0.0
  %3498 = vmatprep.subr.mxu0 0.0
  %3499 = vmatpush1.msra.mxu0 0.0
  %3500 = vmatprep.subr.mxu0 0.0
  %3501 = vmatpush1.msra.mxu0 0.0
  %3502 = vmatprep.subr.mxu0 0.0
  %3503 = vmatpush1.msra.mxu0 0.0
  %3504 = vmatprep.subr.mxu0 0.0
  %3505 = vmatpush1.msra.mxu0 0.0
  %3506 = vmatprep.subr.mxu0 0.0
  %3507 = vmatpush1.msra.mxu0 0.0
  %3508 = vmatprep.subr.mxu0 0.0
  %3509 = vmatpush1.msra.mxu0 0.0
  %3510 = vmatprep.subr.mxu0 0.0
  %3511 = vmatpush1.msra.mxu0 0.0
  %3512 = vmatprep.subr.mxu0 0.0
  %3513 = vmatpush1.msra.mxu0 0.0
  %3514 = vmatprep.subr.mxu0 0.0
  %3515 = vmatpush1.msra.mxu0 0.0
  %3516 = vmatprep.subr.mxu0 0.0
  %3517 = vmatpush1.msra.mxu0 0.0
  %3518 = vmatprep.subr.mxu0 0.0
  %3519 = vmatpush1.msra.mxu0 0.0
  %3520 = vmatprep.subr.mxu0 0.0
  %3521 = vmatpush1.msra.mxu0 0.0
  %3522 = vmatprep.subr.mxu0 0.0
  %3523 = vmatpush1.msra.mxu0 0.0
  %3524 = vmatprep.subr.mxu0 0.0
  %3525 = vmatpush1.msra.mxu0 0.0
  %3526 = vmatprep.subr.mxu0 0.0
  %3527 = vmatpush1.msra.mxu0 0.0
  %3528 = vmatprep.subr.mxu0 0.0
  %3529 = vmatpush1.msra.mxu0 0.0
  %3530 = vmatprep.subr.mxu0 0.0
  %3531 = vmatpush1.msra.mxu0 0.0
  %3532 = vmatprep.mubr.f32.mxu0 0.0
  %3533 = vmatmul.mubr.f32.gmra.mrb[0].mxu0 %v3445
  %v3534 = vpop.f32.mrb[0].mxu0
  %v3535 = vadd.f32 0.0, %v3534
  %v3536 = vpop.f32.mrb[0].mxu0
  %3537 = vmatprep.mubr.f32.mxu0 0.0
  %3538 = vmatmul.mubr.f32.gmra.mrb[0].mxu0 %v3448
  %v3539 = vpop.f32.mrb[0].mxu0
  %v3540 = vadd.f32 0.0, %v3539
  %v3541 = vpop.f32.mrb[0].mxu0
  %3542 = vmatprep.mubr.f32.mxu0 0.0
  %3543 = vmatmul.mubr.f32.gmra.mrb[0].mxu0 %v3451
  %v3544 = vpop.f32.mrb[0].mxu0
  %v3545 = vadd.f32 0.0, %v3544
  %v3546 = vpop.f32.mrb[0].mxu0
  %3547 = vmatprep.mubr.f32.mxu0 0.0
  %3548 = vmatmul.mubr.f32.gmra.mrb[0].mxu0 %v3454
  %v3549 = vpop.f32.mrb[0].mxu0
  %v3550 = vadd.f32 0.0, %v3549
  %v3551 = vpop.f32.mrb[0].mxu0
  %3552 = vmatprep.mubr.f32.mxu0 0.0
  %3553 = vmatmul.mubr.f32.gmra.mrb[0].mxu0 %v3457
  %v3554 = vpop.f32.mrb[0].mxu0
  %v3555 = vadd.f32 0.0, %v3554
  %v3556 = vpop.f32.mrb[0].mxu0
  %3557 = vmatprep.mubr.f32.mxu0 0.0
  %3558 = vmatmul.mubr.f32.gmra.mrb[0].mxu0 %v3460
  %v3559 = vpop.f32.mrb[0].mxu0
  %v3560 = vadd.f32 0.0, %v3559
  %v3561 = vpop.f32.mrb[0].mxu0
  %3562 = vmatprep.mubr.f32.mxu0 0.0
  %3563 = vmatmul.mubr.f32.gmra.mrb[0].mxu0 %v3463
  %v3564 = vpop.f32.mrb[0].mxu0
  %v3565 = vadd.f32 0.0, %v3564
  %v3566 = vpop.f32.mrb[0].mxu0
  %3567 = vmatprep.mubr.f32.mxu0 0.0
  %3568 = vmatmul.mubr.f32.gmra.mrb[0].mxu0 %v3466
  %v3569 = vpop.f32.mrb[0].mxu0
  %v3570 = vadd.f32 0.0, %v3569
  %v3571 = vpop.f32.mrb[0].mxu0
  %3572 = vdwg.mxu0
  %3573 = vset.pattern.permute.xlu0 3
  %3574 = vperm.xlu0 %3573, %v2502
  %v3575 = vpop.permute.xlu0 %3574
  %3577 = vset.pattern.permute.xlu0 3
  %3578 = vperm.xlu0 %3577, %v2507
  %v3579 = vpop.permute.xlu0 %3578
  %3581 = vset.pattern.permute.xlu0 3
  %3582 = vperm.xlu0 %3581, %v2512
  %v3583 = vpop.permute.xlu0 %3582
  %3585 = vset.pattern.permute.xlu0 3
  %3586 = vperm.xlu0 %3585, %v2517
  %v3587 = vpop.permute.xlu0 %3586
  %3589 = vset.pattern.permute.xlu0 3
  %3590 = vperm.xlu0 %3589, %v2522
  %v3591 = vpop.permute.xlu0 %3590
  %3593 = vset.pattern.permute.xlu0 3
  %3594 = vperm.xlu0 %3593, %v2527
  %v3595 = vpop.permute.xlu0 %3594
  %3597 = vset.pattern.permute.xlu0 3
  %3598 = vperm.xlu0 %3597, %v2532
  %v3599 = vpop.permute.xlu0 %3598
  %3601 = vset.pattern.permute.xlu0 3
  %3602 = vperm.xlu0 %3601, %v2537
  %v3603 = vpop.permute.xlu0 %3602
  %v3605 = vlaneseq
  %v3606 = vshrl.u32 %v3605, 7
  %v3607 = vsub.s32 3, %v3606
  %v3608 = vrot.slane %v2611, %v3607
  %v3609 = vadd.f32 %v3575, %v3608
  %v3610 = vadd.f32 %v3579, %v3608
  %v3611 = vadd.f32 %v3583, %v3608
  %v3612 = vadd.f32 %v3587, %v3608
  %v3613 = vadd.f32 %v3591, %v3608
  %v3614 = vadd.f32 %v3595, %v3608
  %v3615 = vadd.f32 %v3599, %v3608
  %v3616 = vadd.f32 %v3603, %v3608
  %vm3617 = vcmp.gt.f32.partialorder %v3609, 0.0
  %vm3618 = vcmp.gt.f32.partialorder %v3610, 0.0
  %vm3619 = vcmp.gt.f32.partialorder %v3611, 0.0
  %vm3620 = vcmp.gt.f32.partialorder %v3612, 0.0
  %vm3621 = vcmp.gt.f32.partialorder %v3613, 0.0
  %vm3622 = vcmp.gt.f32.partialorder %v3614, 0.0
  %vm3623 = vcmp.gt.f32.partialorder %v3615, 0.0
  %vm3624 = vcmp.gt.f32.partialorder %v3616, 0.0
  %v3625 = vmul.f32 %v3609, 0.2
  %v3626 = vmul.f32 %v3610, 0.2
  %v3627 = vmul.f32 %v3611, 0.2
  %v3628 = vmul.f32 %v3612, 0.2
  %v3629 = vmul.f32 %v3613, 0.2
  %v3630 = vmul.f32 %v3614, 0.2
  %v3631 = vmul.f32 %v3615, 0.2
  %v3632 = vmul.f32 %v3616, 0.2
  %v3633 = vsel %vm3617, %v3609, %v3625
  %v3634 = vsel %vm3618, %v3610, %v3626
  %v3635 = vsel %vm3619, %v3611, %v3627
  %v3636 = vsel %vm3620, %v3612, %v3628
  %v3637 = vsel %vm3621, %v3613, %v3629
  %v3638 = vsel %vm3622, %v3614, %v3630
  %v3639 = vsel %vm3623, %v3615, %v3631
  %v3640 = vsel %vm3624, %v3616, %v3632
  %v3641 = vadd.f32 %v3633, %v346
  %v3642 = vadd.f32 %v3634, %v347
  %v3643 = vadd.f32 %v3635, %v348
  %v3644 = vadd.f32 %v3636, %v349
  %v3645 = vadd.f32 %v3637, %v350
  %v3646 = vadd.f32 %v3638, %v351
  %v3647 = vadd.f32 %v3639, %v352
  %v3648 = vadd.f32 %v3640, %v353
  %v3649 = vsel %vm896, %v3641, -inf
  %3650 = vmax.xlane.f32.xlu0 %v3649
  %v3651 = vpop.xlane.xlu0 %3650
  %v3652 = vsel %vm896, %v3642, -inf
  %3653 = vmax.xlane.f32.xlu0 %v3652
  %v3654 = vpop.xlane.xlu0 %3653
  %v3655 = vsel %vm896, %v3643, -inf
  %3656 = vmax.xlane.f32.xlu0 %v3655
  %v3657 = vpop.xlane.xlu0 %3656
  %v3658 = vsel %vm896, %v3644, -inf
  %3659 = vmax.xlane.f32.xlu0 %v3658
  %v3660 = vpop.xlane.xlu0 %3659
  %v3661 = vsel %vm896, %v3645, -inf
  %3662 = vmax.xlane.f32.xlu0 %v3661
  %v3663 = vpop.xlane.xlu0 %3662
  %v3664 = vsel %vm896, %v3646, -inf
  %3665 = vmax.xlane.f32.xlu0 %v3664
  %v3666 = vpop.xlane.xlu0 %3665
  %v3667 = vsel %vm896, %v3647, -inf
  %3668 = vmax.xlane.f32.xlu0 %v3667
  %v3669 = vpop.xlane.xlu0 %3668
  %v3670 = vsel %vm896, %v3648, -inf
  %3671 = vmax.xlane.f32.xlu0 %v3670
  %v3672 = vpop.xlane.xlu0 %3671
  %v3673 = vsub.f32 %v3641, %v3651
  %v3674 = vsub.f32 %v3642, %v3654
  %v3675 = vsub.f32 %v3643, %v3657
  %v3676 = vsub.f32 %v3644, %v3660
  %v3677 = vsub.f32 %v3645, %v3663
  %v3678 = vsub.f32 %v3646, %v3666
  %v3679 = vsub.f32 %v3647, %v3669
  %v3680 = vsub.f32 %v3648, %v3672
  %v3681 = vmul.f32 %v3673, 1.442695
  %v3682 = vpow.pop %v3681
  %v3683 = vmul.f32 %v3674, 1.442695
  %v3684 = vpow.pop %v3683
  %v3685 = vmul.f32 %v3675, 1.442695
  %v3686 = vpow.pop %v3685
  %v3687 = vmul.f32 %v3676, 1.442695
  %v3688 = vpow.pop %v3687
  %v3689 = vmul.f32 %v3677, 1.442695
  %v3690 = vpow.pop %v3689
  %v3691 = vmul.f32 %v3678, 1.442695
  %v3692 = vpow.pop %v3691
  %v3693 = vmul.f32 %v3679, 1.442695
  %v3694 = vpow.pop %v3693
  %v3695 = vmul.f32 %v3680, 1.442695
  %v3696 = vpow.pop %v3695
  %v3697 = vmul.f32 %v3682, %v330
  %v3698 = vmul.f32 %v3684, %v331
  %v3699 = vmul.f32 %v3686, %v332
  %v3700 = vmul.f32 %v3688, %v333
  %v3701 = vmul.f32 %v3690, %v334
  %v3702 = vmul.f32 %v3692, %v335
  %v3703 = vmul.f32 %v3694, %v336
  %v3704 = vmul.f32 %v3696, %v337
  %v3705 = vsel %vm896, %v3697, 0.0
  %3706 = vadd.xlane.f32.xlu0 %v3705
  %v3707 = vpop.xlane.xlu0 %3706
  %v3708 = vsel %vm896, %v3698, 0.0
  %3709 = vadd.xlane.f32.xlu0 %v3708
  %v3710 = vpop.xlane.xlu0 %3709
  %v3711 = vsel %vm896, %v3699, 0.0
  %3712 = vadd.xlane.f32.xlu0 %v3711
  %v3713 = vpop.xlane.xlu0 %3712
  %v3714 = vsel %vm896, %v3700, 0.0
  %3715 = vadd.xlane.f32.xlu0 %v3714
  %v3716 = vpop.xlane.xlu0 %3715
  %v3717 = vsel %vm896, %v3701, 0.0
  %3718 = vadd.xlane.f32.xlu0 %v3717
  %v3719 = vpop.xlane.xlu0 %3718
  %v3720 = vsel %vm896, %v3702, 0.0
  %3721 = vadd.xlane.f32.xlu0 %v3720
  %v3722 = vpop.xlane.xlu0 %3721
  %v3723 = vsel %vm896, %v3703, 0.0
  %3724 = vadd.xlane.f32.xlu0 %v3723
  %v3725 = vpop.xlane.xlu0 %3724
  %v3726 = vsel %vm896, %v3704, 0.0
  %3727 = vadd.xlane.f32.xlu0 %v3726
  %v3728 = vpop.xlane.xlu0 %3727
  %v3729 = vrcp.pop %v3707
  %v3730 = vrcp.pop %v3710
  %v3731 = vrcp.pop %v3713
  %v3732 = vrcp.pop %v3716
  %v3733 = vrcp.pop %v3719
  %v3734 = vrcp.pop %v3722
  %v3735 = vrcp.pop %v3725
  %v3736 = vrcp.pop %v3728
  %v3737 = vmul.f32 %v3697, %v3729
  %v3738 = vmul.f32 %v3698, %v3730
  %v3739 = vmul.f32 %v3699, %v3731
  %v3740 = vmul.f32 %v3700, %v3732
  %v3741 = vmul.f32 %v3701, %v3733
  %v3742 = vmul.f32 %v3702, %v3734
  %v3743 = vmul.f32 %v3703, %v3735
  %v3744 = vmul.f32 %v3704, %v3736
  %3745 = vrot.lane.b32.xlu0 %v2369, 104
  %v3746 = vpop.permute.xlu0 %3745
  %3747 = vrot.lane.b32.xlu0 %v2374, 104
  %v3748 = vpop.permute.xlu0 %3747
  %3749 = vrot.lane.b32.xlu0 %v2379, 104
  %v3750 = vpop.permute.xlu0 %3749
  %3751 = vrot.lane.b32.xlu0 %v2384, 104
  %v3752 = vpop.permute.xlu0 %3751
  %3753 = vrot.lane.b32.xlu0 %v2389, 104
  %v3754 = vpop.permute.xlu0 %3753
  %3755 = vrot.lane.b32.xlu0 %v2394, 104
  %v3756 = vpop.permute.xlu0 %3755
  %3757 = vrot.lane.b32.xlu0 %v2399, 104
  %v3758 = vpop.permute.xlu0 %3757
  %3759 = vrot.lane.b32.xlu0 %v2404, 104
  %v3760 = vpop.permute.xlu0 %3759
  %v3770 = vsel %vm896, %v3737, 0
  %v3773 = vsel %vm896, %v3738, 0
  %v3776 = vsel %vm896, %v3739, 0
  %v3779 = vsel %vm896, %v3740, 0
  %v3782 = vsel %vm896, %v3741, 0
  %v3785 = vsel %vm896, %v3742, 0
  %v3788 = vsel %vm896, %v3743, 0
  %v3791 = vsel %vm896, %v3744, 0
  %3793 = vmatprep.subr.mxu0 0.0
  %3794 = vmatpush1.msra.mxu0 %v3746
  %3795 = vmatprep.subr.mxu0 0.0
  %3796 = vmatpush1.msra.mxu0 %v3748
  %3797 = vmatprep.subr.mxu0 0.0
  %3798 = vmatpush1.msra.mxu0 %v3750
  %3799 = vmatprep.subr.mxu0 0.0
  %3800 = vmatpush1.msra.mxu0 %v3752
  %3801 = vmatprep.subr.mxu0 0.0
  %3802 = vmatpush1.msra.mxu0 %v3754
  %3803 = vmatprep.subr.mxu0 0.0
  %3804 = vmatpush1.msra.mxu0 %v3756
  %3805 = vmatprep.subr.mxu0 0.0
  %3806 = vmatpush1.msra.mxu0 %v3758
  %3807 = vmatprep.subr.mxu0 0.0
  %3808 = vmatpush1.msra.mxu0 %v3760
  %3809 = vmatprep.subr.mxu0 0.0
  %3810 = vmatpush1.msra.mxu0 0.0
  %3811 = vmatprep.subr.mxu0 0.0
  %3812 = vmatpush1.msra.mxu0 0.0
  %3813 = vmatprep.subr.mxu0 0.0
  %3814 = vmatpush1.msra.mxu0 0.0
  %3815 = vmatprep.subr.mxu0 0.0
  %3816 = vmatpush1.msra.mxu0 0.0
  %3817 = vmatprep.subr.mxu0 0.0
  %3818 = vmatpush1.msra.mxu0 0.0
  %3819 = vmatprep.subr.mxu0 0.0
  %3820 = vmatpush1.msra.mxu0 0.0
  %3821 = vmatprep.subr.mxu0 0.0
  %3822 = vmatpush1.msra.mxu0 0.0
  %3823 = vmatprep.subr.mxu0 0.0
  %3824 = vmatpush1.msra.mxu0 0.0
  %3825 = vmatprep.subr.mxu0 0.0
  %3826 = vmatpush1.msra.mxu0 0.0
  %3827 = vmatprep.subr.mxu0 0.0
  %3828 = vmatpush1.msra.mxu0 0.0
  %3829 = vmatprep.subr.mxu0 0.0
  %3830 = vmatpush1.msra.mxu0 0.0
  %3831 = vmatprep.subr.mxu0 0.0
  %3832 = vmatpush1.msra.mxu0 0.0
  %3833 = vmatprep.subr.mxu0 0.0
  %3834 = vmatpush1.msra.mxu0 0.0
  %3835 = vmatprep.subr.mxu0 0.0
  %3836 = vmatpush1.msra.mxu0 0.0
  %3837 = vmatprep.subr.mxu0 0.0
  %3838 = vmatpush1.msra.mxu0 0.0
  %3839 = vmatprep.subr.mxu0 0.0
  %3840 = vmatpush1.msra.mxu0 0.0
  %3841 = vmatprep.subr.mxu0 0.0
  %3842 = vmatpush1.msra.mxu0 0.0
  %3843 = vmatprep.subr.mxu0 0.0
  %3844 = vmatpush1.msra.mxu0 0.0
  %3845 = vmatprep.subr.mxu0 0.0
  %3846 = vmatpush1.msra.mxu0 0.0
  %3847 = vmatprep.subr.mxu0 0.0
  %3848 = vmatpush1.msra.mxu0 0.0
  %3849 = vmatprep.subr.mxu0 0.0
  %3850 = vmatpush1.msra.mxu0 0.0
  %3851 = vmatprep.subr.mxu0 0.0
  %3852 = vmatpush1.msra.mxu0 0.0
  %3853 = vmatprep.subr.mxu0 0.0
  %3854 = vmatpush1.msra.mxu0 0.0
  %3855 = vmatprep.subr.mxu0 0.0
  %3856 = vmatpush1.msra.mxu0 0.0
  %3857 = vmatprep.mubr.f32.mxu0 0.0
  %3858 = vmatmul.mubr.f32.gmra.mrb[0].mxu0 %v3770
  %v3859 = vpop.f32.mrb[0].mxu0
  %v3860 = vadd.f32 0.0, %v3859
  %v3861 = vpop.f32.mrb[0].mxu0
  %3862 = vmatprep.mubr.f32.mxu0 0.0
  %3863 = vmatmul.mubr.f32.gmra.mrb[0].mxu0 %v3773
  %v3864 = vpop.f32.mrb[0].mxu0
  %v3865 = vadd.f32 0.0, %v3864
  %v3866 = vpop.f32.mrb[0].mxu0
  %3867 = vmatprep.mubr.f32.mxu0 0.0
  %3868 = vmatmul.mubr.f32.gmra.mrb[0].mxu0 %v3776
  %v3869 = vpop.f32.mrb[0].mxu0
  %v3870 = vadd.f32 0.0, %v3869
  %v3871 = vpop.f32.mrb[0].mxu0
  %3872 = vmatprep.mubr.f32.mxu0 0.0
  %3873 = vmatmul.mubr.f32.gmra.mrb[0].mxu0 %v3779
  %v3874 = vpop.f32.mrb[0].mxu0
  %v3875 = vadd.f32 0.0, %v3874
  %v3876 = vpop.f32.mrb[0].mxu0
  %3877 = vmatprep.mubr.f32.mxu0 0.0
  %3878 = vmatmul.mubr.f32.gmra.mrb[0].mxu0 %v3782
  %v3879 = vpop.f32.mrb[0].mxu0
  %v3880 = vadd.f32 0.0, %v3879
  %v3881 = vpop.f32.mrb[0].mxu0
  %3882 = vmatprep.mubr.f32.mxu0 0.0
  %3883 = vmatmul.mubr.f32.gmra.mrb[0].mxu0 %v3785
  %v3884 = vpop.f32.mrb[0].mxu0
  %v3885 = vadd.f32 0.0, %v3884
  %v3886 = vpop.f32.mrb[0].mxu0
  %3887 = vmatprep.mubr.f32.mxu0 0.0
  %3888 = vmatmul.mubr.f32.gmra.mrb[0].mxu0 %v3788
  %v3889 = vpop.f32.mrb[0].mxu0
  %v3890 = vadd.f32 0.0, %v3889
  %v3891 = vpop.f32.mrb[0].mxu0
  %3892 = vmatprep.mubr.f32.mxu0 0.0
  %3893 = vmatmul.mubr.f32.gmra.mrb[0].mxu0 %v3791
  %v3894 = vpop.f32.mrb[0].mxu0
  %v3895 = vadd.f32 0.0, %v3894
  %v3896 = vpop.f32.mrb[0].mxu0
  %3897 = vdwg.mxu0
  %3906 = vrot.lane.b32.xlu0 %v3210, 8
  %v3907 = vpop.permute.xlu0 %3906
  %3908 = vrot.lane.b32.xlu0 %v3215, 8
  %v3909 = vpop.permute.xlu0 %3908
  %3910 = vrot.lane.b32.xlu0 %v3220, 8
  %v3911 = vpop.permute.xlu0 %3910
  %3912 = vrot.lane.b32.xlu0 %v3225, 8
  %v3913 = vpop.permute.xlu0 %3912
  %3914 = vrot.lane.b32.xlu0 %v3230, 8
  %v3915 = vpop.permute.xlu0 %3914
  %3916 = vrot.lane.b32.xlu0 %v3235, 8
  %v3917 = vpop.permute.xlu0 %3916
  %3918 = vrot.lane.b32.xlu0 %v3240, 8
  %v3919 = vpop.permute.xlu0 %3918
  %3920 = vrot.lane.b32.xlu0 %v3245, 8
  %v3921 = vpop.permute.xlu0 %3920
  %3938 = vrot.lane.b32.xlu0 %v3535, 16
  %v3939 = vpop.permute.xlu0 %3938
  %3940 = vrot.lane.b32.xlu0 %v3540, 16
  %v3941 = vpop.permute.xlu0 %3940
  %3942 = vrot.lane.b32.xlu0 %v3545, 16
  %v3943 = vpop.permute.xlu0 %3942
  %3944 = vrot.lane.b32.xlu0 %v3550, 16
  %v3945 = vpop.permute.xlu0 %3944
  %3946 = vrot.lane.b32.xlu0 %v3555, 16
  %v3947 = vpop.permute.xlu0 %3946
  %3948 = vrot.lane.b32.xlu0 %v3560, 16
  %v3949 = vpop.permute.xlu0 %3948
  %3950 = vrot.lane.b32.xlu0 %v3565, 16
  %v3951 = vpop.permute.xlu0 %3950
  %3952 = vrot.lane.b32.xlu0 %v3570, 16
  %v3953 = vpop.permute.xlu0 %3952
  %3970 = vrot.lane.b32.xlu0 %v3860, 24
  %v3971 = vpop.permute.xlu0 %3970
  %3972 = vrot.lane.b32.xlu0 %v3865, 24
  %v3973 = vpop.permute.xlu0 %3972
  %3974 = vrot.lane.b32.xlu0 %v3870, 24
  %v3975 = vpop.permute.xlu0 %3974
  %3976 = vrot.lane.b32.xlu0 %v3875, 24
  %v3977 = vpop.permute.xlu0 %3976
  %3978 = vrot.lane.b32.xlu0 %v3880, 24
  %v3979 = vpop.permute.xlu0 %3978
  %3980 = vrot.lane.b32.xlu0 %v3885, 24
  %v3981 = vpop.permute.xlu0 %3980
  %3982 = vrot.lane.b32.xlu0 %v3890, 24
  %v3983 = vpop.permute.xlu0 %3982
  %3984 = vrot.lane.b32.xlu0 %v3895, 24
  %v3985 = vpop.permute.xlu0 %3984
  %v3994 = vsel %vm2193, %v2885, %v3907
  %v3995 = vsel %vm2193, %v2890, %v3909
  %v3996 = vsel %vm2193, %v2895, %v3911
  %v3997 = vsel %vm2193, %v2900, %v3913
  %v3998 = vsel %vm2193, %v2905, %v3915
  %v3999 = vsel %vm2193, %v2910, %v3917
  %v4000 = vsel %vm2193, %v2915, %v3919
  %v4001 = vsel %vm2193, %v2920, %v3921
  %v4002 = vsel %vm474, %v3994, %v3939
  %v4003 = vsel %vm474, %v3995, %v3941
  %v4004 = vsel %vm474, %v3996, %v3943
  %v4005 = vsel %vm474, %v3997, %v3945
  %v4006 = vsel %vm474, %v3998, %v3947
  %v4007 = vsel %vm474, %v3999, %v3949
  %v4008 = vsel %vm474, %v4000, %v3951
  %v4009 = vsel %vm474, %v4001, %v3953
  %v4010 = vsel %vm2210, %v4002, %v3971
  %v4011 = vsel %vm2210, %v4003, %v3973
  %v4012 = vsel %vm2210, %v4004, %v3975
  %v4013 = vsel %vm2210, %v4005, %v3977
  %v4014 = vsel %vm2210, %v4006, %v3979
  %v4015 = vsel %vm2210, %v4007, %v3981
  %v4016 = vsel %vm2210, %v4008, %v3983
  %v4017 = vsel %vm2210, %v4009, %v3985
  %v4018 = vld [vmem:[%s12] sm:$0x1]
  %v4020 = vlaneseq
  %v4021 = vshrl.u32 %v4020, 7
  %v4022 = vsub.s32 0, %v4021
  %v4023 = vrot.slane %v4018, %v4022
  %v4025 = vadd.f32 %v4010, %v4023
  %v4026 = vadd.f32 %v4011, %v4023
  %v4027 = vadd.f32 %v4012, %v4023
  %v4028 = vadd.f32 %v4013, %v4023
  %v4029 = vadd.f32 %v4014, %v4023
  %v4030 = vadd.f32 %v4015, %v4023
  %v4031 = vadd.f32 %v4016, %v4023
  %v4032 = vadd.f32 %v4017, %v4023
  %vm4033 = vcmp.gt.f32.partialorder %v4025, 0.0
  %vm4034 = vcmp.gt.f32.partialorder %v4026, 0.0
  %vm4035 = vcmp.gt.f32.partialorder %v4027, 0.0
  %vm4036 = vcmp.gt.f32.partialorder %v4028, 0.0
  %vm4037 = vcmp.gt.f32.partialorder %v4029, 0.0
  %vm4038 = vcmp.gt.f32.partialorder %v4030, 0.0
  %vm4039 = vcmp.gt.f32.partialorder %v4031, 0.0
  %vm4040 = vcmp.gt.f32.partialorder %v4032, 0.0
  %v4041 = vmul.f32 %v4025, 1.442695
  %v4042 = vpow.pop %v4041
  %v4043 = vmul.f32 %v4026, 1.442695
  %v4044 = vpow.pop %v4043
  %v4045 = vmul.f32 %v4027, 1.442695
  %v4046 = vpow.pop %v4045
  %v4047 = vmul.f32 %v4028, 1.442695
  %v4048 = vpow.pop %v4047
  %v4049 = vmul.f32 %v4029, 1.442695
  %v4050 = vpow.pop %v4049
  %v4051 = vmul.f32 %v4030, 1.442695
  %v4052 = vpow.pop %v4051
  %v4053 = vmul.f32 %v4031, 1.442695
  %v4054 = vpow.pop %v4053
  %v4055 = vmul.f32 %v4032, 1.442695
  %v4056 = vpow.pop %v4055
  %v4057 = vsub.f32 %v4042, 1.0
  %v4058 = vsub.f32 %v4044, 1.0
  %v4059 = vsub.f32 %v4046, 1.0
  %v4060 = vsub.f32 %v4048, 1.0
  %v4061 = vsub.f32 %v4050, 1.0
  %v4062 = vsub.f32 %v4052, 1.0
  %v4063 = vsub.f32 %v4054, 1.0
  %v4064 = vsub.f32 %v4056, 1.0
  %v4065 = vsel %vm4033, %v4025, %v4057
  %v4066 = vsel %vm4034, %v4026, %v4058
  %v4067 = vsel %vm4035, %v4027, %v4059
  %v4068 = vsel %vm4036, %v4028, %v4060
  %v4069 = vsel %vm4037, %v4029, %v4061
  %v4070 = vsel %vm4038, %v4030, %v4062
  %v4071 = vsel %vm4039, %v4031, %v4063
  %v4072 = vsel %vm4040, %v4032, %v4064
  %v4073 = vld [vmem:[%s13] sm:$0xff]
  %v4074 = vld [vmem:[%s13 + $0x8] sm:$0xff]
  %v4075 = vld [vmem:[%s13 + $0x10] sm:$0xff]
  %v4076 = vld [vmem:[%s13 + $0x18] sm:$0xff]
  %v4078 = vsel %vm608, %v4065, 0
  %v4081 = vsel %vm608, %v4066, 0
  %v4084 = vsel %vm608, %v4067, 0
  %v4087 = vsel %vm608, %v4068, 0
  %v4090 = vsel %vm608, %v4069, 0
  %v4093 = vsel %vm608, %v4070, 0
  %v4096 = vsel %vm608, %v4071, 0
  %v4099 = vsel %vm608, %v4072, 0
  %4101 = vmatprep.subr.mxu0 0.0
  %4102 = vmatpush1.msra.mxu0 %v4073
  %4103 = vmatprep.subr.mxu0 0.0
  %4104 = vmatpush1.msra.mxu0 %v4074
  %4105 = vmatprep.subr.mxu0 0.0
  %4106 = vmatpush1.msra.mxu0 %v4075
  %4107 = vmatprep.subr.mxu0 0.0
  %4108 = vmatpush1.msra.mxu0 %v4076
  %4109 = vmatprep.subr.mxu0 0.0
  %4110 = vmatpush1.msra.mxu0 0.0
  %4111 = vmatprep.subr.mxu0 0.0
  %4112 = vmatpush1.msra.mxu0 0.0
  %4113 = vmatprep.subr.mxu0 0.0
  %4114 = vmatpush1.msra.mxu0 0.0
  %4115 = vmatprep.subr.mxu0 0.0
  %4116 = vmatpush1.msra.mxu0 0.0
  %4117 = vmatprep.subr.mxu0 0.0
  %4118 = vmatpush1.msra.mxu0 0.0
  %4119 = vmatprep.subr.mxu0 0.0
  %4120 = vmatpush1.msra.mxu0 0.0
  %4121 = vmatprep.subr.mxu0 0.0
  %4122 = vmatpush1.msra.mxu0 0.0
  %4123 = vmatprep.subr.mxu0 0.0
  %4124 = vmatpush1.msra.mxu0 0.0
  %4125 = vmatprep.subr.mxu0 0.0
  %4126 = vmatpush1.msra.mxu0 0.0
  %4127 = vmatprep.subr.mxu0 0.0
  %4128 = vmatpush1.msra.mxu0 0.0
  %4129 = vmatprep.subr.mxu0 0.0
  %4130 = vmatpush1.msra.mxu0 0.0
  %4131 = vmatprep.subr.mxu0 0.0
  %4132 = vmatpush1.msra.mxu0 0.0
  %4133 = vmatprep.subr.mxu0 0.0
  %4134 = vmatpush1.msra.mxu0 0.0
  %4135 = vmatprep.subr.mxu0 0.0
  %4136 = vmatpush1.msra.mxu0 0.0
  %4137 = vmatprep.subr.mxu0 0.0
  %4138 = vmatpush1.msra.mxu0 0.0
  %4139 = vmatprep.subr.mxu0 0.0
  %4140 = vmatpush1.msra.mxu0 0.0
  %4141 = vmatprep.subr.mxu0 0.0
  %4142 = vmatpush1.msra.mxu0 0.0
  %4143 = vmatprep.subr.mxu0 0.0
  %4144 = vmatpush1.msra.mxu0 0.0
  %4145 = vmatprep.subr.mxu0 0.0
  %4146 = vmatpush1.msra.mxu0 0.0
  %4147 = vmatprep.subr.mxu0 0.0
  %4148 = vmatpush1.msra.mxu0 0.0
  %4149 = vmatprep.subr.mxu0 0.0
  %4150 = vmatpush1.msra.mxu0 0.0
  %4151 = vmatprep.subr.mxu0 0.0
  %4152 = vmatpush1.msra.mxu0 0.0
  %4153 = vmatprep.subr.mxu0 0.0
  %4154 = vmatpush1.msra.mxu0 0.0
  %4155 = vmatprep.subr.mxu0 0.0
  %4156 = vmatpush1.msra.mxu0 0.0
  %4157 = vmatprep.subr.mxu0 0.0
  %4158 = vmatpush1.msra.mxu0 0.0
  %4159 = vmatprep.subr.mxu0 0.0
  %4160 = vmatpush1.msra.mxu0 0.0
  %4161 = vmatprep.subr.mxu0 0.0
  %4162 = vmatpush1.msra.mxu0 0.0
  %4163 = vmatprep.subr.mxu0 0.0
  %4164 = vmatpush1.msra.mxu0 0.0
  %4165 = vmatprep.mubr.f32.mxu0 0.0
  %4166 = vmatmul.mubr.f32.gmra.mrb[0].mxu0 %v4078
  %v4167 = vpop.f32.mrb[0].mxu0
  %v4168 = vadd.f32 0.0, %v4167
  %v4169 = vpop.f32.mrb[0].mxu0
  %4170 = vmatprep.mubr.f32.mxu0 0.0
  %4171 = vmatmul.mubr.f32.gmra.mrb[0].mxu0 %v4081
  %v4172 = vpop.f32.mrb[0].mxu0
  %v4173 = vadd.f32 0.0, %v4172
  %v4174 = vpop.f32.mrb[0].mxu0
  %4175 = vmatprep.mubr.f32.mxu0 0.0
  %4176 = vmatmul.mubr.f32.gmra.mrb[0].mxu0 %v4084
  %v4177 = vpop.f32.mrb[0].mxu0
  %v4178 = vadd.f32 0.0, %v4177
  %v4179 = vpop.f32.mrb[0].mxu0
  %4180 = vmatprep.mubr.f32.mxu0 0.0
  %4181 = vmatmul.mubr.f32.gmra.mrb[0].mxu0 %v4087
  %v4182 = vpop.f32.mrb[0].mxu0
  %v4183 = vadd.f32 0.0, %v4182
  %v4184 = vpop.f32.mrb[0].mxu0
  %4185 = vmatprep.mubr.f32.mxu0 0.0
  %4186 = vmatmul.mubr.f32.gmra.mrb[0].mxu0 %v4090
  %v4187 = vpop.f32.mrb[0].mxu0
  %v4188 = vadd.f32 0.0, %v4187
  %v4189 = vpop.f32.mrb[0].mxu0
  %4190 = vmatprep.mubr.f32.mxu0 0.0
  %4191 = vmatmul.mubr.f32.gmra.mrb[0].mxu0 %v4093
  %v4192 = vpop.f32.mrb[0].mxu0
  %v4193 = vadd.f32 0.0, %v4192
  %v4194 = vpop.f32.mrb[0].mxu0
  %4195 = vmatprep.mubr.f32.mxu0 0.0
  %4196 = vmatmul.mubr.f32.gmra.mrb[0].mxu0 %v4096
  %v4197 = vpop.f32.mrb[0].mxu0
  %v4198 = vadd.f32 0.0, %v4197
  %v4199 = vpop.f32.mrb[0].mxu0
  %4200 = vmatprep.mubr.f32.mxu0 0.0
  %4201 = vmatmul.mubr.f32.gmra.mrb[0].mxu0 %v4099
  %v4202 = vpop.f32.mrb[0].mxu0
  %v4203 = vadd.f32 0.0, %v4202
  %v4204 = vpop.f32.mrb[0].mxu0
  %4205 = vdwg.mxu0
  %v4206 = vld [vmem:[%s14] sm:$0xff]
  %v4207 = vld [vmem:[%s14 + $0x8] sm:$0xff]
  %v4209 = vsel %vm474, %v4168, 0
  %v4212 = vsel %vm474, %v4173, 0
  %v4215 = vsel %vm474, %v4178, 0
  %v4218 = vsel %vm474, %v4183, 0
  %v4221 = vsel %vm474, %v4188, 0
  %v4224 = vsel %vm474, %v4193, 0
  %v4227 = vsel %vm474, %v4198, 0
  %v4230 = vsel %vm474, %v4203, 0
  %4232 = vmatprep.subr.mxu0 0.0
  %4233 = vmatpush1.msra.mxu0 %v4206
  %4234 = vmatprep.subr.mxu0 0.0
  %4235 = vmatpush1.msra.mxu0 %v4207
  %4236 = vmatprep.subr.mxu0 0.0
  %4237 = vmatpush1.msra.mxu0 0.0
  %4238 = vmatprep.subr.mxu0 0.0
  %4239 = vmatpush1.msra.mxu0 0.0
  %4240 = vmatprep.subr.mxu0 0.0
  %4241 = vmatpush1.msra.mxu0 0.0
  %4242 = vmatprep.subr.mxu0 0.0
  %4243 = vmatpush1.msra.mxu0 0.0
  %4244 = vmatprep.subr.mxu0 0.0
  %4245 = vmatpush1.msra.mxu0 0.0
  %4246 = vmatprep.subr.mxu0 0.0
  %4247 = vmatpush1.msra.mxu0 0.0
  %4248 = vmatprep.subr.mxu0 0.0
  %4249 = vmatpush1.msra.mxu0 0.0
  %4250 = vmatprep.subr.mxu0 0.0
  %4251 = vmatpush1.msra.mxu0 0.0
  %4252 = vmatprep.subr.mxu0 0.0
  %4253 = vmatpush1.msra.mxu0 0.0
  %4254 = vmatprep.subr.mxu0 0.0
  %4255 = vmatpush1.msra.mxu0 0.0
  %4256 = vmatprep.subr.mxu0 0.0
  %4257 = vmatpush1.msra.mxu0 0.0
  %4258 = vmatprep.subr.mxu0 0.0
  %4259 = vmatpush1.msra.mxu0 0.0
  %4260 = vmatprep.subr.mxu0 0.0
  %4261 = vmatpush1.msra.mxu0 0.0
  %4262 = vmatprep.subr.mxu0 0.0
  %4263 = vmatpush1.msra.mxu0 0.0
  %4264 = vmatprep.subr.mxu0 0.0
  %4265 = vmatpush1.msra.mxu0 0.0
  %4266 = vmatprep.subr.mxu0 0.0
  %4267 = vmatpush1.msra.mxu0 0.0
  %4268 = vmatprep.subr.mxu0 0.0
  %4269 = vmatpush1.msra.mxu0 0.0
  %4270 = vmatprep.subr.mxu0 0.0
  %4271 = vmatpush1.msra.mxu0 0.0
  %4272 = vmatprep.subr.mxu0 0.0
  %4273 = vmatpush1.msra.mxu0 0.0
  %4274 = vmatprep.subr.mxu0 0.0
  %4275 = vmatpush1.msra.mxu0 0.0
  %4276 = vmatprep.subr.mxu0 0.0
  %4277 = vmatpush1.msra.mxu0 0.0
  %4278 = vmatprep.subr.mxu0 0.0
  %4279 = vmatpush1.msra.mxu0 0.0
  %4280 = vmatprep.subr.mxu0 0.0
  %4281 = vmatpush1.msra.mxu0 0.0
  %4282 = vmatprep.subr.mxu0 0.0
  %4283 = vmatpush1.msra.mxu0 0.0
  %4284 = vmatprep.subr.mxu0 0.0
  %4285 = vmatpush1.msra.mxu0 0.0
  %4286 = vmatprep.subr.mxu0 0.0
  %4287 = vmatpush1.msra.mxu0 0.0
  %4288 = vmatprep.subr.mxu0 0.0
  %4289 = vmatpush1.msra.mxu0 0.0
  %4290 = vmatprep.subr.mxu0 0.0
  %4291 = vmatpush1.msra.mxu0 0.0
  %4292 = vmatprep.subr.mxu0 0.0
  %4293 = vmatpush1.msra.mxu0 0.0
  %4294 = vmatprep.subr.mxu0 0.0
  %4295 = vmatpush1.msra.mxu0 0.0
  %4296 = vmatprep.mubr.f32.mxu0 0.0
  %4297 = vmatmul.mubr.f32.gmra.mrb[0].mxu0 %v4209
  %v4298 = vpop.f32.mrb[0].mxu0
  %v4299 = vadd.f32 0.0, %v4298
  %v4300 = vpop.f32.mrb[0].mxu0
  %4301 = vmatprep.mubr.f32.mxu0 0.0
  %4302 = vmatmul.mubr.f32.gmra.mrb[0].mxu0 %v4212
  %v4303 = vpop.f32.mrb[0].mxu0
  %v4304 = vadd.f32 0.0, %v4303
  %v4305 = vpop.f32.mrb[0].mxu0
  %4306 = vmatprep.mubr.f32.mxu0 0.0
  %4307 = vmatmul.mubr.f32.gmra.mrb[0].mxu0 %v4215
  %v4308 = vpop.f32.mrb[0].mxu0
  %v4309 = vadd.f32 0.0, %v4308
  %v4310 = vpop.f32.mrb[0].mxu0
  %4311 = vmatprep.mubr.f32.mxu0 0.0
  %4312 = vmatmul.mubr.f32.gmra.mrb[0].mxu0 %v4218
  %v4313 = vpop.f32.mrb[0].mxu0
  %v4314 = vadd.f32 0.0, %v4313
  %v4315 = vpop.f32.mrb[0].mxu0
  %4316 = vmatprep.mubr.f32.mxu0 0.0
  %4317 = vmatmul.mubr.f32.gmra.mrb[0].mxu0 %v4221
  %v4318 = vpop.f32.mrb[0].mxu0
  %v4319 = vadd.f32 0.0, %v4318
  %v4320 = vpop.f32.mrb[0].mxu0
  %4321 = vmatprep.mubr.f32.mxu0 0.0
  %4322 = vmatmul.mubr.f32.gmra.mrb[0].mxu0 %v4224
  %v4323 = vpop.f32.mrb[0].mxu0
  %v4324 = vadd.f32 0.0, %v4323
  %v4325 = vpop.f32.mrb[0].mxu0
  %4326 = vmatprep.mubr.f32.mxu0 0.0
  %4327 = vmatmul.mubr.f32.gmra.mrb[0].mxu0 %v4227
  %v4328 = vpop.f32.mrb[0].mxu0
  %v4329 = vadd.f32 0.0, %v4328
  %v4330 = vpop.f32.mrb[0].mxu0
  %4331 = vmatprep.mubr.f32.mxu0 0.0
  %4332 = vmatmul.mubr.f32.gmra.mrb[0].mxu0 %v4230
  %v4333 = vpop.f32.mrb[0].mxu0
  %v4334 = vadd.f32 0.0, %v4333
  %v4335 = vpop.f32.mrb[0].mxu0
  %4336 = vdwg.mxu0
  %v4337 = vld [vmem:[%s15] sm:$0x1]
  %v4339 = vsel %vm474, %v4337, 0
  %4341 = vmatprep.subr.mxu0 0.0
  %4342 = vmatpush1.xpose.msra.mxu0 %v4209
  %4343 = vmatprep.subr.mxu0 0.0
  %4344 = vmatpush1.xpose.msra.mxu0 %v4212
  %4345 = vmatprep.subr.mxu0 0.0
  %4346 = vmatpush1.xpose.msra.mxu0 %v4215
  %4347 = vmatprep.subr.mxu0 0.0
  %4348 = vmatpush1.xpose.msra.mxu0 %v4218
  %4349 = vmatprep.subr.mxu0 0.0
  %4350 = vmatpush1.xpose.msra.mxu0 %v4221
  %4351 = vmatprep.subr.mxu0 0.0
  %4352 = vmatpush1.xpose.msra.mxu0 %v4224
  %4353 = vmatprep.subr.mxu0 0.0
  %4354 = vmatpush1.xpose.msra.mxu0 %v4227
  %4355 = vmatprep.subr.mxu0 0.0
  %4356 = vmatpush1.xpose.msra.mxu0 %v4230
  %4357 = vmatprep.subr.mxu0 0.0
  %4358 = vmatpush1.xpose.msra.mxu0 0.0
  %4359 = vmatprep.subr.mxu0 0.0
  %4360 = vmatpush1.xpose.msra.mxu0 0.0
  %4361 = vmatprep.subr.mxu0 0.0
  %4362 = vmatpush1.xpose.msra.mxu0 0.0
  %4363 = vmatprep.subr.mxu0 0.0
  %4364 = vmatpush1.xpose.msra.mxu0 0.0
  %4365 = vmatprep.subr.mxu0 0.0
  %4366 = vmatpush1.xpose.msra.mxu0 0.0
  %4367 = vmatprep.subr.mxu0 0.0
  %4368 = vmatpush1.xpose.msra.mxu0 0.0
  %4369 = vmatprep.subr.mxu0 0.0
  %4370 = vmatpush1.xpose.msra.mxu0 0.0
  %4371 = vmatprep.subr.mxu0 0.0
  %4372 = vmatpush1.xpose.msra.mxu0 0.0
  %4373 = vmatprep.subr.mxu0 0.0
  %4374 = vmatpush1.xpose.msra.mxu0 0.0
  %4375 = vmatprep.subr.mxu0 0.0
  %4376 = vmatpush1.xpose.msra.mxu0 0.0
  %4377 = vmatprep.subr.mxu0 0.0
  %4378 = vmatpush1.xpose.msra.mxu0 0.0
  %4379 = vmatprep.subr.mxu0 0.0
  %4380 = vmatpush1.xpose.msra.mxu0 0.0
  %4381 = vmatprep.subr.mxu0 0.0
  %4382 = vmatpush1.xpose.msra.mxu0 0.0
  %4383 = vmatprep.subr.mxu0 0.0
  %4384 = vmatpush1.xpose.msra.mxu0 0.0
  %4385 = vmatprep.subr.mxu0 0.0
  %4386 = vmatpush1.xpose.msra.mxu0 0.0
  %4387 = vmatprep.subr.mxu0 0.0
  %4388 = vmatpush1.xpose.msra.mxu0 0.0
  %4389 = vmatprep.subr.mxu0 0.0
  %4390 = vmatpush1.xpose.msra.mxu0 0.0
  %4391 = vmatprep.subr.mxu0 0.0
  %4392 = vmatpush1.xpose.msra.mxu0 0.0
  %4393 = vmatprep.subr.mxu0 0.0
  %4394 = vmatpush1.xpose.msra.mxu0 0.0
  %4395 = vmatprep.subr.mxu0 0.0
  %4396 = vmatpush1.xpose.msra.mxu0 0.0
  %4397 = vmatprep.subr.mxu0 0.0
  %4398 = vmatpush1.xpose.msra.mxu0 0.0
  %4399 = vmatprep.subr.mxu0 0.0
  %4400 = vmatpush1.xpose.msra.mxu0 0.0
  %4401 = vmatprep.subr.mxu0 0.0
  %4402 = vmatpush1.xpose.msra.mxu0 0.0
  %4403 = vmatprep.subr.mxu0 0.0
  %4404 = vmatpush1.xpose.msra.mxu0 0.0
  %4405 = vmatprep.mubr.f32.mxu0 0.0
  %4406 = vmatmul.mubr.f32.gmra.mrb[0].mxu0 %v4339
  %v4407 = vpop.f32.mrb[0].mxu0
  %v4408 = vadd.f32 0.0, %v4407
  %v4409 = vpop.f32.mrb[0].mxu0
  %4410 = vdwg.mxu0
  %4412 = vset.pattern.permute.xlu0 0
  %4413 = vperm.xlu0 %4412, %v4299
  %v4414 = vpop.permute.xlu0 %4413
  %4417 = vset.pattern.permute.xlu0 0
  %4418 = vperm.xlu0 %4417, %v4304
  %v4419 = vpop.permute.xlu0 %4418
  %4422 = vset.pattern.permute.xlu0 0
  %4423 = vperm.xlu0 %4422, %v4309
  %v4424 = vpop.permute.xlu0 %4423
  %4427 = vset.pattern.permute.xlu0 0
  %4428 = vperm.xlu0 %4427, %v4314
  %v4429 = vpop.permute.xlu0 %4428
  %4432 = vset.pattern.permute.xlu0 0
  %4433 = vperm.xlu0 %4432, %v4319
  %v4434 = vpop.permute.xlu0 %4433
  %4437 = vset.pattern.permute.xlu0 0
  %4438 = vperm.xlu0 %4437, %v4324
  %v4439 = vpop.permute.xlu0 %4438
  %4442 = vset.pattern.permute.xlu0 0
  %4443 = vperm.xlu0 %4442, %v4329
  %v4444 = vpop.permute.xlu0 %4443
  %4447 = vset.pattern.permute.xlu0 0
  %4448 = vperm.xlu0 %4447, %v4334
  %v4449 = vpop.permute.xlu0 %4448
  %v4451 = vlaneseq
  %v4452 = vshrl.u32 %v4451, 7
  %v4453 = vsub.s32 0, %v4452
  %v4454 = vrot.slane %v4408, %v4453
  %v4455 = vadd.f32 %v4414, %v4454
  %v4456 = vadd.f32 %v4419, %v4454
  %v4457 = vadd.f32 %v4424, %v4454
  %v4458 = vadd.f32 %v4429, %v4454
  %v4459 = vadd.f32 %v4434, %v4454
  %v4460 = vadd.f32 %v4439, %v4454
  %v4461 = vadd.f32 %v4444, %v4454
  %v4462 = vadd.f32 %v4449, %v4454
  %vm4463 = vcmp.gt.f32.partialorder %v4455, 0.0
  %vm4464 = vcmp.gt.f32.partialorder %v4456, 0.0
  %vm4465 = vcmp.gt.f32.partialorder %v4457, 0.0
  %vm4466 = vcmp.gt.f32.partialorder %v4458, 0.0
  %vm4467 = vcmp.gt.f32.partialorder %v4459, 0.0
  %vm4468 = vcmp.gt.f32.partialorder %v4460, 0.0
  %vm4469 = vcmp.gt.f32.partialorder %v4461, 0.0
  %vm4470 = vcmp.gt.f32.partialorder %v4462, 0.0
  %v4471 = vmul.f32 %v4455, 0.2
  %v4472 = vmul.f32 %v4456, 0.2
  %v4473 = vmul.f32 %v4457, 0.2
  %v4474 = vmul.f32 %v4458, 0.2
  %v4475 = vmul.f32 %v4459, 0.2
  %v4476 = vmul.f32 %v4460, 0.2
  %v4477 = vmul.f32 %v4461, 0.2
  %v4478 = vmul.f32 %v4462, 0.2
  %v4479 = vsel %vm4463, %v4455, %v4471
  %v4480 = vsel %vm4464, %v4456, %v4472
  %v4481 = vsel %vm4465, %v4457, %v4473
  %v4482 = vsel %vm4466, %v4458, %v4474
  %v4483 = vsel %vm4467, %v4459, %v4475
  %v4484 = vsel %vm4468, %v4460, %v4476
  %v4485 = vsel %vm4469, %v4461, %v4477
  %v4486 = vsel %vm4470, %v4462, %v4478
  %v4487 = vadd.f32 %v4479, %v346
  %v4488 = vadd.f32 %v4480, %v347
  %v4489 = vadd.f32 %v4481, %v348
  %v4490 = vadd.f32 %v4482, %v349
  %v4491 = vadd.f32 %v4483, %v350
  %v4492 = vadd.f32 %v4484, %v351
  %v4493 = vadd.f32 %v4485, %v352
  %v4494 = vadd.f32 %v4486, %v353
  %v4495 = vsel %vm896, %v4487, -inf
  %4496 = vmax.xlane.f32.xlu0 %v4495
  %v4497 = vpop.xlane.xlu0 %4496
  %v4498 = vsel %vm896, %v4488, -inf
  %4499 = vmax.xlane.f32.xlu0 %v4498
  %v4500 = vpop.xlane.xlu0 %4499
  %v4501 = vsel %vm896, %v4489, -inf
  %4502 = vmax.xlane.f32.xlu0 %v4501
  %v4503 = vpop.xlane.xlu0 %4502
  %v4504 = vsel %vm896, %v4490, -inf
  %4505 = vmax.xlane.f32.xlu0 %v4504
  %v4506 = vpop.xlane.xlu0 %4505
  %v4507 = vsel %vm896, %v4491, -inf
  %4508 = vmax.xlane.f32.xlu0 %v4507
  %v4509 = vpop.xlane.xlu0 %4508
  %v4510 = vsel %vm896, %v4492, -inf
  %4511 = vmax.xlane.f32.xlu0 %v4510
  %v4512 = vpop.xlane.xlu0 %4511
  %v4513 = vsel %vm896, %v4493, -inf
  %4514 = vmax.xlane.f32.xlu0 %v4513
  %v4515 = vpop.xlane.xlu0 %4514
  %v4516 = vsel %vm896, %v4494, -inf
  %4517 = vmax.xlane.f32.xlu0 %v4516
  %v4518 = vpop.xlane.xlu0 %4517
  %v4519 = vsub.f32 %v4487, %v4497
  %v4520 = vsub.f32 %v4488, %v4500
  %v4521 = vsub.f32 %v4489, %v4503
  %v4522 = vsub.f32 %v4490, %v4506
  %v4523 = vsub.f32 %v4491, %v4509
  %v4524 = vsub.f32 %v4492, %v4512
  %v4525 = vsub.f32 %v4493, %v4515
  %v4526 = vsub.f32 %v4494, %v4518
  %v4527 = vmul.f32 %v4519, 1.442695
  %v4528 = vpow.pop %v4527
  %v4529 = vmul.f32 %v4520, 1.442695
  %v4530 = vpow.pop %v4529
  %v4531 = vmul.f32 %v4521, 1.442695
  %v4532 = vpow.pop %v4531
  %v4533 = vmul.f32 %v4522, 1.442695
  %v4534 = vpow.pop %v4533
  %v4535 = vmul.f32 %v4523, 1.442695
  %v4536 = vpow.pop %v4535
  %v4537 = vmul.f32 %v4524, 1.442695
  %v4538 = vpow.pop %v4537
  %v4539 = vmul.f32 %v4525, 1.442695
  %v4540 = vpow.pop %v4539
  %v4541 = vmul.f32 %v4526, 1.442695
  %v4542 = vpow.pop %v4541
  %v4543 = vmul.f32 %v4528, %v330
  %v4544 = vmul.f32 %v4530, %v331
  %v4545 = vmul.f32 %v4532, %v332
  %v4546 = vmul.f32 %v4534, %v333
  %v4547 = vmul.f32 %v4536, %v334
  %v4548 = vmul.f32 %v4538, %v335
  %v4549 = vmul.f32 %v4540, %v336
  %v4550 = vmul.f32 %v4542, %v337
  %v4551 = vsel %vm896, %v4543, 0.0
  %4552 = vadd.xlane.f32.xlu0 %v4551
  %v4553 = vpop.xlane.xlu0 %4552
  %v4554 = vsel %vm896, %v4544, 0.0
  %4555 = vadd.xlane.f32.xlu0 %v4554
  %v4556 = vpop.xlane.xlu0 %4555
  %v4557 = vsel %vm896, %v4545, 0.0
  %4558 = vadd.xlane.f32.xlu0 %v4557
  %v4559 = vpop.xlane.xlu0 %4558
  %v4560 = vsel %vm896, %v4546, 0.0
  %4561 = vadd.xlane.f32.xlu0 %v4560
  %v4562 = vpop.xlane.xlu0 %4561
  %v4563 = vsel %vm896, %v4547, 0.0
  %4564 = vadd.xlane.f32.xlu0 %v4563
  %v4565 = vpop.xlane.xlu0 %4564
  %v4566 = vsel %vm896, %v4548, 0.0
  %4567 = vadd.xlane.f32.xlu0 %v4566
  %v4568 = vpop.xlane.xlu0 %4567
  %v4569 = vsel %vm896, %v4549, 0.0
  %4570 = vadd.xlane.f32.xlu0 %v4569
  %v4571 = vpop.xlane.xlu0 %4570
  %v4572 = vsel %vm896, %v4550, 0.0
  %4573 = vadd.xlane.f32.xlu0 %v4572
  %v4574 = vpop.xlane.xlu0 %4573
  %v4575 = vrcp.pop %v4553
  %v4576 = vrcp.pop %v4556
  %v4577 = vrcp.pop %v4559
  %v4578 = vrcp.pop %v4562
  %v4579 = vrcp.pop %v4565
  %v4580 = vrcp.pop %v4568
  %v4581 = vrcp.pop %v4571
  %v4582 = vrcp.pop %v4574
  %v4583 = vmul.f32 %v4543, %v4575
  %v4584 = vmul.f32 %v4544, %v4576
  %v4585 = vmul.f32 %v4545, %v4577
  %v4586 = vmul.f32 %v4546, %v4578
  %v4587 = vmul.f32 %v4547, %v4579
  %v4588 = vmul.f32 %v4548, %v4580
  %v4589 = vmul.f32 %v4549, %v4581
  %v4590 = vmul.f32 %v4550, %v4582
  %v4591 = vld [vmem:[%s16] sm:$0x1]
  %v4593 = vlaneseq
  %v4594 = vshrl.u32 %v4593, 7
  %v4595 = vsub.s32 0, %v4594
  %v4596 = vrot.slane %v4591, %v4595
  %v4599 = vsel %vm896, %v4583, 0
  %v4602 = vsel %vm896, %v4584, 0
  %v4605 = vsel %vm896, %v4585, 0
  %v4608 = vsel %vm896, %v4586, 0
  %v4611 = vsel %vm896, %v4587, 0
  %v4614 = vsel %vm896, %v4588, 0
  %v4617 = vsel %vm896, %v4589, 0
  %v4620 = vsel %vm896, %v4590, 0
  %4622 = vmatprep.subr.mxu0 0.0
  %4623 = vmatpush1.msra.mxu0 %v4168
  %4624 = vmatprep.subr.mxu0 0.0
  %4625 = vmatpush1.msra.mxu0 %v4173
  %4626 = vmatprep.subr.mxu0 0.0
  %4627 = vmatpush1.msra.mxu0 %v4178
  %4628 = vmatprep.subr.mxu0 0.0
  %4629 = vmatpush1.msra.mxu0 %v4183
  %4630 = vmatprep.subr.mxu0 0.0
  %4631 = vmatpush1.msra.mxu0 %v4188
  %4632 = vmatprep.subr.mxu0 0.0
  %4633 = vmatpush1.msra.mxu0 %v4193
  %4634 = vmatprep.subr.mxu0 0.0
  %4635 = vmatpush1.msra.mxu0 %v4198
  %4636 = vmatprep.subr.mxu0 0.0
  %4637 = vmatpush1.msra.mxu0 %v4203
  %4638 = vmatprep.subr.mxu0 0.0
  %4639 = vmatpush1.msra.mxu0 0.0
  %4640 = vmatprep.subr.mxu0 0.0
  %4641 = vmatpush1.msra.mxu0 0.0
  %4642 = vmatprep.subr.mxu0 0.0
  %4643 = vmatpush1.msra.mxu0 0.0
  %4644 = vmatprep.subr.mxu0 0.0
  %4645 = vmatpush1.msra.mxu0 0.0
  %4646 = vmatprep.subr.mxu0 0.0
  %4647 = vmatpush1.msra.mxu0 0.0
  %4648 = vmatprep.subr.mxu0 0.0
  %4649 = vmatpush1.msra.mxu0 0.0
  %4650 = vmatprep.subr.mxu0 0.0
  %4651 = vmatpush1.msra.mxu0 0.0
  %4652 = vmatprep.subr.mxu0 0.0
  %4653 = vmatpush1.msra.mxu0 0.0
  %4654 = vmatprep.subr.mxu0 0.0
  %4655 = vmatpush1.msra.mxu0 0.0
  %4656 = vmatprep.subr.mxu0 0.0
  %4657 = vmatpush1.msra.mxu0 0.0
  %4658 = vmatprep.subr.mxu0 0.0
  %4659 = vmatpush1.msra.mxu0 0.0
  %4660 = vmatprep.subr.mxu0 0.0
  %4661 = vmatpush1.msra.mxu0 0.0
  %4662 = vmatprep.subr.mxu0 0.0
  %4663 = vmatpush1.msra.mxu0 0.0
  %4664 = vmatprep.subr.mxu0 0.0
  %4665 = vmatpush1.msra.mxu0 0.0
  %4666 = vmatprep.subr.mxu0 0.0
  %4667 = vmatpush1.msra.mxu0 0.0
  %4668 = vmatprep.subr.mxu0 0.0
  %4669 = vmatpush1.msra.mxu0 0.0
  %4670 = vmatprep.subr.mxu0 0.0
  %4671 = vmatpush1.msra.mxu0 0.0
  %4672 = vmatprep.subr.mxu0 0.0
  %4673 = vmatpush1.msra.mxu0 0.0
  %4674 = vmatprep.subr.mxu0 0.0
  %4675 = vmatpush1.msra.mxu0 0.0
  %4676 = vmatprep.subr.mxu0 0.0
  %4677 = vmatpush1.msra.mxu0 0.0
  %4678 = vmatprep.subr.mxu0 0.0
  %4679 = vmatpush1.msra.mxu0 0.0
  %4680 = vmatprep.subr.mxu0 0.0
  %4681 = vmatpush1.msra.mxu0 0.0
  %4682 = vmatprep.subr.mxu0 0.0
  %4683 = vmatpush1.msra.mxu0 0.0
  %4684 = vmatprep.subr.mxu0 0.0
  %4685 = vmatpush1.msra.mxu0 0.0
  %4686 = vmatprep.mubr.f32.mxu0 0.0
  %4687 = vmatmul.mubr.f32.gmra.mrb[0].mxu0 %v4599
  %v4688 = vpop.f32.mrb[0].mxu0
  %v4689 = vadd.f32 %v4596, %v4688
  %v4690 = vpop.f32.mrb[0].mxu0
  %4691 = vmatprep.mubr.f32.mxu0 0.0
  %4692 = vmatmul.mubr.f32.gmra.mrb[0].mxu0 %v4602
  %v4693 = vpop.f32.mrb[0].mxu0
  %v4694 = vadd.f32 %v4596, %v4693
  %v4695 = vpop.f32.mrb[0].mxu0
  %4696 = vmatprep.mubr.f32.mxu0 0.0
  %4697 = vmatmul.mubr.f32.gmra.mrb[0].mxu0 %v4605
  %v4698 = vpop.f32.mrb[0].mxu0
  %v4699 = vadd.f32 %v4596, %v4698
  %v4700 = vpop.f32.mrb[0].mxu0
  %4701 = vmatprep.mubr.f32.mxu0 0.0
  %4702 = vmatmul.mubr.f32.gmra.mrb[0].mxu0 %v4608
  %v4703 = vpop.f32.mrb[0].mxu0
  %v4704 = vadd.f32 %v4596, %v4703
  %v4705 = vpop.f32.mrb[0].mxu0
  %4706 = vmatprep.mubr.f32.mxu0 0.0
  %4707 = vmatmul.mubr.f32.gmra.mrb[0].mxu0 %v4611
  %v4708 = vpop.f32.mrb[0].mxu0
  %v4709 = vadd.f32 %v4596, %v4708
  %v4710 = vpop.f32.mrb[0].mxu0
  %4711 = vmatprep.mubr.f32.mxu0 0.0
  %4712 = vmatmul.mubr.f32.gmra.mrb[0].mxu0 %v4614
  %v4713 = vpop.f32.mrb[0].mxu0
  %v4714 = vadd.f32 %v4596, %v4713
  %v4715 = vpop.f32.mrb[0].mxu0
  %4716 = vmatprep.mubr.f32.mxu0 0.0
  %4717 = vmatmul.mubr.f32.gmra.mrb[0].mxu0 %v4617
  %v4718 = vpop.f32.mrb[0].mxu0
  %v4719 = vadd.f32 %v4596, %v4718
  %v4720 = vpop.f32.mrb[0].mxu0
  %4721 = vmatprep.mubr.f32.mxu0 0.0
  %4722 = vmatmul.mubr.f32.gmra.mrb[0].mxu0 %v4620
  %v4723 = vpop.f32.mrb[0].mxu0
  %v4724 = vadd.f32 %v4596, %v4723
  %v4725 = vpop.f32.mrb[0].mxu0
  %4726 = vdwg.mxu0
  %v4727 = vld [vmem:[%s18] sm:$0xff]
  %v4728 = vld [vmem:[%s18 + $0x8] sm:$0xff]
  %v4729 = vld [vmem:[%s19] sm:$0x1]
  %v4731 = vlaneseq
  %v4732 = vshrl.u32 %v4731, 7
  %v4733 = vsub.s32 0, %v4732
  %v4734 = vrot.slane %v4729, %v4733
  %v4737 = vsel %vm474, %v4689, 0
  %v4740 = vsel %vm474, %v4694, 0
  %v4743 = vsel %vm474, %v4699, 0
  %v4746 = vsel %vm474, %v4704, 0
  %v4749 = vsel %vm474, %v4709, 0
  %v4752 = vsel %vm474, %v4714, 0
  %v4755 = vsel %vm474, %v4719, 0
  %v4758 = vsel %vm474, %v4724, 0
  %4760 = vmatprep.subr.mxu0 0.0
  %4761 = vmatpush1.msra.mxu0 %v4727
  %4762 = vmatprep.subr.mxu0 0.0
  %4763 = vmatpush1.msra.mxu0 %v4728
  %4764 = vmatprep.subr.mxu0 0.0
  %4765 = vmatpush1.msra.mxu0 0.0
  %4766 = vmatprep.subr.mxu0 0.0
  %4767 = vmatpush1.msra.mxu0 0.0
  %4768 = vmatprep.subr.mxu0 0.0
  %4769 = vmatpush1.msra.mxu0 0.0
  %4770 = vmatprep.subr.mxu0 0.0
  %4771 = vmatpush1.msra.mxu0 0.0
  %4772 = vmatprep.subr.mxu0 0.0
  %4773 = vmatpush1.msra.mxu0 0.0
  %4774 = vmatprep.subr.mxu0 0.0
  %4775 = vmatpush1.msra.mxu0 0.0
  %4776 = vmatprep.subr.mxu0 0.0
  %4777 = vmatpush1.msra.mxu0 0.0
  %4778 = vmatprep.subr.mxu0 0.0
  %4779 = vmatpush1.msra.mxu0 0.0
  %4780 = vmatprep.subr.mxu0 0.0
  %4781 = vmatpush1.msra.mxu0 0.0
  %4782 = vmatprep.subr.mxu0 0.0
  %4783 = vmatpush1.msra.mxu0 0.0
  %4784 = vmatprep.subr.mxu0 0.0
  %4785 = vmatpush1.msra.mxu0 0.0
  %4786 = vmatprep.subr.mxu0 0.0
  %4787 = vmatpush1.msra.mxu0 0.0
  %4788 = vmatprep.subr.mxu0 0.0
  %4789 = vmatpush1.msra.mxu0 0.0
  %4790 = vmatprep.subr.mxu0 0.0
  %4791 = vmatpush1.msra.mxu0 0.0
  %4792 = vmatprep.subr.mxu0 0.0
  %4793 = vmatpush1.msra.mxu0 0.0
  %4794 = vmatprep.subr.mxu0 0.0
  %4795 = vmatpush1.msra.mxu0 0.0
  %4796 = vmatprep.subr.mxu0 0.0
  %4797 = vmatpush1.msra.mxu0 0.0
  %4798 = vmatprep.subr.mxu0 0.0
  %4799 = vmatpush1.msra.mxu0 0.0
  %4800 = vmatprep.subr.mxu0 0.0
  %4801 = vmatpush1.msra.mxu0 0.0
  %4802 = vmatprep.subr.mxu0 0.0
  %4803 = vmatpush1.msra.mxu0 0.0
  %4804 = vmatprep.subr.mxu0 0.0
  %4805 = vmatpush1.msra.mxu0 0.0
  %4806 = vmatprep.subr.mxu0 0.0
  %4807 = vmatpush1.msra.mxu0 0.0
  %4808 = vmatprep.subr.mxu0 0.0
  %4809 = vmatpush1.msra.mxu0 0.0
  %4810 = vmatprep.subr.mxu0 0.0
  %4811 = vmatpush1.msra.mxu0 0.0
  %4812 = vmatprep.subr.mxu0 0.0
  %4813 = vmatpush1.msra.mxu0 0.0
  %4814 = vmatprep.subr.mxu0 0.0
  %4815 = vmatpush1.msra.mxu0 0.0
  %4816 = vmatprep.subr.mxu0 0.0
  %4817 = vmatpush1.msra.mxu0 0.0
  %4818 = vmatprep.subr.mxu0 0.0
  %4819 = vmatpush1.msra.mxu0 0.0
  %4820 = vmatprep.subr.mxu0 0.0
  %4821 = vmatpush1.msra.mxu0 0.0
  %4822 = vmatprep.subr.mxu0 0.0
  %4823 = vmatpush1.msra.mxu0 0.0
  %4824 = vmatprep.mubr.f32.mxu0 0.0
  %4825 = vmatmul.mubr.f32.gmra.mrb[0].mxu0 %v4737
  %v4826 = vpop.f32.mrb[0].mxu0
  %v4827 = vadd.f32 %v4734, %v4826
  %v4828 = vpop.f32.mrb[0].mxu0
  %4829 = vmatprep.mubr.f32.mxu0 0.0
  %4830 = vmatmul.mubr.f32.gmra.mrb[0].mxu0 %v4740
  %v4831 = vpop.f32.mrb[0].mxu0
  %v4832 = vadd.f32 %v4734, %v4831
  %v4833 = vpop.f32.mrb[0].mxu0
  %4834 = vmatprep.mubr.f32.mxu0 0.0
  %4835 = vmatmul.mubr.f32.gmra.mrb[0].mxu0 %v4743
  %v4836 = vpop.f32.mrb[0].mxu0
  %v4837 = vadd.f32 %v4734, %v4836
  %v4838 = vpop.f32.mrb[0].mxu0
  %4839 = vmatprep.mubr.f32.mxu0 0.0
  %4840 = vmatmul.mubr.f32.gmra.mrb[0].mxu0 %v4746
  %v4841 = vpop.f32.mrb[0].mxu0
  %v4842 = vadd.f32 %v4734, %v4841
  %v4843 = vpop.f32.mrb[0].mxu0
  %4844 = vmatprep.mubr.f32.mxu0 0.0
  %4845 = vmatmul.mubr.f32.gmra.mrb[0].mxu0 %v4749
  %v4846 = vpop.f32.mrb[0].mxu0
  %v4847 = vadd.f32 %v4734, %v4846
  %v4848 = vpop.f32.mrb[0].mxu0
  %4849 = vmatprep.mubr.f32.mxu0 0.0
  %4850 = vmatmul.mubr.f32.gmra.mrb[0].mxu0 %v4752
  %v4851 = vpop.f32.mrb[0].mxu0
  %v4852 = vadd.f32 %v4734, %v4851
  %v4853 = vpop.f32.mrb[0].mxu0
  %4854 = vmatprep.mubr.f32.mxu0 0.0
  %4855 = vmatmul.mubr.f32.gmra.mrb[0].mxu0 %v4755
  %v4856 = vpop.f32.mrb[0].mxu0
  %v4857 = vadd.f32 %v4734, %v4856
  %v4858 = vpop.f32.mrb[0].mxu0
  %4859 = vmatprep.mubr.f32.mxu0 0.0
  %4860 = vmatmul.mubr.f32.gmra.mrb[0].mxu0 %v4758
  %v4861 = vpop.f32.mrb[0].mxu0
  %v4862 = vadd.f32 %v4734, %v4861
  %v4863 = vpop.f32.mrb[0].mxu0
  %4864 = vdwg.mxu0
  %v4865 = vld [vmem:[%s17] sm:$0xff]
  %v4866 = vld [vmem:[%s17 + $0x8] sm:$0xff]
  %v4867 = vld [vmem:[%s17 + $0x10] sm:$0xff]
  %v4868 = vld [vmem:[%s17 + $0x18] sm:$0xff]
  %v4869 = vld [vmem:[%s17 + $0x20] sm:$0xff]
  %v4870 = vld [vmem:[%s17 + $0x28] sm:$0xff]
  %v4871 = vld [vmem:[%s17 + $0x30] sm:$0xff]
  %v4872 = vld [vmem:[%s17 + $0x38] sm:$0xff]
  %vm4873 = vcmp.gt.f32.partialorder %v4865, 0.0
  %vm4874 = vcmp.gt.f32.partialorder %v4866, 0.0
  %vm4875 = vcmp.gt.f32.partialorder %v4867, 0.0
  %vm4876 = vcmp.gt.f32.partialorder %v4868, 0.0
  %vm4877 = vcmp.gt.f32.partialorder %v4869, 0.0
  %vm4878 = vcmp.gt.f32.partialorder %v4870, 0.0
  %vm4879 = vcmp.gt.f32.partialorder %v4871, 0.0
  %vm4880 = vcmp.gt.f32.partialorder %v4872, 0.0
  %v4881 = vsel %vm4873, 1, 0
  %v4882 = vsel %vm4874, 1, 0
  %v4883 = vsel %vm4875, 1, 0
  %v4884 = vsel %vm4876, 1, 0
  %v4885 = vsel %vm4877, 1, 0
  %v4886 = vsel %vm4878, 1, 0
  %v4887 = vsel %vm4879, 1, 0
  %v4888 = vsel %vm4880, 1, 0
  %4889 = vset.pattern.permute.xlu0 0
  %4890 = vperm.xlu0 %4889, %v4881
  %v4891 = vpop.permute.xlu0 %4890
  %4892 = vset.pattern.permute.xlu0 0
  %4893 = vperm.xlu0 %4892, %v4882
  %v4894 = vpop.permute.xlu0 %4893
  %4895 = vset.pattern.permute.xlu0 0
  %4896 = vperm.xlu0 %4895, %v4883
  %v4897 = vpop.permute.xlu0 %4896
  %4898 = vset.pattern.permute.xlu0 0
  %4899 = vperm.xlu0 %4898, %v4884
  %v4900 = vpop.permute.xlu0 %4899
  %4901 = vset.pattern.permute.xlu0 0
  %4902 = vperm.xlu0 %4901, %v4885
  %v4903 = vpop.permute.xlu0 %4902
  %4904 = vset.pattern.permute.xlu0 0
  %4905 = vperm.xlu0 %4904, %v4886
  %v4906 = vpop.permute.xlu0 %4905
  %4907 = vset.pattern.permute.xlu0 0
  %4908 = vperm.xlu0 %4907, %v4887
  %v4909 = vpop.permute.xlu0 %4908
  %4910 = vset.pattern.permute.xlu0 0
  %4911 = vperm.xlu0 %4910, %v4888
  %v4912 = vpop.permute.xlu0 %4911
  %vm4913 = vcmp.eq.s32.totalorder %v4891, 1
  %vm4914 = vcmp.eq.s32.totalorder %v4894, 1
  %vm4915 = vcmp.eq.s32.totalorder %v4897, 1
  %vm4916 = vcmp.eq.s32.totalorder %v4900, 1
  %vm4917 = vcmp.eq.s32.totalorder %v4903, 1
  %vm4918 = vcmp.eq.s32.totalorder %v4906, 1
  %vm4919 = vcmp.eq.s32.totalorder %v4909, 1
  %vm4920 = vcmp.eq.s32.totalorder %v4912, 1
  %v4921 = vsel %vm4913, %v4827, nan
  %v4922 = vsel %vm4914, %v4832, nan
  %v4923 = vsel %vm4915, %v4837, nan
  %v4924 = vsel %vm4916, %v4842, nan
  %v4925 = vsel %vm4917, %v4847, nan
  %v4926 = vsel %vm4918, %v4852, nan
  %v4927 = vsel %vm4919, %v4857, nan
  %v4928 = vsel %vm4920, %v4862, nan
  %4929 = vst.msk [vmem:[%s20] sm:$0xff] %vm474, %v4921
  %4930 = vst.msk [vmem:[%s20 + $0x8] sm:$0xff] %vm474, %v4922
  %4931 = vst.msk [vmem:[%s20 + $0x10] sm:$0xff] %vm474, %v4923
  %4932 = vst.msk [vmem:[%s20 + $0x18] sm:$0xff] %vm474, %v4924
  %4933 = vst.msk [vmem:[%s20 + $0x20] sm:$0xff] %vm474, %v4925
  %4934 = vst.msk [vmem:[%s20 + $0x28] sm:$0xff] %vm474, %v4926
  %4935 = vst.msk [vmem:[%s20 + $0x30] sm:$0xff] %vm474, %v4927
  %4936 = vst.msk [vmem:[%s20 + $0x38] sm:$0xff] %vm474, %v4928
  // Predicated region
  $region82: #{tpu_custom_call.1} parent=0 // pred_check
    _
  $region83: #{tpu_custom_call.1} parent=0 // pred_check_branch
    %4938 = sbr.rel (0) target = $region85
  $region84: #{tpu_custom_call.1} parent=0 // pred_region
    _
  $region85: #{tpu_custom_call.1} parent=0 // pred_fallthru
    _
  // Predicated region
  $region86: #{tpu_custom_call.1} parent=0 // pred_check
    _
  $region87: #{tpu_custom_call.1} parent=0 // pred_check_branch
    %4940 = sbr.rel (0) target = $region89
  $region88: #{tpu_custom_call.1} parent=0 // pred_region
    _
  $region89: #{tpu_custom_call.1} parent=0 // pred_fallthru
    _

</llo_original>
